<compile_context>
chip_gen: v7x
topology: tpu7x:2x2x1
jax: 0.10.0
libtpu: 0.0.40
codegen_flags: <defaults>
</compile_context>

<pallas_src>
import functools

import jax
import jax.numpy as jnp
from jax.experimental import pallas as pl
from jax.experimental.pallas import tpu as pltpu

EPS = 1e-5
LANE = 128           # channel padding target (TPU lane width)
SUBLANE_BF16 = 16    # bf16 sublane packing -> padded width kept a multiple of this


def _round_up(x, m):
    return (x + m - 1) // m * m


def _pick_row_tile(H, W):
    """Largest divisor T of H with roughly T*W <= 1024 GEMM rows per tile."""
    target = max(1, 1024 // max(W, 1))
    t = max(1, min(H, target))
    while H % t:
        t -= 1
    return t


# ----------------------------- Pallas kernels ----------------------------- #

def _conv_stats_kernel(x_ref, w_ref, z_ref, sum_ref, ssq_ref, *, T, W, Wp):
    """3x3 conv as 9 shifted MXU matmuls (bf16 in, f32 acc) + BN sum/sumsq accumulation.

    x_ref   : (1, T+2, Wp, Cp)  bf16  halo'd row block of the zero-padded NHWC input
    w_ref   : (9, Cp, Coutp)    bf16  resident across the grid
    z_ref   : (1, T, W, Coutp)  f32   pre-BN conv output tile
    sum_ref : (1, Coutp)        f32   resident accumulator (per-channel sum)
    ssq_ref : (1, Coutp)        f32   resident accumulator (per-channel sum of squares)
    """
    @pl.when(pl.program_id(0) == 0)
    def _init():
        sum_ref[...] = jnp.zeros_like(sum_ref)
        ssq_ref[...] = jnp.zeros_like(ssq_ref)

    xb = x_ref[0]                              # (T+2, Wp, Cp) bf16
    cp = xb.shape[-1]
    coutp = w_ref.shape[-1]

    acc = jnp.zeros((T, W, coutp), jnp.float32)
    for dy in range(3):                        # static unroll: 9 MXU matmuls
        sf = xb[dy:dy + T].reshape(T * Wp, cp)          # leading-dim slice, layout-trivial
        for dx in range(3):
            p = jnp.dot(sf, w_ref[3 * dy + dx],
                        preferred_element_type=jnp.float32)        # (T*Wp, Coutp) f32
            acc = acc + p.reshape(T, Wp, coutp)[:, dx:dx + W, :]   # shift-and-add

    z_ref[0] = acc
    # BatchNorm batch statistics (exact over all N*H*W rows thanks to grid accumulation).
    sum_ref[...] += jnp.sum(jnp.sum(acc, axis=0), axis=0, keepdims=True)
    ssq_ref[...] += jnp.sum(jnp.sum(acc * acc, axis=0), axis=0, keepdims=True)


def _bn_relu_kernel(z_ref, sum_ref, ssq_ref, gamma_ref, beta_ref, o_ref, *, inv_m):
    """Normalize with finalized global stats, apply affine + ReLU, per tile."""
    mean = sum_ref[...] * inv_m                                     # (1, Coutp)
    var = jnp.maximum(ssq_ref[...] * inv_m - mean * mean, 0.0)      # biased variance
    scale = gamma_ref[...] * jax.lax.rsqrt(var + EPS)
    shift = beta_ref[...] - mean * scale
    o_ref[0] = jnp.maximum(z_ref[0] * scale + shift, 0.0)


# --------------------------- pallas_call wrappers -------------------------- #

def _conv_bn_relu_pallas(xb, w9, gamma_p, beta_p, *, nmb, T, W, Wp, Cp, Coutp, m_total):
    # Phase 1: conv GEMM tiles + global per-channel sum / sumsq ("arbitrary" axis).
    bytes1 = nmb * (T + 2) * Wp * Cp * 2 + 9 * Cp * Coutp * 2 + nmb * T * W * Coutp * 4
    z, csum, cssq = pl.pallas_call(
        functools.partial(_conv_stats_kernel, T=T, W=W, Wp=Wp),
        grid=(nmb,),
        in_specs=[
            pl.BlockSpec((1, T + 2, Wp, Cp), lambda i: (i, 0, 0, 0)),
            pl.BlockSpec((9, Cp, Coutp), lambda i: (0, 0, 0)),
        ],
        out_specs=[
            pl.BlockSpec((1, T, W, Coutp), lambda i: (i, 0, 0, 0)),
            pl.BlockSpec((1, Coutp), lambda i: (0, 0)),
            pl.BlockSpec((1, Coutp), lambda i: (0, 0)),
        ],
        out_shape=[
            jax.ShapeDtypeStruct((nmb, T, W, Coutp), jnp.float32),
            jax.ShapeDtypeStruct((1, Coutp), jnp.float32),
            jax.ShapeDtypeStruct((1, Coutp), jnp.float32),
        ],
        compiler_params=pltpu.CompilerParams(
            dimension_semantics=("arbitrary",),
            vmem_limit_bytes=32 * 1024 * 1024,
        ),
        cost_estimate=pl.CostEstimate(
            flops=2 * nmb * T * Wp * 9 * Cp * Coutp,
            transcendentals=0,
            bytes_accessed=bytes1,
        ),
    )(xb, w9)

    # Phase 2: normalize + affine + ReLU ("parallel" axis -> both TCs on v7x).
    bytes2 = 2 * nmb * T * W * Coutp * 4 + 4 * Coutp * 4
    out = pl.pallas_call(
        functools.partial(_bn_relu_kernel, inv_m=1.0 / float(m_total)),
        grid=(nmb,),
        in_specs=[
            pl.BlockSpec((1, T, W, Coutp), lambda i: (i, 0, 0, 0)),
            pl.BlockSpec((1, Coutp), lambda i: (0, 0)),
            pl.BlockSpec((1, Coutp), lambda i: (0, 0)),
            pl.BlockSpec((1, Coutp), lambda i: (0, 0)),
            pl.BlockSpec((1, Coutp), lambda i: (0, 0)),
        ],
        out_specs=pl.BlockSpec((1, T, W, Coutp), lambda i: (i, 0, 0, 0)),
        out_shape=jax.ShapeDtypeStruct((nmb, T, W, Coutp), jnp.float32),
        compiler_params=pltpu.CompilerParams(
            dimension_semantics=("parallel",),
            vmem_limit_bytes=32 * 1024 * 1024,
        ),
        cost_estimate=pl.CostEstimate(
            flops=4 * nmb * T * W * Coutp,
            transcendentals=Coutp,
            bytes_accessed=bytes2,
        ),
    )(z, csum, cssq, gamma_p, beta_p)
    return out


def cbr_forward(x_nchw, params):
    """CBR forward: conv3x3(s1,p1,bias) -> BatchNorm2d (batch stats) -> ReLU.  NCHW in/out."""
    w = params["w"]                       # (Cout, Cin, 3, 3)
    # params["b"] (conv bias) is intentionally not used in the kernel: it is exactly
    # cancelled by the BatchNorm mean subtraction (see reference below).
    N, Cin, H, W = x_nchw.shape
    Cout = w.shape[0]

    Cp = _round_up(Cin, LANE)
    Coutp = _round_up(Cout, LANE)
    Wp = _round_up(W + 2, SUBLANE_BF16)   # padded width: >= W+2 and sublane-aligned for bf16
    T = _pick_row_tile(H, W)              # image rows per tile (divides H)
    nmb = N * (H // T)

    # NHWC, zero-pad spatially (1 top/bottom, 1 left, >=1 right) and channels -> Cp.
    xh = jnp.transpose(x_nchw, (0, 2, 3, 1))
    xp = jnp.pad(xh, ((0, 0), (1, 1), (1, Wp - W - 1), (0, Cp - Cin)))
    # Halo'd row blocks (T+2 rows each) so the kernel builds the 3x3 patches in VMEM.
    blocks = jnp.stack([xp[:, hb * T: hb * T + T + 2] for hb in range(H // T)], axis=1)
    xb = blocks.reshape(nmb, T + 2, Wp, Cp).astype(jnp.bfloat16)

    # Weights: (Cout, Cin, 3, 3) -> (9, Cp, Coutp), tap index = 3*dy + dx.
    wt = jnp.transpose(w, (2, 3, 1, 0)).reshape(9, Cin, Cout)
    w9 = jnp.pad(wt, ((0, 0), (0, Cp - Cin), (0, Coutp - Cout))).astype(jnp.bfloat16)

    gamma_p = jnp.pad(params["gamma"], (0, Coutp - Cout)).reshape(1, Coutp).astype(jnp.float32)
    beta_p = jnp.pad(params["beta"], (0, Coutp - Cout)).reshape(1, Coutp).astype(jnp.float32)

    out_p = _conv_bn_relu_pallas(xb, w9, gamma_p, beta_p, nmb=nmb, T=T, W=W, Wp=Wp,
                                 Cp=Cp, Coutp=Coutp, m_total=N * H * W)

    out = out_p.reshape(N, H, W, Coutp)[..., :Cout]
    return jnp.transpose(out, (0, 3, 1, 2))   # back to NCHW


# ------------------------------ reference ---------------------------------- #

def _cbr_reference(x, params):
    z = jax.lax.conv_general_dilated(
        x, params["w"], window_strides=(1, 1), padding=((1, 1), (1, 1)),
        dimension_numbers=("NCHW", "OIHW", "NCHW"))
    z = z + params["b"].reshape(1, -1, 1, 1)
    mean = jnp.mean(z, axis=(0, 2, 3), keepdims=True)
    var = jnp.mean((z - mean) ** 2, axis=(0, 2, 3), keepdims=True)   # biased variance
    y = (params["gamma"].reshape(1, -1, 1, 1) * (z - mean) * jax.lax.rsqrt(var + EPS)
         + params["beta"].reshape(1, -1, 1, 1))
    return jnp.maximum(y, 0.0)


# --------------------------------- main ------------------------------------ #

if __name__ == "__main__":
    key = jax.random.PRNGKey(0)
    kx, kw, kb = jax.random.split(key, 3)

    N, Cin, H, W = 2, 4, 16, 16
    Cout = 8
    x = jax.random.normal(kx, (N, Cin, H, W), jnp.float32)
    params = {
        "w": 0.1 * jax.random.normal(kw, (Cout, Cin, 3, 3), jnp.float32),
        "b": 0.1 * jax.random.normal(kb, (Cout,), jnp.float32),
        "gamma": jnp.ones((Cout,), jnp.float32),   # BatchNorm2d default init
        "beta": jnp.zeros((Cout,), jnp.float32),
    }

    out = jax.jit(cbr_forward)(x, params)
    out = jax.block_until_ready(out)
    assert out.shape == (N, Cout, H, W)

    # Pure-JAX reference check (loose tolerance: the kernel GEMM runs in bf16).
    ref = _cbr_reference(x, params)
    max_err = float(jnp.max(jnp.abs(out - ref)))
    assert jnp.allclose(out, ref, atol=5e-2, rtol=5e-2), f"max abs err {max_err}"

    print("KERNEL_OK")
</pallas_src>

<mosaic_0001>
module attributes {stable_mosaic.version = 11 : i64} {
  func.func @_bn_relu_kernel(%arg0: i32, %arg1: memref<1x16x16x128xf32, #tpu.memory_space<vmem>>, %arg2: memref<1x128xf32, #tpu.memory_space<vmem>>, %arg3: memref<1x128xf32, #tpu.memory_space<vmem>>, %arg4: memref<1x128xf32, #tpu.memory_space<vmem>>, %arg5: memref<1x128xf32, #tpu.memory_space<vmem>>, %arg6: memref<1x16x16x128xf32, #tpu.memory_space<vmem>>) attributes {dimension_semantics = [#tpu.dimension_semantics<parallel>], iteration_bounds = array<i64: 2>, scalar_prefetch = 0 : i64, scratch_operands = 0 : i64, tpu.core_type = #tpu.core_type<tc>, window_params = [{transform_indices = @transform_0, window_bounds = array<i64: 1, 16, 16, 128>}, {pipeline_mode = #tpu.pipeline_mode<synchronous>, transform_indices = @transform_1, window_bounds = array<i64: 1, 128>}, {pipeline_mode = #tpu.pipeline_mode<synchronous>, transform_indices = @transform_2, window_bounds = array<i64: 1, 128>}, {pipeline_mode = #tpu.pipeline_mode<synchronous>, transform_indices = @transform_3, window_bounds = array<i64: 1, 128>}, {pipeline_mode = #tpu.pipeline_mode<synchronous>, transform_indices = @transform_4, window_bounds = array<i64: 1, 128>}, {transform_indices = @transform_5, window_bounds = array<i64: 1, 16, 16, 128>}]} {
    %c0 = arith.constant 0 : index
    %c0_0 = arith.constant 0 : index
    %0 = vector.load %arg2[%c0, %c0_0] : memref<1x128xf32, #tpu.memory_space<vmem>>, vector<1x128xf32>
    %cst = arith.constant 0.001953125 : f32
    %1 = vector.broadcast %cst : f32 to vector<1x128xf32>
    %2 = arith.mulf %0, %1 : vector<1x128xf32>
    %c0_1 = arith.constant 0 : index
    %c0_2 = arith.constant 0 : index
    %3 = vector.load %arg3[%c0_1, %c0_2] : memref<1x128xf32, #tpu.memory_space<vmem>>, vector<1x128xf32>
    %cst_3 = arith.constant 0.001953125 : f32
    %4 = vector.broadcast %cst_3 : f32 to vector<1x128xf32>
    %5 = arith.mulf %3, %4 : vector<1x128xf32>
    %6 = arith.mulf %2, %2 : vector<1x128xf32>
    %7 = arith.subf %5, %6 : vector<1x128xf32>
    %cst_4 = arith.constant 0.000000e+00 : f32
    %8 = vector.broadcast %cst_4 : f32 to vector<1x128xf32>
    %9 = arith.maximumf %7, %8 : vector<1x128xf32>
    %c0_5 = arith.constant 0 : index
    %c0_6 = arith.constant 0 : index
    %10 = vector.load %arg4[%c0_5, %c0_6] : memref<1x128xf32, #tpu.memory_space<vmem>>, vector<1x128xf32>
    %cst_7 = arith.constant 9.99999974E-6 : f32
    %11 = vector.broadcast %cst_7 : f32 to vector<1x128xf32>
    %12 = arith.addf %9, %11 : vector<1x128xf32>
    %13 = math.rsqrt %12 : vector<1x128xf32>
    %14 = arith.mulf %10, %13 : vector<1x128xf32>
    %c0_8 = arith.constant 0 : index
    %c0_9 = arith.constant 0 : index
    %15 = vector.load %arg5[%c0_8, %c0_9] : memref<1x128xf32, #tpu.memory_space<vmem>>, vector<1x128xf32>
    %16 = arith.mulf %2, %14 : vector<1x128xf32>
    %17 = arith.subf %15, %16 : vector<1x128xf32>
    %c0_10 = arith.constant 0 : index
    %c0_11 = arith.constant 0 : index
    %c0_12 = arith.constant 0 : index
    %c0_13 = arith.constant 0 : index
    %18 = vector.load %arg1[%c0_10, %c0_11, %c0_12, %c0_13] : memref<1x16x16x128xf32, #tpu.memory_space<vmem>>, vector<1x16x16x128xf32>
    %19 = vector.shape_cast %18 : vector<1x16x16x128xf32> to vector<16x16x128xf32>
    %20 = vector.shape_cast %14 : vector<1x128xf32> to vector<1x1x128xf32>
    %21 = vector.broadcast %20 : vector<1x1x128xf32> to vector<16x16x128xf32>
    %22 = arith.mulf %19, %21 : vector<16x16x128xf32>
    %23 = vector.shape_cast %17 : vector<1x128xf32> to vector<1x1x128xf32>
    %24 = vector.broadcast %23 : vector<1x1x128xf32> to vector<16x16x128xf32>
    %25 = arith.addf %22, %24 : vector<16x16x128xf32>
    %cst_14 = arith.constant 0.000000e+00 : f32
    %26 = vector.broadcast %cst_14 : f32 to vector<16x16x128xf32>
    %27 = arith.maximumf %25, %26 : vector<16x16x128xf32>
    %c0_15 = arith.constant 0 : index
    %c0_16 = arith.constant 0 : index
    %c0_17 = arith.constant 0 : index
    %c0_18 = arith.constant 0 : index
    %28 = vector.load %arg6[%c0_15, %c0_16, %c0_17, %c0_18] : memref<1x16x16x128xf32, #tpu.memory_space<vmem>>, vector<1x16x16x128xf32>
    %29 = vector.shape_cast %28 : vector<1x16x16x128xf32> to vector<16x16x128xf32>
    %30 = vector.shape_cast %27 : vector<16x16x128xf32> to vector<1x16x16x128xf32>
    tpu.vector_store %arg6[%c0_15, %c0_16, %c0_17, %c0_18], %30 {strides = array<i32>} : memref<1x16x16x128xf32, #tpu.memory_space<vmem>>, vector<1x16x16x128xf32>,
    return
  }
  func.func @transform_0(%arg0: i32) -> (i32, i32, i32, i32) {
    %c0_i32 = arith.constant 0 : i32
    %c0_i32_0 = arith.constant 0 : i32
    %c0_i32_1 = arith.constant 0 : i32
    %c0_i32_2 = arith.constant 0 : i32
    return %arg0, %c0_i32, %c0_i32_0, %c0_i32_1 : i32, i32, i32, i32
  }
  func.func @transform_1(%arg0: i32) -> (i32, i32) {
    %c0_i32 = arith.constant 0 : i32
    %c0_i32_0 = arith.constant 0 : i32
    %c0_i32_1 = arith.constant 0 : i32
    return %c0_i32, %c0_i32_0 : i32, i32
  }
  func.func @transform_2(%arg0: i32) -> (i32, i32) {
    %c0_i32 = arith.constant 0 : i32
    %c0_i32_0 = arith.constant 0 : i32
    %c0_i32_1 = arith.constant 0 : i32
    return %c0_i32, %c0_i32_0 : i32, i32
  }
  func.func @transform_3(%arg0: i32) -> (i32, i32) {
    %c0_i32 = arith.constant 0 : i32
    %c0_i32_0 = arith.constant 0 : i32
    %c0_i32_1 = arith.constant 0 : i32
    return %c0_i32, %c0_i32_0 : i32, i32
  }
  func.func @transform_4(%arg0: i32) -> (i32, i32) {
    %c0_i32 = arith.constant 0 : i32
    %c0_i32_0 = arith.constant 0 : i32
    %c0_i32_1 = arith.constant 0 : i32
    return %c0_i32, %c0_i32_0 : i32, i32
  }
  func.func @transform_5(%arg0: i32) -> (i32, i32, i32, i32) {
    %c0_i32 = arith.constant 0 : i32
    %c0_i32_0 = arith.constant 0 : i32
    %c0_i32_1 = arith.constant 0 : i32
    %c0_i32_2 = arith.constant 0 : i32
    return %arg0, %c0_i32, %c0_i32_0, %c0_i32_1 : i32, i32, i32, i32
  }
}

module attributes {stable_mosaic.version = 11 : i64} {
  func.func @_conv_stats_kernel(%arg0: i32, %arg1: memref<1x18x32x128xbf16, #tpu.memory_space<vmem>>, %arg2: memref<9x128x128xbf16, #tpu.memory_space<vmem>>, %arg3: memref<1x16x16x128xf32, #tpu.memory_space<vmem>>, %arg4: memref<1x128xf32, #tpu.memory_space<vmem>>, %arg5: memref<1x128xf32, #tpu.memory_space<vmem>>) attributes {dimension_semantics = [#tpu.dimension_semantics<arbitrary>], iteration_bounds = array<i64: 2>, scalar_prefetch = 0 : i64, scratch_operands = 0 : i64, tpu.core_type = #tpu.core_type<tc>, window_params = [{transform_indices = @transform_0, window_bounds = array<i64: 1, 18, 32, 128>}, {pipeline_mode = #tpu.pipeline_mode<synchronous>, transform_indices = @transform_1, window_bounds = array<i64: 9, 128, 128>}, {transform_indices = @transform_2, window_bounds = array<i64: 1, 16, 16, 128>}, {pipeline_mode = #tpu.pipeline_mode<synchronous>, transform_indices = @transform_3, window_bounds = array<i64: 1, 128>}, {pipeline_mode = #tpu.pipeline_mode<synchronous>, transform_indices = @transform_4, window_bounds = array<i64: 1, 128>}]} {
    %c0_i32 = arith.constant 0 : i32
    %0 = arith.cmpi eq, %arg0, %c0_i32 : i32
    %1 = arith.extui %0 : i1 to i32
    %c0_i32_0 = arith.constant 0 : i32
    %2 = arith.cmpi ne, %1, %c0_i32_0 : i32
    scf.if %2 {
      %cst_48 = arith.constant 0.000000e+00 : f32
      %82 = vector.broadcast %cst_48 : f32 to vector<1x128xf32>
      %c0_49 = arith.constant 0 : index
      %c0_50 = arith.constant 0 : index
      %83 = vector.load %arg4[%c0_49, %c0_50] : memref<1x128xf32, #tpu.memory_space<vmem>>, vector<1x128xf32>
      tpu.vector_store %arg4[%c0_49, %c0_50], %82 {strides = array<i32>} : memref<1x128xf32, #tpu.memory_space<vmem>>, vector<1x128xf32>,
      %cst_51 = arith.constant 0.000000e+00 : f32
      %84 = vector.broadcast %cst_51 : f32 to vector<1x128xf32>
      %c0_52 = arith.constant 0 : index
      %c0_53 = arith.constant 0 : index
      %85 = vector.load %arg5[%c0_52, %c0_53] : memref<1x128xf32, #tpu.memory_space<vmem>>, vector<1x128xf32>
      tpu.vector_store %arg5[%c0_52, %c0_53], %84 {strides = array<i32>} : memref<1x128xf32, #tpu.memory_space<vmem>>, vector<1x128xf32>,
    } else {
    }
    %c0 = arith.constant 0 : index
    %c0_1 = arith.constant 0 : index
    %c0_2 = arith.constant 0 : index
    %c0_3 = arith.constant 0 : index
    %3 = vector.load %arg1[%c0, %c0_1, %c0_2, %c0_3] : memref<1x18x32x128xbf16, #tpu.memory_space<vmem>>, vector<1x18x32x128xbf16>
    %4 = vector.shape_cast %3 : vector<1x18x32x128xbf16> to vector<18x32x128xbf16>
    %cst = arith.constant 0.000000e+00 : f32
    %5 = vector.broadcast %cst : f32 to vector<16x16x128xf32>
    %6 = vector.extract_strided_slice %4 {offsets = [0, 0, 0], sizes = [16, 32, 128], strides = [1, 1, 1]} : vector<18x32x128xbf16> to vector<16x32x128xbf16>
    %7 = vector.shape_cast %6 : vector<16x32x128xbf16> to vector<512x128xbf16>
    %c0_4 = arith.constant 0 : index
    %c0_5 = arith.constant 0 : index
    %c0_6 = arith.constant 0 : index
    %8 = vector.load %arg2[%c0_4, %c0_5, %c0_6] : memref<9x128x128xbf16, #tpu.memory_space<vmem>>, vector<1x128x128xbf16>
    %9 = vector.shape_cast %8 : vector<1x128x128xbf16> to vector<128x128xbf16>
    %cst_7 = arith.constant dense<0.000000e+00> : vector<512x128xf32>
    %10 = tpu.matmul %7, %9, %cst_7 {dimension_numbers = #tpu.dot_dimension_numbers<[1], [0], [0], [1], [0, 0, 1, 1], [], []>} : vector<512x128xbf16>, vector<128x128xbf16>, vector<512x128xf32> -> vector<512x128xf32>
    %11 = vector.shape_cast %10 : vector<512x128xf32> to vector<16x32x128xf32>
    %12 = vector.extract_strided_slice %11 {offsets = [0, 0, 0], sizes = [16, 16, 128], strides = [1, 1, 1]} : vector<16x32x128xf32> to vector<16x16x128xf32>
    %13 = arith.addf %5, %12 : vector<16x16x128xf32>
    %c1 = arith.constant 1 : index
    %c0_8 = arith.constant 0 : index
    %c0_9 = arith.constant 0 : index
    %14 = vector.load %arg2[%c1, %c0_8, %c0_9] : memref<9x128x128xbf16, #tpu.memory_space<vmem>>, vector<1x128x128xbf16>
    %15 = vector.shape_cast %14 : vector<1x128x128xbf16> to vector<128x128xbf16>
    %cst_10 = arith.constant dense<0.000000e+00> : vector<512x128xf32>
    %16 = tpu.matmul %7, %15, %cst_10 {dimension_numbers = #tpu.dot_dimension_numbers<[1], [0], [0], [1], [0, 0, 1, 1], [], []>} : vector<512x128xbf16>, vector<128x128xbf16>, vector<512x128xf32> -> vector<512x128xf32>
    %17 = vector.shape_cast %16 : vector<512x128xf32> to vector<16x32x128xf32>
    %18 = vector.extract_strided_slice %17 {offsets = [0, 1, 0], sizes = [16, 16, 128], strides = [1, 1, 1]} : vector<16x32x128xf32> to vector<16x16x128xf32>
    %19 = arith.addf %13, %18 : vector<16x16x128xf32>
    %c2 = arith.constant 2 : index
    %c0_11 = arith.constant 0 : index
    %c0_12 = arith.constant 0 : index
    %20 = vector.load %arg2[%c2, %c0_11, %c0_12] : memref<9x128x128xbf16, #tpu.memory_space<vmem>>, vector<1x128x128xbf16>
    %21 = vector.shape_cast %20 : vector<1x128x128xbf16> to vector<128x128xbf16>
    %cst_13 = arith.constant dense<0.000000e+00> : vector<512x128xf32>
    %22 = tpu.matmul %7, %21, %cst_13 {dimension_numbers = #tpu.dot_dimension_numbers<[1], [0], [0], [1], [0, 0, 1, 1], [], []>} : vector<512x128xbf16>, vector<128x128xbf16>, vector<512x128xf32> -> vector<512x128xf32>
    %23 = vector.shape_cast %22 : vector<512x128xf32> to vector<16x32x128xf32>
    %24 = vector.extract_strided_slice %23 {offsets = [0, 2, 0], sizes = [16, 16, 128], strides = [1, 1, 1]} : vector<16x32x128xf32> to vector<16x16x128xf32>
    %25 = arith.addf %19, %24 : vector<16x16x128xf32>
    %26 = vector.extract_strided_slice %4 {offsets = [1, 0, 0], sizes = [16, 32, 128], strides = [1, 1, 1]} : vector<18x32x128xbf16> to vector<16x32x128xbf16>
    %27 = vector.shape_cast %26 : vector<16x32x128xbf16> to vector<512x128xbf16>
    %c3 = arith.constant 3 : index
    %c0_14 = arith.constant 0 : index
    %c0_15 = arith.constant 0 : index
    %28 = vector.load %arg2[%c3, %c0_14, %c0_15] : memref<9x128x128xbf16, #tpu.memory_space<vmem>>, vector<1x128x128xbf16>
    %29 = vector.shape_cast %28 : vector<1x128x128xbf16> to vector<128x128xbf16>
    %cst_16 = arith.constant dense<0.000000e+00> : vector<512x128xf32>
    %30 = tpu.matmul %27, %29, %cst_16 {dimension_numbers = #tpu.dot_dimension_numbers<[1], [0], [0], [1], [0, 0, 1, 1], [], []>} : vector<512x128xbf16>, vector<128x128xbf16>, vector<512x128xf32> -> vector<512x128xf32>
    %31 = vector.shape_cast %30 : vector<512x128xf32> to vector<16x32x128xf32>
    %32 = vector.extract_strided_slice %31 {offsets = [0, 0, 0], sizes = [16, 16, 128], strides = [1, 1, 1]} : vector<16x32x128xf32> to vector<16x16x128xf32>
    %33 = arith.addf %25, %32 : vector<16x16x128xf32>
    %c4 = arith.constant 4 : index
    %c0_17 = arith.constant 0 : index
    %c0_18 = arith.constant 0 : index
    %34 = vector.load %arg2[%c4, %c0_17, %c0_18] : memref<9x128x128xbf16, #tpu.memory_space<vmem>>, vector<1x128x128xbf16>
    %35 = vector.shape_cast %34 : vector<1x128x128xbf16> to vector<128x128xbf16>
    %cst_19 = arith.constant dense<0.000000e+00> : vector<512x128xf32>
    %36 = tpu.matmul %27, %35, %cst_19 {dimension_numbers = #tpu.dot_dimension_numbers<[1], [0], [0], [1], [0, 0, 1, 1], [], []>} : vector<512x128xbf16>, vector<128x128xbf16>, vector<512x128xf32> -> vector<512x128xf32>
    %37 = vector.shape_cast %36 : vector<512x128xf32> to vector<16x32x128xf32>
    %38 = vector.extract_strided_slice %37 {offsets = [0, 1, 0], sizes = [16, 16, 128], strides = [1, 1, 1]} : vector<16x32x128xf32> to vector<16x16x128xf32>
    %39 = arith.addf %33, %38 : vector<16x16x128xf32>
    %c5 = arith.constant 5 : index
    %c0_20 = arith.constant 0 : index
    %c0_21 = arith.constant 0 : index
    %40 = vector.load %arg2[%c5, %c0_20, %c0_21] : memref<9x128x128xbf16, #tpu.memory_space<vmem>>, vector<1x128x128xbf16>
    %41 = vector.shape_cast %40 : vector<1x128x128xbf16> to vector<128x128xbf16>
    %cst_22 = arith.constant dense<0.000000e+00> : vector<512x128xf32>
    %42 = tpu.matmul %27, %41, %cst_22 {dimension_numbers = #tpu.dot_dimension_numbers<[1], [0], [0], [1], [0, 0, 1, 1], [], []>} : vector<512x128xbf16>, vector<128x128xbf16>, vector<512x128xf32> -> vector<512x128xf32>
    %43 = vector.shape_cast %42 : vector<512x128xf32> to vector<16x32x128xf32>
    %44 = vector.extract_strided_slice %43 {offsets = [0, 2, 0], sizes = [16, 16, 128], strides = [1, 1, 1]} : vector<16x32x128xf32> to vector<16x16x128xf32>
    %45 = arith.addf %39, %44 : vector<16x16x128xf32>
    %46 = vector.extract_strided_slice %4 {offsets = [2, 0, 0], sizes = [16, 32, 128], strides = [1, 1, 1]} : vector<18x32x128xbf16> to vector<16x32x128xbf16>
    %47 = vector.shape_cast %46 : vector<16x32x128xbf16> to vector<512x128xbf16>
    %c6 = arith.constant 6 : index
    %c0_23 = arith.constant 0 : index
    %c0_24 = arith.constant 0 : index
    %48 = vector.load %arg2[%c6, %c0_23, %c0_24] : memref<9x128x128xbf16, #tpu.memory_space<vmem>>, vector<1x128x128xbf16>
    %49 = vector.shape_cast %48 : vector<1x128x128xbf16> to vector<128x128xbf16>
    %cst_25 = arith.constant dense<0.000000e+00> : vector<512x128xf32>
    %50 = tpu.matmul %47, %49, %cst_25 {dimension_numbers = #tpu.dot_dimension_numbers<[1], [0], [0], [1], [0, 0, 1, 1], [], []>} : vector<512x128xbf16>, vector<128x128xbf16>, vector<512x128xf32> -> vector<512x128xf32>
    %51 = vector.shape_cast %50 : vector<512x128xf32> to vector<16x32x128xf32>
    %52 = vector.extract_strided_slice %51 {offsets = [0, 0, 0], sizes = [16, 16, 128], strides = [1, 1, 1]} : vector<16x32x128xf32> to vector<16x16x128xf32>
    %53 = arith.addf %45, %52 : vector<16x16x128xf32>
    %c7 = arith.constant 7 : index
    %c0_26 = arith.constant 0 : index
    %c0_27 = arith.constant 0 : index
    %54 = vector.load %arg2[%c7, %c0_26, %c0_27] : memref<9x128x128xbf16, #tpu.memory_space<vmem>>, vector<1x128x128xbf16>
    %55 = vector.shape_cast %54 : vector<1x128x128xbf16> to vector<128x128xbf16>
    %cst_28 = arith.constant dense<0.000000e+00> : vector<512x128xf32>
    %56 = tpu.matmul %47, %55, %cst_28 {dimension_numbers = #tpu.dot_dimension_numbers<[1], [0], [0], [1], [0, 0, 1, 1], [], []>} : vector<512x128xbf16>, vector<128x128xbf16>, vector<512x128xf32> -> vector<512x128xf32>
    %57 = vector.shape_cast %56 : vector<512x128xf32> to vector<16x32x128xf32>
    %58 = vector.extract_strided_slice %57 {offsets = [0, 1, 0], sizes = [16, 16, 128], strides = [1, 1, 1]} : vector<16x32x128xf32> to vector<16x16x128xf32>
    %59 = arith.addf %53, %58 : vector<16x16x128xf32>
    %c8 = arith.constant 8 : index
    %c0_29 = arith.constant 0 : index
    %c0_30 = arith.constant 0 : index
    %60 = vector.load %arg2[%c8, %c0_29, %c0_30] : memref<9x128x128xbf16, #tpu.memory_space<vmem>>, vector<1x128x128xbf16>
    %61 = vector.shape_cast %60 : vector<1x128x128xbf16> to vector<128x128xbf16>
    %cst_31 = arith.constant dense<0.000000e+00> : vector<512x128xf32>
    %62 = tpu.matmul %47, %61, %cst_31 {dimension_numbers = #tpu.dot_dimension_numbers<[1], [0], [0], [1], [0, 0, 1, 1], [], []>} : vector<512x128xbf16>, vector<128x128xbf16>, vector<512x128xf32> -> vector<512x128xf32>
    %63 = vector.shape_cast %62 : vector<512x128xf32> to vector<16x32x128xf32>
    %64 = vector.extract_strided_slice %63 {offsets = [0, 2, 0], sizes = [16, 16, 128], strides = [1, 1, 1]} : vector<16x32x128xf32> to vector<16x16x128xf32>
    %65 = arith.addf %59, %64 : vector<16x16x128xf32>
    %c0_32 = arith.constant 0 : index
    %c0_33 = arith.constant 0 : index
    %c0_34 = arith.constant 0 : index
    %c0_35 = arith.constant 0 : index
    %66 = vector.load %arg3[%c0_32, %c0_33, %c0_34, %c0_35] : memref<1x16x16x128xf32, #tpu.memory_space<vmem>>, vector<1x16x16x128xf32>
    %67 = vector.shape_cast %66 : vector<1x16x16x128xf32> to vector<16x16x128xf32>
    %68 = vector.shape_cast %65 : vector<16x16x128xf32> to vector<1x16x16x128xf32>
    tpu.vector_store %arg3[%c0_32, %c0_33, %c0_34, %c0_35], %68 {strides = array<i32>} : memref<1x16x16x128xf32, #tpu.memory_space<vmem>>, vector<1x16x16x128xf32>,
    %c0_36 = arith.constant 0 : index
    %c0_37 = arith.constant 0 : index
    %69 = vector.load %arg4[%c0_36, %c0_37] : memref<1x128xf32, #tpu.memory_space<vmem>>, vector<1x128xf32>
    %cst_38 = arith.constant dense<0.000000e+00> : vector<16x128xf32>
    %70 = vector.multi_reduction <add>, %65, %cst_38 [0] : vector<16x16x128xf32> to vector<16x128xf32>
    %cst_39 = arith.constant dense<0.000000e+00> : vector<128xf32>
    %71 = vector.multi_reduction <add>, %70, %cst_39 [0] : vector<16x128xf32> to vector<128xf32>
    %72 = vector.shape_cast %71 : vector<128xf32> to vector<1x128xf32>
    %73 = arith.addf %69, %72 : vector<1x128xf32>
    %c0_40 = arith.constant 0 : index
    %c0_41 = arith.constant 0 : index
    %74 = vector.load %arg4[%c0_40, %c0_41] : memref<1x128xf32, #tpu.memory_space<vmem>>, vector<1x128xf32>
    tpu.vector_store %arg4[%c0_40, %c0_41], %73 {strides = array<i32>} : memref<1x128xf32, #tpu.memory_space<vmem>>, vector<1x128xf32>,
    %c0_42 = arith.constant 0 : index
    %c0_43 = arith.constant 0 : index
    %75 = vector.load %arg5[%c0_42, %c0_43] : memref<1x128xf32, #tpu.memory_space<vmem>>, vector<1x128xf32>
    %76 = arith.mulf %65, %65 : vector<16x16x128xf32>
    %cst_44 = arith.constant dense<0.000000e+00> : vector<16x128xf32>
    %77 = vector.multi_reduction <add>, %76, %cst_44 [0] : vector<16x16x128xf32> to vector<16x128xf32>
    %cst_45 = arith.constant dense<0.000000e+00> : vector<128xf32>
    %78 = vector.multi_reduction <add>, %77, %cst_45 [0] : vector<16x128xf32> to vector<128xf32>
    %79 = vector.shape_cast %78 : vector<128xf32> to vector<1x128xf32>
    %80 = arith.addf %75, %79 : vector<1x128xf32>
    %c0_46 = arith.constant 0 : index
    %c0_47 = arith.constant 0 : index
    %81 = vector.load %arg5[%c0_46, %c0_47] : memref<1x128xf32, #tpu.memory_space<vmem>>, vector<1x128xf32>
    tpu.vector_store %arg5[%c0_46, %c0_47], %80 {strides = array<i32>} : memref<1x128xf32, #tpu.memory_space<vmem>>, vector<1x128xf32>,
    return
  }
  func.func @transform_0(%arg0: i32) -> (i32, i32, i32, i32) {
    %c0_i32 = arith.constant 0 : i32
    %c0_i32_0 = arith.constant 0 : i32
    %c0_i32_1 = arith.constant 0 : i32
    %c0_i32_2 = arith.constant 0 : i32
    return %arg0, %c0_i32, %c0_i32_0, %c0_i32_1 : i32, i32, i32, i32
  }
  func.func @transform_1(%arg0: i32) -> (i32, i32, i32) {
    %c0_i32 = arith.constant 0 : i32
    %c0_i32_0 = arith.constant 0 : i32
    %c0_i32_1 = arith.constant 0 : i32
    %c0_i32_2 = arith.constant 0 : i32
    return %c0_i32, %c0_i32_0, %c0_i32_1 : i32, i32, i32
  }
  func.func @transform_2(%arg0: i32) -> (i32, i32, i32, i32) {
    %c0_i32 = arith.constant 0 : i32
    %c0_i32_0 = arith.constant 0 : i32
    %c0_i32_1 = arith.constant 0 : i32
    %c0_i32_2 = arith.constant 0 : i32
    return %arg0, %c0_i32, %c0_i32_0, %c0_i32_1 : i32, i32, i32, i32
  }
  func.func @transform_3(%arg0: i32) -> (i32, i32) {
    %c0_i32 = arith.constant 0 : i32
    %c0_i32_0 = arith.constant 0 : i32
    %c0_i32_1 = arith.constant 0 : i32
    return %c0_i32, %c0_i32_0 : i32, i32
  }
  func.func @transform_4(%arg0: i32) -> (i32, i32) {
    %c0_i32 = arith.constant 0 : i32
    %c0_i32_0 = arith.constant 0 : i32
    %c0_i32_1 = arith.constant 0 : i32
    return %c0_i32, %c0_i32_0 : i32, i32
  }
}

</mosaic_0001>

<llo_original>
// kernel: cbr_forward.3
$region0: #{cbr_forward.3}
  #allocation0 [shape = 'u32[]', space=smem, size = 0x4, offset = 0x4, fixed_abs, tag = 'smem constant byte address 0x4 - core index']
  #allocation1 [shape = 'u32[144,128]{1,0:T(1,128)}', space=vmem, size = 0x12000, scoped, tag = 'internal scratch']
  %s0 = inlined_call_operand.vmem [shape: f32[2,16,16,128], index: 0, kind: input, shape index: {}]
  %s1 = inlined_call_operand.vmem [shape: f32[1,128], index: 1, kind: input, shape index: {}]
  %s2 = inlined_call_operand.vmem [shape: f32[1,128], index: 2, kind: input, shape index: {}]
  %s3 = inlined_call_operand.vmem [shape: f32[1,128], index: 3, kind: input, shape index: {}]
  %s4 = inlined_call_operand.vmem [shape: f32[1,128], index: 4, kind: input, shape index: {}]
  %s5 = inlined_call_operand.vmem [shape: f32[2,16,16,128], index: 5, kind: output, shape index: {}]
  %s6 = sld [smem:[#allocation0]]
  $region53: #{cbr_forward.3} parent=0
    _
  %s8 = ssub.s32 1, %s6
  %s9 = scalar_select 0, %s8, %s6
  loop: start=0, step=1, limit=4
  $region2: #{cbr_forward.3} parent=0 // loop_pre_header
    _
  $region3: #{cbr_forward.3} parent=0 // loop_header
    %s11 = sphi 0, %s15
    %p12 = scmp.ge.s32.totalorder %s11, 4
    %s21 = sphi 0, %s23
    %s24 = sphi 0, %s21
    %s25 = sphi 0, %s24
    %s41 = sphi 0, %s25
    %s45 = sphi 0, %s45
    %s47 = sphi 0, %s45
    %s48 = sphi 0, %s47
    %s62 = sphi 0, %s48
    %s66 = sphi 0, %s66
    %s68 = sphi 0, %s66
    %s69 = sphi 0, %s68
    %s83 = sphi 0, %s69
    %s87 = sphi 0, %s87
    %s89 = sphi 0, %s87
    %s90 = sphi 0, %s89
    %s104 = sphi 0, %s90
    %s108 = sphi 0, %s108
    %s110 = sphi 0, %s108
    %s111 = sphi 0, %s110
    %s125 = sphi 0, %s111
    %s131 = sphi 0, %s133
    %s134 = sphi 0, %s131
    %s135 = sphi 0, %s134
    %s151 = sphi 0, %s135
  $region4: #{cbr_forward.3} parent=0 // loop_header_branch
    %14 = sbr.rel (%p12) target = $region8
  $region5: #{cbr_forward.3} parent=0 // loop_body
    %s16 = ssub.s32 %s11, 1
    %s17 = ssub.s32 %s11, 2
    %s18 = sadd.s32 %s11, 1
    %s19 = ssub.s32 %s11, %s18
    %p20 = scmp.eq.s32.totalorder %s19, 0
    %s22 = sadd.s32 %s21, 1
    %s23 = scalar_select %p20, %s21, %s22
    %p26 = pneg %p20
    %p27 = scmp.eq.s32.totalorder %s11, 1
    %p28 = por %p26, %p27
    %p29 = scmp.ne.s32.totalorder %s21, %s24
    %p30 = scmp.eq.s32.totalorder %s11, 0
    %p31 = por %p29, %p30
    %p32 = scmp.ne.s32.totalorder %s21, %s24
    %p33 = scmp.eq.s32.totalorder %s16, 1
    %p34 = por %p32, %p33
    %p35 = scmp.ne.s32.totalorder %s24, %s25
    %p36 = scmp.eq.s32.totalorder %s16, 0
    %p37 = por %p35, %p36
    %p38 = scmp.ne.s32.totalorder %s24, %s25
    %p39 = scmp.eq.s32.totalorder %s17, 1
    %p40 = por %p38, %p39
    %p42 = scmp.ne.s32.totalorder %s25, %s41
    %p43 = scmp.eq.s32.totalorder %s17, 0
    %p44 = por %p42, %p43
    %s46 = sadd.s32 %s45, 1
    %p49 = scmp.eq.s32.totalorder %s11, 1
    %p50 = scmp.ne.s32.totalorder %s45, %s47
    %p51 = scmp.eq.s32.totalorder %s11, 0
    %p52 = por %p50, %p51
    %p53 = scmp.ne.s32.totalorder %s45, %s47
    %p54 = scmp.eq.s32.totalorder %s16, 1
    %p55 = por %p53, %p54
    %p56 = scmp.ne.s32.totalorder %s47, %s48
    %p57 = scmp.eq.s32.totalorder %s16, 0
    %p58 = por %p56, %p57
    %p59 = scmp.ne.s32.totalorder %s47, %s48
    %p60 = scmp.eq.s32.totalorder %s17, 1
    %p61 = por %p59, %p60
    %p63 = scmp.ne.s32.totalorder %s48, %s62
    %p64 = scmp.eq.s32.totalorder %s17, 0
    %p65 = por %p63, %p64
    %s67 = sadd.s32 %s66, 1
    %p70 = scmp.eq.s32.totalorder %s11, 1
    %p71 = scmp.ne.s32.totalorder %s66, %s68
    %p72 = scmp.eq.s32.totalorder %s11, 0
    %p73 = por %p71, %p72
    %p74 = scmp.ne.s32.totalorder %s66, %s68
    %p75 = scmp.eq.s32.totalorder %s16, 1
    %p76 = por %p74, %p75
    %p77 = scmp.ne.s32.totalorder %s68, %s69
    %p78 = scmp.eq.s32.totalorder %s16, 0
    %p79 = por %p77, %p78
    %p80 = scmp.ne.s32.totalorder %s68, %s69
    %p81 = scmp.eq.s32.totalorder %s17, 1
    %p82 = por %p80, %p81
    %p84 = scmp.ne.s32.totalorder %s69, %s83
    %p85 = scmp.eq.s32.totalorder %s17, 0
    %p86 = por %p84, %p85
    %s88 = sadd.s32 %s87, 1
    %p91 = scmp.eq.s32.totalorder %s11, 1
    %p92 = scmp.ne.s32.totalorder %s87, %s89
    %p93 = scmp.eq.s32.totalorder %s11, 0
    %p94 = por %p92, %p93
    %p95 = scmp.ne.s32.totalorder %s87, %s89
    %p96 = scmp.eq.s32.totalorder %s16, 1
    %p97 = por %p95, %p96
    %p98 = scmp.ne.s32.totalorder %s89, %s90
    %p99 = scmp.eq.s32.totalorder %s16, 0
    %p100 = por %p98, %p99
    %p101 = scmp.ne.s32.totalorder %s89, %s90
    %p102 = scmp.eq.s32.totalorder %s17, 1
    %p103 = por %p101, %p102
    %p105 = scmp.ne.s32.totalorder %s90, %s104
    %p106 = scmp.eq.s32.totalorder %s17, 0
    %p107 = por %p105, %p106
    %s109 = sadd.s32 %s108, 1
    %p112 = scmp.eq.s32.totalorder %s11, 1
    %p113 = scmp.ne.s32.totalorder %s108, %s110
    %p114 = scmp.eq.s32.totalorder %s11, 0
    %p115 = por %p113, %p114
    %p116 = scmp.ne.s32.totalorder %s108, %s110
    %p117 = scmp.eq.s32.totalorder %s16, 1
    %p118 = por %p116, %p117
    %p119 = scmp.ne.s32.totalorder %s110, %s111
    %p120 = scmp.eq.s32.totalorder %s16, 0
    %p121 = por %p119, %p120
    %p122 = scmp.ne.s32.totalorder %s110, %s111
    %p123 = scmp.eq.s32.totalorder %s17, 1
    %p124 = por %p122, %p123
    %p126 = scmp.ne.s32.totalorder %s111, %s125
    %p127 = scmp.eq.s32.totalorder %s17, 0
    %p128 = por %p126, %p127
    %s129 = ssub.s32 %s11, %s18
    %p130 = scmp.eq.s32.totalorder %s129, 0
    %s132 = sadd.s32 %s131, 1
    %s133 = scalar_select %p130, %s131, %s132
    %p136 = pneg %p130
    %p137 = scmp.eq.s32.totalorder %s11, 1
    %p138 = por %p136, %p137
    %p139 = scmp.ne.s32.totalorder %s131, %s134
    %p140 = scmp.eq.s32.totalorder %s11, 0
    %p141 = por %p139, %p140
    %p142 = scmp.ne.s32.totalorder %s131, %s134
    %p143 = scmp.eq.s32.totalorder %s16, 1
    %p144 = por %p142, %p143
    %p145 = scmp.ne.s32.totalorder %s134, %s135
    %p146 = scmp.eq.s32.totalorder %s16, 0
    %p147 = por %p145, %p146
    %p148 = scmp.ne.s32.totalorder %s134, %s135
    %p149 = scmp.eq.s32.totalorder %s17, 1
    %p150 = por %p148, %p149
    %p152 = scmp.ne.s32.totalorder %s135, %s151
    %p153 = scmp.eq.s32.totalorder %s17, 0
    %p154 = por %p152, %p153
    %p155 = scmp.le.s32.totalorder 1, %s11
    %p156 = scmp.lt.s32.totalorder %s11, 3
    %p157 = pnand %p155, %p156
    %p158 = pneg %p157
    // Predicated region
    $region9: #{cbr_forward.3} parent=5 // pred_check
      _
    $region10: #{cbr_forward.3} parent=5 // pred_check_branch
      %160 = sbr.rel (%p157) target = $region12
    $region11: #{cbr_forward.3} parent=5 // pred_region
      %s161 = ssub.s32 %s11, 1
      // Predicated region
      $region13: #{cbr_forward.3} parent=11 // pred_check
        %p162 = pneg %p58
      $region14: #{cbr_forward.3} parent=11 // pred_check_branch
        %164 = sbr.rel (%p162) target = $region16
      $region15: #{cbr_forward.3} parent=11 // pred_region
        _
      $region16: #{cbr_forward.3} parent=11 // pred_fallthru
        _
      // Predicated region
      $region17: #{cbr_forward.3} parent=11 // pred_check
        %p165 = pneg %p79
      $region18: #{cbr_forward.3} parent=11 // pred_check_branch
        %167 = sbr.rel (%p165) target = $region20
      $region19: #{cbr_forward.3} parent=11 // pred_region
        _
      $region20: #{cbr_forward.3} parent=11 // pred_fallthru
        _
      // Predicated region
      $region21: #{cbr_forward.3} parent=11 // pred_check
        %p168 = pneg %p100
      $region22: #{cbr_forward.3} parent=11 // pred_check_branch
        %170 = sbr.rel (%p168) target = $region24
      $region23: #{cbr_forward.3} parent=11 // pred_region
        _
      $region24: #{cbr_forward.3} parent=11 // pred_fallthru
        _
      // Predicated region
      $region25: #{cbr_forward.3} parent=11 // pred_check
        %p171 = pneg %p121
      $region26: #{cbr_forward.3} parent=11 // pred_check_branch
        %173 = sbr.rel (%p171) target = $region28
      $region27: #{cbr_forward.3} parent=11 // pred_region
        _
      $region28: #{cbr_forward.3} parent=11 // pred_fallthru
        _
    $region12: #{cbr_forward.3} parent=5 // pred_fallthru
      _
    %p174 = scmp.lt.s32.totalorder %s11, 2
    // Predicated region
    $region29: #{cbr_forward.3} parent=5 // pred_check
      %p175 = pneg %p174
    $region30: #{cbr_forward.3} parent=5 // pred_check_branch
      %177 = sbr.rel (%p175) target = $region32
    $region31: #{cbr_forward.3} parent=5 // pred_region
      // Predicated region
      $region33: #{cbr_forward.3} parent=31 // pred_check
        %p178 = pneg %p31
      $region34: #{cbr_forward.3} parent=31 // pred_check_branch
        %180 = sbr.rel (%p178) target = $region36
      $region35: #{cbr_forward.3} parent=31 // pred_region
        %p181 = scmp.lt.s32.totalorder %s11, 1
        %s182 = scalar_select %p181, %s11, 1
        %s183 = smul.addr %s182, 32
        %s184 = smul.addr %s183, 8
        %s185 = scalar_lea.vmem %s0, %s184
      $region36: #{cbr_forward.3} parent=31 // pred_fallthru
        _
    $region32: #{cbr_forward.3} parent=5 // pred_fallthru
      _
    %p186 = scmp.le.s32.totalorder 1, %s11
    %p187 = scmp.lt.s32.totalorder %s11, 3
    %p188 = pnand %p186, %p187
    %p189 = pneg %p188
    // Predicated region
    $region37: #{cbr_forward.3} parent=5 // pred_check
      _
    $region38: #{cbr_forward.3} parent=5 // pred_check_branch
      %191 = sbr.rel (%p188) target = $region40
    $region39: #{cbr_forward.3} parent=5 // pred_region
      %s192 = ssub.s32 %s11, 1
      %p193 = scmp.lt.s32.totalorder %s16, 1
      %s194 = scalar_select %p193, %s16, 1
      %s195 = smul.addr %s194, 32
      %s196 = smul.addr %s195, 8
      %s197 = scalar_lea.vmem %s0, %s196
      %p198 = pneg %p37
      %p199 = pneg %p34
      %p200 = pneg %p58
      %p201 = pneg %p55
      %p202 = pneg %p79
      %p203 = pneg %p76
      %p204 = pneg %p100
      %p205 = pneg %p97
      %p206 = pneg %p121
      %p207 = pneg %p118
      %p208 = pneg %p147
      %p209 = pneg %p144
      %p210 = scmp.lt.s32.totalorder %s16, 1
      %s211 = scalar_select %p210, %s16, 1
      %s212 = smul.addr %s211, 32
      %s213 = smul.addr %s212, 8
      %s214 = scalar_lea.vmem %s5, %s213
      %p215 = scmp.lt.s32.totalorder %s16, 1
      %s216 = scalar_select %p215, %s16, 1
      %s217 = smul.addr %s216, 32
      %s218 = smul.addr %s217, 8
      %s219 = scalar_lea.vmem %s0, %s218
      %p220 = scmp.lt.s32.totalorder %s16, 1
      %s221 = scalar_select %p220, %s16, 1
      %s222 = smul.addr %s221, 32
      %s223 = smul.addr %s222, 8
      %s224 = scalar_lea.vmem %s5, %s223
      %v225 = vld [vmem:[%s1] sm:$0x1]
      %v226 = vmul.f32 %v225, 0.001953125
      %v227 = vld [vmem:[%s2] sm:$0x1]
      %v228 = vmul.f32 %v227, 0.001953125
      %v229 = vmul.f32 %v226, %v226
      %v230 = vsub.f32 %v228, %v229
      %v231 = vmax.f32 %v230, 0.0
      %v232 = vld [vmem:[%s3] sm:$0x1]
      %v233 = vadd.f32 %v231, 1e-05
      %v234 = vrsqrt.pop %v233
      %v235 = vmul.f32 %v232, %v234
      %v236 = vld [vmem:[%s4] sm:$0x1]
      %v237 = vmul.f32 %v226, %v235
      %v238 = vsub.f32 %v236, %v237
      %v239 = vld [vmem:[%s219] sm:$0xff]
      %v240 = vld [vmem:[%s219 + $0x8] sm:$0xff]
      %v241 = vld [vmem:[%s219 + $0x10] sm:$0xff]
      %v242 = vld [vmem:[%s219 + $0x18] sm:$0xff]
      %v243 = vld [vmem:[%s219 + $0x20] sm:$0xff]
      %v244 = vld [vmem:[%s219 + $0x28] sm:$0xff]
      %v245 = vld [vmem:[%s219 + $0x30] sm:$0xff]
      %v246 = vld [vmem:[%s219 + $0x38] sm:$0xff]
      %v247 = vld [vmem:[%s219 + $0x40] sm:$0xff]
      %v248 = vld [vmem:[%s219 + $0x48] sm:$0xff]
      %v249 = vld [vmem:[%s219 + $0x50] sm:$0xff]
      %v250 = vld [vmem:[%s219 + $0x58] sm:$0xff]
      %v251 = vld [vmem:[%s219 + $0x60] sm:$0xff]
      %v252 = vld [vmem:[%s219 + $0x68] sm:$0xff]
      %v253 = vld [vmem:[%s219 + $0x70] sm:$0xff]
      %v254 = vld [vmem:[%s219 + $0x78] sm:$0xff]
      %v255 = vld [vmem:[%s219 + $0x80] sm:$0xff]
      %v256 = vld [vmem:[%s219 + $0x88] sm:$0xff]
      %v257 = vld [vmem:[%s219 + $0x90] sm:$0xff]
      %v258 = vld [vmem:[%s219 + $0x98] sm:$0xff]
      %v259 = vld [vmem:[%s219 + $0xa0] sm:$0xff]
      %v260 = vld [vmem:[%s219 + $0xa8] sm:$0xff]
      %v261 = vld [vmem:[%s219 + $0xb0] sm:$0xff]
      %v262 = vld [vmem:[%s219 + $0xb8] sm:$0xff]
      %v263 = vld [vmem:[%s219 + $0xc0] sm:$0xff]
      %v264 = vld [vmem:[%s219 + $0xc8] sm:$0xff]
      %v265 = vld [vmem:[%s219 + $0xd0] sm:$0xff]
      %v266 = vld [vmem:[%s219 + $0xd8] sm:$0xff]
      %v267 = vld [vmem:[%s219 + $0xe0] sm:$0xff]
      %v268 = vld [vmem:[%s219 + $0xe8] sm:$0xff]
      %v269 = vld [vmem:[%s219 + $0xf0] sm:$0xff]
      %v270 = vld [vmem:[%s219 + $0xf8] sm:$0xff]
      %v272 = vlaneseq
      %v273 = vshrl.u32 %v272, 7
      %v274 = vsub.s32 0, %v273
      %v275 = vrot.slane %v235, %v274
      %v277 = vmul.f32 %v239, %v275
      %v278 = vmul.f32 %v240, %v275
      %v279 = vmul.f32 %v241, %v275
      %v280 = vmul.f32 %v242, %v275
      %v281 = vmul.f32 %v243, %v275
      %v282 = vmul.f32 %v244, %v275
      %v283 = vmul.f32 %v245, %v275
      %v284 = vmul.f32 %v246, %v275
      %v285 = vmul.f32 %v247, %v275
      %v286 = vmul.f32 %v248, %v275
      %v287 = vmul.f32 %v249, %v275
      %v288 = vmul.f32 %v250, %v275
      %v289 = vmul.f32 %v251, %v275
      %v290 = vmul.f32 %v252, %v275
      %v291 = vmul.f32 %v253, %v275
      %v292 = vmul.f32 %v254, %v275
      %v293 = vmul.f32 %v255, %v275
      %v294 = vmul.f32 %v256, %v275
      %v295 = vmul.f32 %v257, %v275
      %v296 = vmul.f32 %v258, %v275
      %v297 = vmul.f32 %v259, %v275
      %v298 = vmul.f32 %v260, %v275
      %v299 = vmul.f32 %v261, %v275
      %v300 = vmul.f32 %v262, %v275
      %v301 = vmul.f32 %v263, %v275
      %v302 = vmul.f32 %v264, %v275
      %v303 = vmul.f32 %v265, %v275
      %v304 = vmul.f32 %v266, %v275
      %v305 = vmul.f32 %v267, %v275
      %v306 = vmul.f32 %v268, %v275
      %v307 = vmul.f32 %v269, %v275
      %v308 = vmul.f32 %v270, %v275
      %v310 = vlaneseq
      %v311 = vshrl.u32 %v310, 7
      %v312 = vsub.s32 0, %v311
      %v313 = vrot.slane %v238, %v312
      %v315 = vadd.f32 %v277, %v313
      %v316 = vadd.f32 %v278, %v313
      %v317 = vadd.f32 %v279, %v313
      %v318 = vadd.f32 %v280, %v313
      %v319 = vadd.f32 %v281, %v313
      %v320 = vadd.f32 %v282, %v313
      %v321 = vadd.f32 %v283, %v313
      %v322 = vadd.f32 %v284, %v313
      %v323 = vadd.f32 %v285, %v313
      %v324 = vadd.f32 %v286, %v313
      %v325 = vadd.f32 %v287, %v313
      %v326 = vadd.f32 %v288, %v313
      %v327 = vadd.f32 %v289, %v313
      %v328 = vadd.f32 %v290, %v313
      %v329 = vadd.f32 %v291, %v313
      %v330 = vadd.f32 %v292, %v313
      %v331 = vadd.f32 %v293, %v313
      %v332 = vadd.f32 %v294, %v313
      %v333 = vadd.f32 %v295, %v313
      %v334 = vadd.f32 %v296, %v313
      %v335 = vadd.f32 %v297, %v313
      %v336 = vadd.f32 %v298, %v313
      %v337 = vadd.f32 %v299, %v313
      %v338 = vadd.f32 %v300, %v313
      %v339 = vadd.f32 %v301, %v313
      %v340 = vadd.f32 %v302, %v313
      %v341 = vadd.f32 %v303, %v313
      %v342 = vadd.f32 %v304, %v313
      %v343 = vadd.f32 %v305, %v313
      %v344 = vadd.f32 %v306, %v313
      %v345 = vadd.f32 %v307, %v313
      %v346 = vadd.f32 %v308, %v313
      %v347 = vmax.f32 %v315, 0.0
      %v348 = vmax.f32 %v316, 0.0
      %v349 = vmax.f32 %v317, 0.0
      %v350 = vmax.f32 %v318, 0.0
      %v351 = vmax.f32 %v319, 0.0
      %v352 = vmax.f32 %v320, 0.0
      %v353 = vmax.f32 %v321, 0.0
      %v354 = vmax.f32 %v322, 0.0
      %v355 = vmax.f32 %v323, 0.0
      %v356 = vmax.f32 %v324, 0.0
      %v357 = vmax.f32 %v325, 0.0
      %v358 = vmax.f32 %v326, 0.0
      %v359 = vmax.f32 %v327, 0.0
      %v360 = vmax.f32 %v328, 0.0
      %v361 = vmax.f32 %v329, 0.0
      %v362 = vmax.f32 %v330, 0.0
      %v363 = vmax.f32 %v331, 0.0
      %v364 = vmax.f32 %v332, 0.0
      %v365 = vmax.f32 %v333, 0.0
      %v366 = vmax.f32 %v334, 0.0
      %v367 = vmax.f32 %v335, 0.0
      %v368 = vmax.f32 %v336, 0.0
      %v369 = vmax.f32 %v337, 0.0
      %v370 = vmax.f32 %v338, 0.0
      %v371 = vmax.f32 %v339, 0.0
      %v372 = vmax.f32 %v340, 0.0
      %v373 = vmax.f32 %v341, 0.0
      %v374 = vmax.f32 %v342, 0.0
      %v375 = vmax.f32 %v343, 0.0
      %v376 = vmax.f32 %v344, 0.0
      %v377 = vmax.f32 %v345, 0.0
      %v378 = vmax.f32 %v346, 0.0
      %379 = vst [vmem:[%s224] sm:$0xff] %v347
      %380 = vst [vmem:[%s224 + $0x8] sm:$0xff] %v348
      %381 = vst [vmem:[%s224 + $0x10] sm:$0xff] %v349
      %382 = vst [vmem:[%s224 + $0x18] sm:$0xff] %v350
      %383 = vst [vmem:[%s224 + $0x20] sm:$0xff] %v351
      %384 = vst [vmem:[%s224 + $0x28] sm:$0xff] %v352
      %385 = vst [vmem:[%s224 + $0x30] sm:$0xff] %v353
      %386 = vst [vmem:[%s224 + $0x38] sm:$0xff] %v354
      %387 = vst [vmem:[%s224 + $0x40] sm:$0xff] %v355
      %388 = vst [vmem:[%s224 + $0x48] sm:$0xff] %v356
      %389 = vst [vmem:[%s224 + $0x50] sm:$0xff] %v357
      %390 = vst [vmem:[%s224 + $0x58] sm:$0xff] %v358
      %391 = vst [vmem:[%s224 + $0x60] sm:$0xff] %v359
      %392 = vst [vmem:[%s224 + $0x68] sm:$0xff] %v360
      %393 = vst [vmem:[%s224 + $0x70] sm:$0xff] %v361
      %394 = vst [vmem:[%s224 + $0x78] sm:$0xff] %v362
      %395 = vst [vmem:[%s224 + $0x80] sm:$0xff] %v363
      %396 = vst [vmem:[%s224 + $0x88] sm:$0xff] %v364
      %397 = vst [vmem:[%s224 + $0x90] sm:$0xff] %v365
      %398 = vst [vmem:[%s224 + $0x98] sm:$0xff] %v366
      %399 = vst [vmem:[%s224 + $0xa0] sm:$0xff] %v367
      %400 = vst [vmem:[%s224 + $0xa8] sm:$0xff] %v368
      %401 = vst [vmem:[%s224 + $0xb0] sm:$0xff] %v369
      %402 = vst [vmem:[%s224 + $0xb8] sm:$0xff] %v370
      %403 = vst [vmem:[%s224 + $0xc0] sm:$0xff] %v371
      %404 = vst [vmem:[%s224 + $0xc8] sm:$0xff] %v372
      %405 = vst [vmem:[%s224 + $0xd0] sm:$0xff] %v373
      %406 = vst [vmem:[%s224 + $0xd8] sm:$0xff] %v374
      %407 = vst [vmem:[%s224 + $0xe0] sm:$0xff] %v375
      %408 = vst [vmem:[%s224 + $0xe8] sm:$0xff] %v376
      %409 = vst [vmem:[%s224 + $0xf0] sm:$0xff] %v377
      %410 = vst [vmem:[%s224 + $0xf8] sm:$0xff] %v378
      %p411 = scmp.lt.s32.totalorder %s16, 1
      %s412 = scalar_select %p411, %s16, 1
      %s413 = smul.addr %s412, 32
      %s414 = smul.addr %s413, 8
      %s415 = scalar_lea.vmem %s5, %s414
      // Predicated region
      $region41: #{cbr_forward.3} parent=39 // pred_check
        %p416 = pneg %p144
      $region42: #{cbr_forward.3} parent=39 // pred_check_branch
        %418 = sbr.rel (%p416) target = $region44
      $region43: #{cbr_forward.3} parent=39 // pred_region
        _
      $region44: #{cbr_forward.3} parent=39 // pred_fallthru
        _
    $region40: #{cbr_forward.3} parent=5 // pred_fallthru
      _
    %p419 = scmp.le.s32.totalorder 2, %s11
    // Predicated region
    $region45: #{cbr_forward.3} parent=5 // pred_check
      %p420 = pneg %p419
    $region46: #{cbr_forward.3} parent=5 // pred_check_branch
      %422 = sbr.rel (%p420) target = $region48
    $region47: #{cbr_forward.3} parent=5 // pred_region
      %s423 = ssub.s32 %s11, 2
      // Predicated region
      $region49: #{cbr_forward.3} parent=47 // pred_check
        %p424 = pneg %p150
      $region50: #{cbr_forward.3} parent=47 // pred_check_branch
        %426 = sbr.rel (%p424) target = $region52
      $region51: #{cbr_forward.3} parent=47 // pred_region
        %p427 = scmp.lt.s32.totalorder %s17, 1
        %s428 = scalar_select %p427, %s17, 1
        %s429 = smul.addr %s428, 32
        %s430 = smul.addr %s429, 8
        %s431 = scalar_lea.vmem %s5, %s430
      $region52: #{cbr_forward.3} parent=47 // pred_fallthru
        _
    $region48: #{cbr_forward.3} parent=5 // pred_fallthru
      _
  $region6: #{cbr_forward.3} parent=0 // loop_footer
    %s15 = sadd.s32 1, %s11
  $region7: #{cbr_forward.3} parent=0 // loop_footer_branch
    %10 = sbr.rel target = $region3
  $region8: #{cbr_forward.3} parent=0 // loop_exit
    _

// kernel: cbr_forward.2
$region0: #{cbr_forward.2}
  #allocation0 [shape = 'u32[]', space=smem, size = 0x4, offset = 0x4, fixed_abs, tag = 'smem constant byte address 0x4 - core index']
  #allocation1 [shape = 'u32[144,128]{1,0:T(1,128)}', space=vmem, size = 0x12000, scoped, tag = 'internal scratch']
  %s0 = inlined_call_operand.vmem [shape: bf16[2,18,32,128], index: 0, kind: input, shape index: {}]
  %s1 = inlined_call_operand.vmem [shape: bf16[9,128,128], index: 1, kind: input, shape index: {}]
  %s2 = inlined_call_operand.vmem [shape: f32[2,16,16,128], index: 2, kind: output, shape index: {0}]
  %s3 = inlined_call_operand.vmem [shape: f32[1,128], index: 3, kind: output, shape index: {1}]
  %s4 = inlined_call_operand.vmem [shape: f32[1,128], index: 4, kind: output, shape index: {2}]
  %5 = xla_tuple %s2, %s3, %s4
  %s6 = sld [smem:[#allocation0]]
  $region61: #{cbr_forward.2} parent=0
    _
  %s8 = ssub.s32 1, %s6
  %s9 = scalar_select 0, %s8, %s6
  loop: start=0, step=1, limit=4
  $region2: #{cbr_forward.2} parent=0 // loop_pre_header
    _
  $region3: #{cbr_forward.2} parent=0 // loop_header
    %s11 = sphi 0, %s15
    %p12 = scmp.ge.s32.totalorder %s11, 4
    %s21 = sphi 0, %s23
    %s24 = sphi 0, %s21
    %s25 = sphi 0, %s24
    %s41 = sphi 0, %s25
    %s45 = sphi 0, %s45
    %s47 = sphi 0, %s45
    %s48 = sphi 0, %s47
    %s62 = sphi 0, %s48
    %s68 = sphi 0, %s70
    %s71 = sphi 0, %s68
    %s72 = sphi 0, %s71
    %s88 = sphi 0, %s72
    %s92 = sphi 0, %s92
    %s94 = sphi 0, %s92
    %s95 = sphi 0, %s94
    %s109 = sphi 0, %s95
    %s113 = sphi 0, %s113
    %s115 = sphi 0, %s113
    %s116 = sphi 0, %s115
    %s130 = sphi 0, %s116
  $region4: #{cbr_forward.2} parent=0 // loop_header_branch
    %14 = sbr.rel (%p12) target = $region8
  $region5: #{cbr_forward.2} parent=0 // loop_body
    %s16 = ssub.s32 %s11, 1
    %s17 = ssub.s32 %s11, 2
    %s18 = sadd.s32 %s11, 1
    %s19 = ssub.s32 %s11, %s18
    %p20 = scmp.eq.s32.totalorder %s19, 0
    %s22 = sadd.s32 %s21, 1
    %s23 = scalar_select %p20, %s21, %s22
    %p26 = pneg %p20
    %p27 = scmp.eq.s32.totalorder %s11, 1
    %p28 = por %p26, %p27
    %p29 = scmp.ne.s32.totalorder %s21, %s24
    %p30 = scmp.eq.s32.totalorder %s11, 0
    %p31 = por %p29, %p30
    %p32 = scmp.ne.s32.totalorder %s21, %s24
    %p33 = scmp.eq.s32.totalorder %s16, 1
    %p34 = por %p32, %p33
    %p35 = scmp.ne.s32.totalorder %s24, %s25
    %p36 = scmp.eq.s32.totalorder %s16, 0
    %p37 = por %p35, %p36
    %p38 = scmp.ne.s32.totalorder %s24, %s25
    %p39 = scmp.eq.s32.totalorder %s17, 1
    %p40 = por %p38, %p39
    %p42 = scmp.ne.s32.totalorder %s25, %s41
    %p43 = scmp.eq.s32.totalorder %s17, 0
    %p44 = por %p42, %p43
    %s46 = sadd.s32 %s45, 1
    %p49 = scmp.eq.s32.totalorder %s11, 1
    %p50 = scmp.ne.s32.totalorder %s45, %s47
    %p51 = scmp.eq.s32.totalorder %s11, 0
    %p52 = por %p50, %p51
    %p53 = scmp.ne.s32.totalorder %s45, %s47
    %p54 = scmp.eq.s32.totalorder %s16, 1
    %p55 = por %p53, %p54
    %p56 = scmp.ne.s32.totalorder %s47, %s48
    %p57 = scmp.eq.s32.totalorder %s16, 0
    %p58 = por %p56, %p57
    %p59 = scmp.ne.s32.totalorder %s47, %s48
    %p60 = scmp.eq.s32.totalorder %s17, 1
    %p61 = por %p59, %p60
    %p63 = scmp.ne.s32.totalorder %s48, %s62
    %p64 = scmp.eq.s32.totalorder %s17, 0
    %p65 = por %p63, %p64
    %s66 = ssub.s32 %s11, %s18
    %p67 = scmp.eq.s32.totalorder %s66, 0
    %s69 = sadd.s32 %s68, 1
    %s70 = scalar_select %p67, %s68, %s69
    %p73 = pneg %p67
    %p74 = scmp.eq.s32.totalorder %s11, 1
    %p75 = por %p73, %p74
    %p76 = scmp.ne.s32.totalorder %s68, %s71
    %p77 = scmp.eq.s32.totalorder %s11, 0
    %p78 = por %p76, %p77
    %p79 = scmp.ne.s32.totalorder %s68, %s71
    %p80 = scmp.eq.s32.totalorder %s16, 1
    %p81 = por %p79, %p80
    %p82 = scmp.ne.s32.totalorder %s71, %s72
    %p83 = scmp.eq.s32.totalorder %s16, 0
    %p84 = por %p82, %p83
    %p85 = scmp.ne.s32.totalorder %s71, %s72
    %p86 = scmp.eq.s32.totalorder %s17, 1
    %p87 = por %p85, %p86
    %p89 = scmp.ne.s32.totalorder %s72, %s88
    %p90 = scmp.eq.s32.totalorder %s17, 0
    %p91 = por %p89, %p90
    %s93 = sadd.s32 %s92, 1
    %p96 = scmp.eq.s32.totalorder %s11, 1
    %p97 = scmp.ne.s32.totalorder %s92, %s94
    %p98 = scmp.eq.s32.totalorder %s11, 0
    %p99 = por %p97, %p98
    %p100 = scmp.ne.s32.totalorder %s92, %s94
    %p101 = scmp.eq.s32.totalorder %s16, 1
    %p102 = por %p100, %p101
    %p103 = scmp.ne.s32.totalorder %s94, %s95
    %p104 = scmp.eq.s32.totalorder %s16, 0
    %p105 = por %p103, %p104
    %p106 = scmp.ne.s32.totalorder %s94, %s95
    %p107 = scmp.eq.s32.totalorder %s17, 1
    %p108 = por %p106, %p107
    %p110 = scmp.ne.s32.totalorder %s95, %s109
    %p111 = scmp.eq.s32.totalorder %s17, 0
    %p112 = por %p110, %p111
    %s114 = sadd.s32 %s113, 1
    %p117 = scmp.eq.s32.totalorder %s11, 1
    %p118 = scmp.ne.s32.totalorder %s113, %s115
    %p119 = scmp.eq.s32.totalorder %s11, 0
    %p120 = por %p118, %p119
    %p121 = scmp.ne.s32.totalorder %s113, %s115
    %p122 = scmp.eq.s32.totalorder %s16, 1
    %p123 = por %p121, %p122
    %p124 = scmp.ne.s32.totalorder %s115, %s116
    %p125 = scmp.eq.s32.totalorder %s16, 0
    %p126 = por %p124, %p125
    %p127 = scmp.ne.s32.totalorder %s115, %s116
    %p128 = scmp.eq.s32.totalorder %s17, 1
    %p129 = por %p127, %p128
    %p131 = scmp.ne.s32.totalorder %s116, %s130
    %p132 = scmp.eq.s32.totalorder %s17, 0
    %p133 = por %p131, %p132
    %p134 = scmp.le.s32.totalorder 1, %s11
    %p135 = scmp.lt.s32.totalorder %s11, 3
    %p136 = pnand %p134, %p135
    %p137 = pneg %p136
    // Predicated region
    $region9: #{cbr_forward.2} parent=5 // pred_check
      _
    $region10: #{cbr_forward.2} parent=5 // pred_check_branch
      %139 = sbr.rel (%p136) target = $region12
    $region11: #{cbr_forward.2} parent=5 // pred_region
      %s140 = ssub.s32 %s11, 1
      // Predicated region
      $region13: #{cbr_forward.2} parent=11 // pred_check
        %p141 = pneg %p58
      $region14: #{cbr_forward.2} parent=11 // pred_check_branch
        %143 = sbr.rel (%p141) target = $region16
      $region15: #{cbr_forward.2} parent=11 // pred_region
        _
      $region16: #{cbr_forward.2} parent=11 // pred_fallthru
        _
    $region12: #{cbr_forward.2} parent=5 // pred_fallthru
      _
    %p144 = scmp.lt.s32.totalorder %s11, 2
    // Predicated region
    $region17: #{cbr_forward.2} parent=5 // pred_check
      %p145 = pneg %p144
    $region18: #{cbr_forward.2} parent=5 // pred_check_branch
      %147 = sbr.rel (%p145) target = $region20
    $region19: #{cbr_forward.2} parent=5 // pred_region
      // Predicated region
      $region21: #{cbr_forward.2} parent=19 // pred_check
        %p148 = pneg %p31
      $region22: #{cbr_forward.2} parent=19 // pred_check_branch
        %150 = sbr.rel (%p148) target = $region24
      $region23: #{cbr_forward.2} parent=19 // pred_region
        %p151 = scmp.lt.s32.totalorder %s11, 1
        %s152 = scalar_select %p151, %s11, 1
        %s153 = smul.addr %s152, 72
        %s154 = smul.addr %s153, 4
        %s155 = scalar_lea.vmem %s0, %s154
      $region24: #{cbr_forward.2} parent=19 // pred_fallthru
        _
    $region20: #{cbr_forward.2} parent=5 // pred_fallthru
      _
    %p156 = scmp.le.s32.totalorder 1, %s11
    %p157 = scmp.lt.s32.totalorder %s11, 3
    %p158 = pnand %p156, %p157
    %p159 = pneg %p158
    // Predicated region
    $region25: #{cbr_forward.2} parent=5 // pred_check
      _
    $region26: #{cbr_forward.2} parent=5 // pred_check_branch
      %161 = sbr.rel (%p158) target = $region28
    $region27: #{cbr_forward.2} parent=5 // pred_region
      %s162 = ssub.s32 %s11, 1
      %p163 = scmp.lt.s32.totalorder %s16, 1
      %s164 = scalar_select %p163, %s16, 1
      %s165 = smul.addr %s164, 72
      %s166 = smul.addr %s165, 4
      %s167 = scalar_lea.vmem %s0, %s166
      %p168 = pneg %p37
      %p169 = pneg %p34
      %p170 = pneg %p58
      %p171 = pneg %p55
      %p172 = pneg %p84
      %p173 = pneg %p81
      %p174 = scmp.lt.s32.totalorder %s16, 1
      %s175 = scalar_select %p174, %s16, 1
      %s176 = smul.addr %s175, 32
      %s177 = smul.addr %s176, 8
      %s178 = scalar_lea.vmem %s2, %s177
      %p179 = pneg %p105
      %p180 = pneg %p102
      %p181 = pneg %p126
      %p182 = pneg %p123
      %p183 = scmp.lt.s32.totalorder %s16, 1
      %s184 = scalar_select %p183, %s16, 1
      %s185 = smul.addr %s184, 72
      %s186 = smul.addr %s185, 4
      %s187 = scalar_lea.vmem %s0, %s186
      %p188 = scmp.lt.s32.totalorder %s16, 1
      %s189 = scalar_select %p188, %s16, 1
      %s190 = smul.addr %s189, 32
      %s191 = smul.addr %s190, 8
      %s192 = scalar_lea.vmem %s2, %s191
      %p194 = scmp.eq.s32.totalorder %s16, 0
      // Predicated region
      $region29: #{cbr_forward.2} parent=27 // pred_check
        %p195 = pneg %p194
      $region30: #{cbr_forward.2} parent=27 // pred_check_branch
        %197 = sbr.rel (%p195) target = $region32
      $region31: #{cbr_forward.2} parent=27 // pred_region
        %198 = vst [vmem:[%s3] sm:$0x1] 0.0
        %199 = vst [vmem:[%s4] sm:$0x1] 0.0
      $region32: #{cbr_forward.2} parent=27 // pred_fallthru
        _
      %v200 = vld [vmem:[%s187] sm:$0xf]
      %v201 = vld [vmem:[%s187 + $0x4] sm:$0xf]
      %v202 = vld [vmem:[%s187 + $0x8] sm:$0xf]
      %v203 = vld [vmem:[%s187 + $0xc] sm:$0xf]
      %v204 = vld [vmem:[%s187 + $0x10] sm:$0xf]
      %v205 = vld [vmem:[%s187 + $0x14] sm:$0xf]
      %v206 = vld [vmem:[%s187 + $0x18] sm:$0xf]
      %v207 = vld [vmem:[%s187 + $0x1c] sm:$0xf]
      %v208 = vld [vmem:[%s187 + $0x20] sm:$0xf]
      %v209 = vld [vmem:[%s187 + $0x24] sm:$0xf]
      %v210 = vld [vmem:[%s187 + $0x28] sm:$0xf]
      %v211 = vld [vmem:[%s187 + $0x2c] sm:$0xf]
      %v212 = vld [vmem:[%s187 + $0x30] sm:$0xf]
      %v213 = vld [vmem:[%s187 + $0x34] sm:$0xf]
      %v214 = vld [vmem:[%s187 + $0x38] sm:$0xf]
      %v215 = vld [vmem:[%s187 + $0x3c] sm:$0xf]
      %v216 = vld [vmem:[%s187 + $0x40] sm:$0xf]
      %v217 = vld [vmem:[%s187 + $0x44] sm:$0xf]
      %v218 = vld [vmem:[%s187 + $0x48] sm:$0xf]
      %v219 = vld [vmem:[%s187 + $0x4c] sm:$0xf]
      %v220 = vld [vmem:[%s187 + $0x50] sm:$0xf]
      %v221 = vld [vmem:[%s187 + $0x54] sm:$0xf]
      %v222 = vld [vmem:[%s187 + $0x58] sm:$0xf]
      %v223 = vld [vmem:[%s187 + $0x5c] sm:$0xf]
      %v224 = vld [vmem:[%s187 + $0x60] sm:$0xf]
      %v225 = vld [vmem:[%s187 + $0x64] sm:$0xf]
      %v226 = vld [vmem:[%s187 + $0x68] sm:$0xf]
      %v227 = vld [vmem:[%s187 + $0x6c] sm:$0xf]
      %v228 = vld [vmem:[%s187 + $0x70] sm:$0xf]
      %v229 = vld [vmem:[%s187 + $0x74] sm:$0xf]
      %v230 = vld [vmem:[%s187 + $0x78] sm:$0xf]
      %v231 = vld [vmem:[%s187 + $0x7c] sm:$0xf]
      %v232 = vld [vmem:[%s187 + $0x80] sm:$0xf]
      %v233 = vld [vmem:[%s187 + $0x84] sm:$0xf]
      %v234 = vld [vmem:[%s187 + $0x88] sm:$0xf]
      %v235 = vld [vmem:[%s187 + $0x8c] sm:$0xf]
      %v236 = vld [vmem:[%s187 + $0x90] sm:$0xf]
      %v237 = vld [vmem:[%s187 + $0x94] sm:$0xf]
      %v238 = vld [vmem:[%s187 + $0x98] sm:$0xf]
      %v239 = vld [vmem:[%s187 + $0x9c] sm:$0xf]
      %v240 = vld [vmem:[%s187 + $0xa0] sm:$0xf]
      %v241 = vld [vmem:[%s187 + $0xa4] sm:$0xf]
      %v242 = vld [vmem:[%s187 + $0xa8] sm:$0xf]
      %v243 = vld [vmem:[%s187 + $0xac] sm:$0xf]
      %v244 = vld [vmem:[%s187 + $0xb0] sm:$0xf]
      %v245 = vld [vmem:[%s187 + $0xb4] sm:$0xf]
      %v246 = vld [vmem:[%s187 + $0xb8] sm:$0xf]
      %v247 = vld [vmem:[%s187 + $0xbc] sm:$0xf]
      %v248 = vld [vmem:[%s187 + $0xc0] sm:$0xf]
      %v249 = vld [vmem:[%s187 + $0xc4] sm:$0xf]
      %v250 = vld [vmem:[%s187 + $0xc8] sm:$0xf]
      %v251 = vld [vmem:[%s187 + $0xcc] sm:$0xf]
      %v252 = vld [vmem:[%s187 + $0xd0] sm:$0xf]
      %v253 = vld [vmem:[%s187 + $0xd4] sm:$0xf]
      %v254 = vld [vmem:[%s187 + $0xd8] sm:$0xf]
      %v255 = vld [vmem:[%s187 + $0xdc] sm:$0xf]
      %v256 = vld [vmem:[%s187 + $0xe0] sm:$0xf]
      %v257 = vld [vmem:[%s187 + $0xe4] sm:$0xf]
      %v258 = vld [vmem:[%s187 + $0xe8] sm:$0xf]
      %v259 = vld [vmem:[%s187 + $0xec] sm:$0xf]
      %v260 = vld [vmem:[%s187 + $0xf0] sm:$0xf]
      %v261 = vld [vmem:[%s187 + $0xf4] sm:$0xf]
      %v262 = vld [vmem:[%s187 + $0xf8] sm:$0xf]
      %v263 = vld [vmem:[%s187 + $0xfc] sm:$0xf]
      %v264 = vld [vmem:[%s187 + $0x100] sm:$0xf]
      %v265 = vld [vmem:[%s187 + $0x104] sm:$0xf]
      %v266 = vld [vmem:[%s187 + $0x108] sm:$0xf]
      %v267 = vld [vmem:[%s187 + $0x10c] sm:$0xf]
      %v268 = vld [vmem:[%s187 + $0x110] sm:$0xf]
      %v269 = vld [vmem:[%s187 + $0x114] sm:$0xf]
      %v270 = vld [vmem:[%s187 + $0x118] sm:$0xf]
      %v271 = vld [vmem:[%s187 + $0x11c] sm:$0xf]
      %v272 = vld [vmem:[%s1] sm:$0xf]
      %v273 = vld [vmem:[%s1 + $0x4] sm:$0xf]
      %v274 = vld [vmem:[%s1 + $0x8] sm:$0xf]
      %v275 = vld [vmem:[%s1 + $0xc] sm:$0xf]
      %v276 = vld [vmem:[%s1 + $0x10] sm:$0xf]
      %v277 = vld [vmem:[%s1 + $0x14] sm:$0xf]
      %v278 = vld [vmem:[%s1 + $0x18] sm:$0xf]
      %v279 = vld [vmem:[%s1 + $0x1c] sm:$0xf]
      %v280 = vld [vmem:[%s1 + $0x20] sm:$0xf]
      %v281 = vld [vmem:[%s1 + $0x24] sm:$0xf]
      %v282 = vld [vmem:[%s1 + $0x28] sm:$0xf]
      %v283 = vld [vmem:[%s1 + $0x2c] sm:$0xf]
      %v284 = vld [vmem:[%s1 + $0x30] sm:$0xf]
      %v285 = vld [vmem:[%s1 + $0x34] sm:$0xf]
      %v286 = vld [vmem:[%s1 + $0x38] sm:$0xf]
      %v287 = vld [vmem:[%s1 + $0x3c] sm:$0xf]
      %v352 = vunpack.c.l.b16 %v200
      %v353 = vunpack.c.l.b16 %v201
      %v354 = vunpack.c.l.b16 %v202
      %v355 = vunpack.c.l.b16 %v203
      %v356 = vunpack.c.l.b16 %v204
      %v357 = vunpack.c.l.b16 %v205
      %v358 = vunpack.c.l.b16 %v206
      %v359 = vunpack.c.l.b16 %v207
      %v360 = vunpack.c.l.b16 %v208
      %v361 = vunpack.c.l.b16 %v209
      %v362 = vunpack.c.l.b16 %v210
      %v363 = vunpack.c.l.b16 %v211
      %v364 = vunpack.c.l.b16 %v212
      %v365 = vunpack.c.l.b16 %v213
      %v366 = vunpack.c.l.b16 %v214
      %v367 = vunpack.c.l.b16 %v215
      %v368 = vunpack.c.l.b16 %v216
      %v369 = vunpack.c.l.b16 %v217
      %v370 = vunpack.c.l.b16 %v218
      %v371 = vunpack.c.l.b16 %v219
      %v372 = vunpack.c.l.b16 %v220
      %v373 = vunpack.c.l.b16 %v221
      %v374 = vunpack.c.l.b16 %v222
      %v375 = vunpack.c.l.b16 %v223
      %v376 = vunpack.c.l.b16 %v224
      %v377 = vunpack.c.l.b16 %v225
      %v378 = vunpack.c.l.b16 %v226
      %v379 = vunpack.c.l.b16 %v227
      %v380 = vunpack.c.l.b16 %v228
      %v381 = vunpack.c.l.b16 %v229
      %v382 = vunpack.c.l.b16 %v230
      %v383 = vunpack.c.l.b16 %v231
      %v384 = vunpack.c.l.b16 %v232
      %v385 = vunpack.c.l.b16 %v233
      %v386 = vunpack.c.l.b16 %v234
      %v387 = vunpack.c.l.b16 %v235
      %v388 = vunpack.c.l.b16 %v236
      %v389 = vunpack.c.l.b16 %v237
      %v390 = vunpack.c.l.b16 %v238
      %v391 = vunpack.c.l.b16 %v239
      %v392 = vunpack.c.l.b16 %v240
      %v393 = vunpack.c.l.b16 %v241
      %v394 = vunpack.c.l.b16 %v242
      %v395 = vunpack.c.l.b16 %v243
      %v396 = vunpack.c.l.b16 %v244
      %v397 = vunpack.c.l.b16 %v245
      %v398 = vunpack.c.l.b16 %v246
      %v399 = vunpack.c.l.b16 %v247
      %v400 = vunpack.c.l.b16 %v248
      %v401 = vunpack.c.l.b16 %v249
      %v402 = vunpack.c.l.b16 %v250
      %v403 = vunpack.c.l.b16 %v251
      %v404 = vunpack.c.l.b16 %v252
      %v405 = vunpack.c.l.b16 %v253
      %v406 = vunpack.c.l.b16 %v254
      %v407 = vunpack.c.l.b16 %v255
      %v408 = vunpack.c.l.b16 %v256
      %v409 = vunpack.c.l.b16 %v257
      %v410 = vunpack.c.l.b16 %v258
      %v411 = vunpack.c.l.b16 %v259
      %v412 = vunpack.c.l.b16 %v260
      %v413 = vunpack.c.l.b16 %v261
      %v414 = vunpack.c.l.b16 %v262
      %v415 = vunpack.c.l.b16 %v263
      %v416 = vpack.c.b16 %v353, %v352
      %v417 = vpack.c.b16 %v355, %v354
      %v418 = vpack.c.b16 %v357, %v356
      %v419 = vpack.c.b16 %v359, %v358
      %v420 = vpack.c.b16 %v361, %v360
      %v421 = vpack.c.b16 %v363, %v362
      %v422 = vpack.c.b16 %v365, %v364
      %v423 = vpack.c.b16 %v367, %v366
      %v424 = vpack.c.b16 %v369, %v368
      %v425 = vpack.c.b16 %v371, %v370
      %v426 = vpack.c.b16 %v373, %v372
      %v427 = vpack.c.b16 %v375, %v374
      %v428 = vpack.c.b16 %v377, %v376
      %v429 = vpack.c.b16 %v379, %v378
      %v430 = vpack.c.b16 %v381, %v380
      %v431 = vpack.c.b16 %v383, %v382
      %v432 = vpack.c.b16 %v385, %v384
      %v433 = vpack.c.b16 %v387, %v386
      %v434 = vpack.c.b16 %v389, %v388
      %v435 = vpack.c.b16 %v391, %v390
      %v436 = vpack.c.b16 %v393, %v392
      %v437 = vpack.c.b16 %v395, %v394
      %v438 = vpack.c.b16 %v397, %v396
      %v439 = vpack.c.b16 %v399, %v398
      %v440 = vpack.c.b16 %v401, %v400
      %v441 = vpack.c.b16 %v403, %v402
      %v442 = vpack.c.b16 %v405, %v404
      %v443 = vpack.c.b16 %v407, %v406
      %v444 = vpack.c.b16 %v409, %v408
      %v445 = vpack.c.b16 %v411, %v410
      %v446 = vpack.c.b16 %v413, %v412
      %v447 = vpack.c.b16 %v415, %v414
      %v496 = vunpack.c.l.b16 %v272
      %v497 = vunpack.c.l.b16 %v273
      %v498 = vunpack.c.l.b16 %v274
      %v499 = vunpack.c.l.b16 %v275
      %v500 = vunpack.c.l.b16 %v276
      %v501 = vunpack.c.l.b16 %v277
      %v502 = vunpack.c.l.b16 %v278
      %v503 = vunpack.c.l.b16 %v279
      %v504 = vunpack.c.l.b16 %v280
      %v505 = vunpack.c.l.b16 %v281
      %v506 = vunpack.c.l.b16 %v282
      %v507 = vunpack.c.l.b16 %v283
      %v508 = vunpack.c.l.b16 %v284
      %v509 = vunpack.c.l.b16 %v285
      %v510 = vunpack.c.l.b16 %v286
      %v511 = vunpack.c.l.b16 %v287
      %v512 = vpack.c.b16 %v497, %v496
      %v513 = vpack.c.b16 %v499, %v498
      %v514 = vpack.c.b16 %v501, %v500
      %v515 = vpack.c.b16 %v503, %v502
      %v516 = vpack.c.b16 %v505, %v504
      %v517 = vpack.c.b16 %v507, %v506
      %v518 = vpack.c.b16 %v509, %v508
      %v519 = vpack.c.b16 %v511, %v510
      %528 = vmatprep.subr.bf16.mxu0 0
      %529 = vmatpush1.bf16.msra.mxu0 %v512
      %530 = vmatprep.subr.bf16.mxu0 0
      %531 = vmatpush1.bf16.msra.mxu0 %v513
      %532 = vmatprep.subr.bf16.mxu0 0
      %533 = vmatpush1.bf16.msra.mxu0 %v514
      %534 = vmatprep.subr.bf16.mxu0 0
      %535 = vmatpush1.bf16.msra.mxu0 %v515
      %536 = vmatprep.subr.bf16.mxu0 0
      %537 = vmatpush1.bf16.msra.mxu0 %v516
      %538 = vmatprep.subr.bf16.mxu0 0
      %539 = vmatpush1.bf16.msra.mxu0 %v517
      %540 = vmatprep.subr.bf16.mxu0 0
      %541 = vmatpush1.bf16.msra.mxu0 %v518
      %542 = vmatprep.subr.bf16.mxu0 0
      %543 = vmatpush1.bf16.msra.mxu0 %v519
      %544 = vmatprep.subr.bf16.mxu0 0
      %545 = vmatpush1.bf16.msra.mxu0 0
      %546 = vmatprep.subr.bf16.mxu0 0
      %547 = vmatpush1.bf16.msra.mxu0 0
      %548 = vmatprep.subr.bf16.mxu0 0
      %549 = vmatpush1.bf16.msra.mxu0 0
      %550 = vmatprep.subr.bf16.mxu0 0
      %551 = vmatpush1.bf16.msra.mxu0 0
      %552 = vmatprep.subr.bf16.mxu0 0
      %553 = vmatpush1.bf16.msra.mxu0 0
      %554 = vmatprep.subr.bf16.mxu0 0
      %555 = vmatpush1.bf16.msra.mxu0 0
      %556 = vmatprep.subr.bf16.mxu0 0
      %557 = vmatpush1.bf16.msra.mxu0 0
      %558 = vmatprep.subr.bf16.mxu0 0
      %559 = vmatpush1.bf16.msra.mxu0 0
      %560 = vmatprep.mubr.bf16.mxu0 0
      %561 = vmatmul.mubr.bf16.gmra.mrb[0].mxu0 %v416
      %v562 = vpop.f32.mrb[0].mxu0
      %v563 = vadd.f32 0.0, %v562
      %v564 = vpop.f32.mrb[0].mxu0
      %v565 = vpop.f32.mrb[0].mxu0
      %v566 = vadd.f32 0.0, %v565
      %v567 = vpop.f32.mrb[0].mxu0
      %568 = vmatprep.mubr.bf16.mxu0 0
      %569 = vmatmul.mubr.bf16.gmra.mrb[0].mxu0 %v417
      %v570 = vpop.f32.mrb[0].mxu0
      %v571 = vpop.f32.mrb[0].mxu0
      %v572 = vpop.f32.mrb[0].mxu0
      %v573 = vpop.f32.mrb[0].mxu0
      %574 = vmatprep.mubr.bf16.mxu0 0
      %575 = vmatmul.mubr.bf16.gmra.mrb[0].mxu0 %v418
      %v576 = vpop.f32.mrb[0].mxu0
      %v577 = vadd.f32 0.0, %v576
      %v578 = vpop.f32.mrb[0].mxu0
      %v579 = vpop.f32.mrb[0].mxu0
      %v580 = vadd.f32 0.0, %v579
      %v581 = vpop.f32.mrb[0].mxu0
      %582 = vmatprep.mubr.bf16.mxu0 0
      %583 = vmatmul.mubr.bf16.gmra.mrb[0].mxu0 %v419
      %v584 = vpop.f32.mrb[0].mxu0
      %v585 = vpop.f32.mrb[0].mxu0
      %v586 = vpop.f32.mrb[0].mxu0
      %v587 = vpop.f32.mrb[0].mxu0
      %588 = vmatprep.mubr.bf16.mxu0 0
      %589 = vmatmul.mubr.bf16.gmra.mrb[0].mxu0 %v420
      %v590 = vpop.f32.mrb[0].mxu0
      %v591 = vadd.f32 0.0, %v590
      %v592 = vpop.f32.mrb[0].mxu0
      %v593 = vpop.f32.mrb[0].mxu0
      %v594 = vadd.f32 0.0, %v593
      %v595 = vpop.f32.mrb[0].mxu0
      %596 = vmatprep.mubr.bf16.mxu0 0
      %597 = vmatmul.mubr.bf16.gmra.mrb[0].mxu0 %v421
      %v598 = vpop.f32.mrb[0].mxu0
      %v599 = vpop.f32.mrb[0].mxu0
      %v600 = vpop.f32.mrb[0].mxu0
      %v601 = vpop.f32.mrb[0].mxu0
      %602 = vmatprep.mubr.bf16.mxu0 0
      %603 = vmatmul.mubr.bf16.gmra.mrb[0].mxu0 %v422
      %v604 = vpop.f32.mrb[0].mxu0
      %v605 = vadd.f32 0.0, %v604
      %v606 = vpop.f32.mrb[0].mxu0
      %v607 = vpop.f32.mrb[0].mxu0
      %v608 = vadd.f32 0.0, %v607
      %v609 = vpop.f32.mrb[0].mxu0
      %610 = vmatprep.mubr.bf16.mxu0 0
      %611 = vmatmul.mubr.bf16.gmra.mrb[0].mxu0 %v423
      %v612 = vpop.f32.mrb[0].mxu0
      %v613 = vpop.f32.mrb[0].mxu0
      %v614 = vpop.f32.mrb[0].mxu0
      %v615 = vpop.f32.mrb[0].mxu0
      %616 = vmatprep.mubr.bf16.mxu0 0
      %617 = vmatmul.mubr.bf16.gmra.mrb[0].mxu0 %v424
      %v618 = vpop.f32.mrb[0].mxu0
      %v619 = vadd.f32 0.0, %v618
      %v620 = vpop.f32.mrb[0].mxu0
      %v621 = vpop.f32.mrb[0].mxu0
      %v622 = vadd.f32 0.0, %v621
      %v623 = vpop.f32.mrb[0].mxu0
      %624 = vmatprep.mubr.bf16.mxu0 0
      %625 = vmatmul.mubr.bf16.gmra.mrb[0].mxu0 %v425
      %v626 = vpop.f32.mrb[0].mxu0
      %v627 = vpop.f32.mrb[0].mxu0
      %v628 = vpop.f32.mrb[0].mxu0
      %v629 = vpop.f32.mrb[0].mxu0
      %630 = vmatprep.mubr.bf16.mxu0 0
      %631 = vmatmul.mubr.bf16.gmra.mrb[0].mxu0 %v426
      %v632 = vpop.f32.mrb[0].mxu0
      %v633 = vadd.f32 0.0, %v632
      %v634 = vpop.f32.mrb[0].mxu0
      %v635 = vpop.f32.mrb[0].mxu0
      %v636 = vadd.f32 0.0, %v635
      %v637 = vpop.f32.mrb[0].mxu0
      %638 = vmatprep.mubr.bf16.mxu0 0
      %639 = vmatmul.mubr.bf16.gmra.mrb[0].mxu0 %v427
      %v640 = vpop.f32.mrb[0].mxu0
      %v641 = vpop.f32.mrb[0].mxu0
      %v642 = vpop.f32.mrb[0].mxu0
      %v643 = vpop.f32.mrb[0].mxu0
      %644 = vmatprep.mubr.bf16.mxu0 0
      %645 = vmatmul.mubr.bf16.gmra.mrb[0].mxu0 %v428
      %v646 = vpop.f32.mrb[0].mxu0
      %v647 = vadd.f32 0.0, %v646
      %v648 = vpop.f32.mrb[0].mxu0
      %v649 = vpop.f32.mrb[0].mxu0
      %v650 = vadd.f32 0.0, %v649
      %v651 = vpop.f32.mrb[0].mxu0
      %652 = vmatprep.mubr.bf16.mxu0 0
      %653 = vmatmul.mubr.bf16.gmra.mrb[0].mxu0 %v429
      %v654 = vpop.f32.mrb[0].mxu0
      %v655 = vpop.f32.mrb[0].mxu0
      %v656 = vpop.f32.mrb[0].mxu0
      %v657 = vpop.f32.mrb[0].mxu0
      %658 = vmatprep.mubr.bf16.mxu0 0
      %659 = vmatmul.mubr.bf16.gmra.mrb[0].mxu0 %v430
      %v660 = vpop.f32.mrb[0].mxu0
      %v661 = vadd.f32 0.0, %v660
      %v662 = vpop.f32.mrb[0].mxu0
      %v663 = vpop.f32.mrb[0].mxu0
      %v664 = vadd.f32 0.0, %v663
      %v665 = vpop.f32.mrb[0].mxu0
      %666 = vmatprep.mubr.bf16.mxu0 0
      %667 = vmatmul.mubr.bf16.gmra.mrb[0].mxu0 %v431
      %v668 = vpop.f32.mrb[0].mxu0
      %v669 = vpop.f32.mrb[0].mxu0
      %v670 = vpop.f32.mrb[0].mxu0
      %v671 = vpop.f32.mrb[0].mxu0
      %672 = vmatprep.mubr.bf16.mxu0 0
      %673 = vmatmul.mubr.bf16.gmra.mrb[0].mxu0 %v432
      %v674 = vpop.f32.mrb[0].mxu0
      %v675 = vadd.f32 0.0, %v674
      %v676 = vpop.f32.mrb[0].mxu0
      %v677 = vpop.f32.mrb[0].mxu0
      %v678 = vadd.f32 0.0, %v677
      %v679 = vpop.f32.mrb[0].mxu0
      %680 = vmatprep.mubr.bf16.mxu0 0
      %681 = vmatmul.mubr.bf16.gmra.mrb[0].mxu0 %v433
      %v682 = vpop.f32.mrb[0].mxu0
      %v683 = vpop.f32.mrb[0].mxu0
      %v684 = vpop.f32.mrb[0].mxu0
      %v685 = vpop.f32.mrb[0].mxu0
      %686 = vmatprep.mubr.bf16.mxu0 0
      %687 = vmatmul.mubr.bf16.gmra.mrb[0].mxu0 %v434
      %v688 = vpop.f32.mrb[0].mxu0
      %v689 = vadd.f32 0.0, %v688
      %v690 = vpop.f32.mrb[0].mxu0
      %v691 = vpop.f32.mrb[0].mxu0
      %v692 = vadd.f32 0.0, %v691
      %v693 = vpop.f32.mrb[0].mxu0
      %694 = vmatprep.mubr.bf16.mxu0 0
      %695 = vmatmul.mubr.bf16.gmra.mrb[0].mxu0 %v435
      %v696 = vpop.f32.mrb[0].mxu0
      %v697 = vpop.f32.mrb[0].mxu0
      %v698 = vpop.f32.mrb[0].mxu0
      %v699 = vpop.f32.mrb[0].mxu0
      %700 = vmatprep.mubr.bf16.mxu0 0
      %701 = vmatmul.mubr.bf16.gmra.mrb[0].mxu0 %v436
      %v702 = vpop.f32.mrb[0].mxu0
      %v703 = vadd.f32 0.0, %v702
      %v704 = vpop.f32.mrb[0].mxu0
      %v705 = vpop.f32.mrb[0].mxu0
      %v706 = vadd.f32 0.0, %v705
      %v707 = vpop.f32.mrb[0].mxu0
      %708 = vmatprep.mubr.bf16.mxu0 0
      %709 = vmatmul.mubr.bf16.gmra.mrb[0].mxu0 %v437
      %v710 = vpop.f32.mrb[0].mxu0
      %v711 = vpop.f32.mrb[0].mxu0
      %v712 = vpop.f32.mrb[0].mxu0
      %v713 = vpop.f32.mrb[0].mxu0
      %714 = vmatprep.mubr.bf16.mxu0 0
      %715 = vmatmul.mubr.bf16.gmra.mrb[0].mxu0 %v438
      %v716 = vpop.f32.mrb[0].mxu0
      %v717 = vadd.f32 0.0, %v716
      %v718 = vpop.f32.mrb[0].mxu0
      %v719 = vpop.f32.mrb[0].mxu0
      %v720 = vadd.f32 0.0, %v719
      %v721 = vpop.f32.mrb[0].mxu0
      %722 = vmatprep.mubr.bf16.mxu0 0
      %723 = vmatmul.mubr.bf16.gmra.mrb[0].mxu0 %v439
      %v724 = vpop.f32.mrb[0].mxu0
      %v725 = vpop.f32.mrb[0].mxu0
      %v726 = vpop.f32.mrb[0].mxu0
      %v727 = vpop.f32.mrb[0].mxu0
      %728 = vmatprep.mubr.bf16.mxu0 0
      %729 = vmatmul.mubr.bf16.gmra.mrb[0].mxu0 %v440
      %v730 = vpop.f32.mrb[0].mxu0
      %v731 = vadd.f32 0.0, %v730
      %v732 = vpop.f32.mrb[0].mxu0
      %v733 = vpop.f32.mrb[0].mxu0
      %v734 = vadd.f32 0.0, %v733
      %v735 = vpop.f32.mrb[0].mxu0
      %736 = vmatprep.mubr.bf16.mxu0 0
      %737 = vmatmul.mubr.bf16.gmra.mrb[0].mxu0 %v441
      %v738 = vpop.f32.mrb[0].mxu0
      %v739 = vpop.f32.mrb[0].mxu0
      %v740 = vpop.f32.mrb[0].mxu0
      %v741 = vpop.f32.mrb[0].mxu0
      %742 = vmatprep.mubr.bf16.mxu0 0
      %743 = vmatmul.mubr.bf16.gmra.mrb[0].mxu0 %v442
      %v744 = vpop.f32.mrb[0].mxu0
      %v745 = vadd.f32 0.0, %v744
      %v746 = vpop.f32.mrb[0].mxu0
      %v747 = vpop.f32.mrb[0].mxu0
      %v748 = vadd.f32 0.0, %v747
      %v749 = vpop.f32.mrb[0].mxu0
      %750 = vmatprep.mubr.bf16.mxu0 0
      %751 = vmatmul.mubr.bf16.gmra.mrb[0].mxu0 %v443
      %v752 = vpop.f32.mrb[0].mxu0
      %v753 = vpop.f32.mrb[0].mxu0
      %v754 = vpop.f32.mrb[0].mxu0
      %v755 = vpop.f32.mrb[0].mxu0
      %756 = vmatprep.mubr.bf16.mxu0 0
      %757 = vmatmul.mubr.bf16.gmra.mrb[0].mxu0 %v444
      %v758 = vpop.f32.mrb[0].mxu0
      %v759 = vadd.f32 0.0, %v758
      %v760 = vpop.f32.mrb[0].mxu0
      %v761 = vpop.f32.mrb[0].mxu0
      %v762 = vadd.f32 0.0, %v761
      %v763 = vpop.f32.mrb[0].mxu0
      %764 = vmatprep.mubr.bf16.mxu0 0
      %765 = vmatmul.mubr.bf16.gmra.mrb[0].mxu0 %v445
      %v766 = vpop.f32.mrb[0].mxu0
      %v767 = vpop.f32.mrb[0].mxu0
      %v768 = vpop.f32.mrb[0].mxu0
      %v769 = vpop.f32.mrb[0].mxu0
      %770 = vmatprep.mubr.bf16.mxu0 0
      %771 = vmatmul.mubr.bf16.gmra.mrb[0].mxu0 %v446
      %v772 = vpop.f32.mrb[0].mxu0
      %v773 = vadd.f32 0.0, %v772
      %v774 = vpop.f32.mrb[0].mxu0
      %v775 = vpop.f32.mrb[0].mxu0
      %v776 = vadd.f32 0.0, %v775
      %v777 = vpop.f32.mrb[0].mxu0
      %778 = vmatprep.mubr.bf16.mxu0 0
      %779 = vmatmul.mubr.bf16.gmra.mrb[0].mxu0 %v447
      %v780 = vpop.f32.mrb[0].mxu0
      %v781 = vpop.f32.mrb[0].mxu0
      %v782 = vpop.f32.mrb[0].mxu0
      %v783 = vpop.f32.mrb[0].mxu0
      %784 = vdwg.mxu0
      %v785 = vadd.f32 %v563, 0.0
      %v786 = vadd.f32 %v566, 0.0
      %v787 = vadd.f32 %v577, 0.0
      %v788 = vadd.f32 %v580, 0.0
      %v789 = vadd.f32 %v591, 0.0
      %v790 = vadd.f32 %v594, 0.0
      %v791 = vadd.f32 %v605, 0.0
      %v792 = vadd.f32 %v608, 0.0
      %v793 = vadd.f32 %v619, 0.0
      %v794 = vadd.f32 %v622, 0.0
      %v795 = vadd.f32 %v633, 0.0
      %v796 = vadd.f32 %v636, 0.0
      %v797 = vadd.f32 %v647, 0.0
      %v798 = vadd.f32 %v650, 0.0
      %v799 = vadd.f32 %v661, 0.0
      %v800 = vadd.f32 %v664, 0.0
      %v801 = vadd.f32 %v675, 0.0
      %v802 = vadd.f32 %v678, 0.0
      %v803 = vadd.f32 %v689, 0.0
      %v804 = vadd.f32 %v692, 0.0
      %v805 = vadd.f32 %v703, 0.0
      %v806 = vadd.f32 %v706, 0.0
      %v807 = vadd.f32 %v717, 0.0
      %v808 = vadd.f32 %v720, 0.0
      %v809 = vadd.f32 %v731, 0.0
      %v810 = vadd.f32 %v734, 0.0
      %v811 = vadd.f32 %v745, 0.0
      %v812 = vadd.f32 %v748, 0.0
      %v813 = vadd.f32 %v759, 0.0
      %v814 = vadd.f32 %v762, 0.0
      %v815 = vadd.f32 %v773, 0.0
      %v816 = vadd.f32 %v776, 0.0
      %s817 = scalar_lea.vmem %s1, 64
      %v818 = vld [vmem:[%s817] sm:$0xf]
      %v819 = vld [vmem:[%s817 + $0x4] sm:$0xf]
      %v820 = vld [vmem:[%s817 + $0x8] sm:$0xf]
      %v821 = vld [vmem:[%s817 + $0xc] sm:$0xf]
      %v822 = vld [vmem:[%s817 + $0x10] sm:$0xf]
      %v823 = vld [vmem:[%s817 + $0x14] sm:$0xf]
      %v824 = vld [vmem:[%s817 + $0x18] sm:$0xf]
      %v825 = vld [vmem:[%s817 + $0x1c] sm:$0xf]
      %v826 = vld [vmem:[%s817 + $0x20] sm:$0xf]
      %v827 = vld [vmem:[%s817 + $0x24] sm:$0xf]
      %v828 = vld [vmem:[%s817 + $0x28] sm:$0xf]
      %v829 = vld [vmem:[%s817 + $0x2c] sm:$0xf]
      %v830 = vld [vmem:[%s817 + $0x30] sm:$0xf]
      %v831 = vld [vmem:[%s817 + $0x34] sm:$0xf]
      %v832 = vld [vmem:[%s817 + $0x38] sm:$0xf]
      %v833 = vld [vmem:[%s817 + $0x3c] sm:$0xf]
      %v850 = vunpack.c.l.b16 %v818
      %v851 = vunpack.c.l.b16 %v819
      %v852 = vunpack.c.l.b16 %v820
      %v853 = vunpack.c.l.b16 %v821
      %v854 = vunpack.c.l.b16 %v822
      %v855 = vunpack.c.l.b16 %v823
      %v856 = vunpack.c.l.b16 %v824
      %v857 = vunpack.c.l.b16 %v825
      %v858 = vunpack.c.l.b16 %v826
      %v859 = vunpack.c.l.b16 %v827
      %v860 = vunpack.c.l.b16 %v828
      %v861 = vunpack.c.l.b16 %v829
      %v862 = vunpack.c.l.b16 %v830
      %v863 = vunpack.c.l.b16 %v831
      %v864 = vunpack.c.l.b16 %v832
      %v865 = vunpack.c.l.b16 %v833
      %v866 = vpack.c.b16 %v851, %v850
      %v867 = vpack.c.b16 %v853, %v852
      %v868 = vpack.c.b16 %v855, %v854
      %v869 = vpack.c.b16 %v857, %v856
      %v870 = vpack.c.b16 %v859, %v858
      %v871 = vpack.c.b16 %v861, %v860
      %v872 = vpack.c.b16 %v863, %v862
      %v873 = vpack.c.b16 %v865, %v864
      %882 = vmatprep.subr.bf16.mxu0 0
      %883 = vmatpush1.bf16.msra.mxu0 %v866
      %884 = vmatprep.subr.bf16.mxu0 0
      %885 = vmatpush1.bf16.msra.mxu0 %v867
      %886 = vmatprep.subr.bf16.mxu0 0
      %887 = vmatpush1.bf16.msra.mxu0 %v868
      %888 = vmatprep.subr.bf16.mxu0 0
      %889 = vmatpush1.bf16.msra.mxu0 %v869
      %890 = vmatprep.subr.bf16.mxu0 0
      %891 = vmatpush1.bf16.msra.mxu0 %v870
      %892 = vmatprep.subr.bf16.mxu0 0
      %893 = vmatpush1.bf16.msra.mxu0 %v871
      %894 = vmatprep.subr.bf16.mxu0 0
      %895 = vmatpush1.bf16.msra.mxu0 %v872
      %896 = vmatprep.subr.bf16.mxu0 0
      %897 = vmatpush1.bf16.msra.mxu0 %v873
      %898 = vmatprep.subr.bf16.mxu0 0
      %899 = vmatpush1.bf16.msra.mxu0 0
      %900 = vmatprep.subr.bf16.mxu0 0
      %901 = vmatpush1.bf16.msra.mxu0 0
      %902 = vmatprep.subr.bf16.mxu0 0
      %903 = vmatpush1.bf16.msra.mxu0 0
      %904 = vmatprep.subr.bf16.mxu0 0
      %905 = vmatpush1.bf16.msra.mxu0 0
      %906 = vmatprep.subr.bf16.mxu0 0
      %907 = vmatpush1.bf16.msra.mxu0 0
      %908 = vmatprep.subr.bf16.mxu0 0
      %909 = vmatpush1.bf16.msra.mxu0 0
      %910 = vmatprep.subr.bf16.mxu0 0
      %911 = vmatpush1.bf16.msra.mxu0 0
      %912 = vmatprep.subr.bf16.mxu0 0
      %913 = vmatpush1.bf16.msra.mxu0 0
      %914 = vmatprep.mubr.bf16.mxu0 0
      %915 = vmatmul.mubr.bf16.gmra.mrb[0].mxu0 %v416
      %v916 = vpop.f32.mrb[0].mxu0
      %v917 = vadd.f32 0.0, %v916
      %v918 = vpop.f32.mrb[0].mxu0
      %v919 = vpop.f32.mrb[0].mxu0
      %v920 = vadd.f32 0.0, %v919
      %v921 = vpop.f32.mrb[0].mxu0
      %922 = vmatprep.mubr.bf16.mxu0 0
      %923 = vmatmul.mubr.bf16.gmra.mrb[0].mxu0 %v417
      %v924 = vpop.f32.mrb[0].mxu0
      %v925 = vadd.f32 0.0, %v924
      %v926 = vpop.f32.mrb[0].mxu0
      %v927 = vpop.f32.mrb[0].mxu0
      %v928 = vpop.f32.mrb[0].mxu0
      %929 = vmatprep.mubr.bf16.mxu0 0
      %930 = vmatmul.mubr.bf16.gmra.mrb[0].mxu0 %v418
      %v931 = vpop.f32.mrb[0].mxu0
      %v932 = vadd.f32 0.0, %v931
      %v933 = vpop.f32.mrb[0].mxu0
      %v934 = vpop.f32.mrb[0].mxu0
      %v935 = vadd.f32 0.0, %v934
      %v936 = vpop.f32.mrb[0].mxu0
      %937 = vmatprep.mubr.bf16.mxu0 0
      %938 = vmatmul.mubr.bf16.gmra.mrb[0].mxu0 %v419
      %v939 = vpop.f32.mrb[0].mxu0
      %v940 = vadd.f32 0.0, %v939
      %v941 = vpop.f32.mrb[0].mxu0
      %v942 = vpop.f32.mrb[0].mxu0
      %v943 = vpop.f32.mrb[0].mxu0
      %944 = vmatprep.mubr.bf16.mxu0 0
      %945 = vmatmul.mubr.bf16.gmra.mrb[0].mxu0 %v420
      %v946 = vpop.f32.mrb[0].mxu0
      %v947 = vadd.f32 0.0, %v946
      %v948 = vpop.f32.mrb[0].mxu0
      %v949 = vpop.f32.mrb[0].mxu0
      %v950 = vadd.f32 0.0, %v949
      %v951 = vpop.f32.mrb[0].mxu0
      %952 = vmatprep.mubr.bf16.mxu0 0
      %953 = vmatmul.mubr.bf16.gmra.mrb[0].mxu0 %v421
      %v954 = vpop.f32.mrb[0].mxu0
      %v955 = vadd.f32 0.0, %v954
      %v956 = vpop.f32.mrb[0].mxu0
      %v957 = vpop.f32.mrb[0].mxu0
      %v958 = vpop.f32.mrb[0].mxu0
      %959 = vmatprep.mubr.bf16.mxu0 0
      %960 = vmatmul.mubr.bf16.gmra.mrb[0].mxu0 %v422
      %v961 = vpop.f32.mrb[0].mxu0
      %v962 = vadd.f32 0.0, %v961
      %v963 = vpop.f32.mrb[0].mxu0
      %v964 = vpop.f32.mrb[0].mxu0
      %v965 = vadd.f32 0.0, %v964
      %v966 = vpop.f32.mrb[0].mxu0
      %967 = vmatprep.mubr.bf16.mxu0 0
      %968 = vmatmul.mubr.bf16.gmra.mrb[0].mxu0 %v423
      %v969 = vpop.f32.mrb[0].mxu0
      %v970 = vadd.f32 0.0, %v969
      %v971 = vpop.f32.mrb[0].mxu0
      %v972 = vpop.f32.mrb[0].mxu0
      %v973 = vpop.f32.mrb[0].mxu0
      %974 = vmatprep.mubr.bf16.mxu0 0
      %975 = vmatmul.mubr.bf16.gmra.mrb[0].mxu0 %v424
      %v976 = vpop.f32.mrb[0].mxu0
      %v977 = vadd.f32 0.0, %v976
      %v978 = vpop.f32.mrb[0].mxu0
      %v979 = vpop.f32.mrb[0].mxu0
      %v980 = vadd.f32 0.0, %v979
      %v981 = vpop.f32.mrb[0].mxu0
      %982 = vmatprep.mubr.bf16.mxu0 0
      %983 = vmatmul.mubr.bf16.gmra.mrb[0].mxu0 %v425
      %v984 = vpop.f32.mrb[0].mxu0
      %v985 = vadd.f32 0.0, %v984
      %v986 = vpop.f32.mrb[0].mxu0
      %v987 = vpop.f32.mrb[0].mxu0
      %v988 = vpop.f32.mrb[0].mxu0
      %989 = vmatprep.mubr.bf16.mxu0 0
      %990 = vmatmul.mubr.bf16.gmra.mrb[0].mxu0 %v426
      %v991 = vpop.f32.mrb[0].mxu0
      %v992 = vadd.f32 0.0, %v991
      %v993 = vpop.f32.mrb[0].mxu0
      %v994 = vpop.f32.mrb[0].mxu0
      %v995 = vadd.f32 0.0, %v994
      %v996 = vpop.f32.mrb[0].mxu0
      %997 = vmatprep.mubr.bf16.mxu0 0
      %998 = vmatmul.mubr.bf16.gmra.mrb[0].mxu0 %v427
      %v999 = vpop.f32.mrb[0].mxu0
      %v1000 = vadd.f32 0.0, %v999
      %v1001 = vpop.f32.mrb[0].mxu0
      %v1002 = vpop.f32.mrb[0].mxu0
      %v1003 = vpop.f32.mrb[0].mxu0
      %1004 = vmatprep.mubr.bf16.mxu0 0
      %1005 = vmatmul.mubr.bf16.gmra.mrb[0].mxu0 %v428
      %v1006 = vpop.f32.mrb[0].mxu0
      %v1007 = vadd.f32 0.0, %v1006
      %v1008 = vpop.f32.mrb[0].mxu0
      %v1009 = vpop.f32.mrb[0].mxu0
      %v1010 = vadd.f32 0.0, %v1009
      %v1011 = vpop.f32.mrb[0].mxu0
      %1012 = vmatprep.mubr.bf16.mxu0 0
      %1013 = vmatmul.mubr.bf16.gmra.mrb[0].mxu0 %v429
      %v1014 = vpop.f32.mrb[0].mxu0
      %v1015 = vadd.f32 0.0, %v1014
      %v1016 = vpop.f32.mrb[0].mxu0
      %v1017 = vpop.f32.mrb[0].mxu0
      %v1018 = vpop.f32.mrb[0].mxu0
      %1019 = vmatprep.mubr.bf16.mxu0 0
      %1020 = vmatmul.mubr.bf16.gmra.mrb[0].mxu0 %v430
      %v1021 = vpop.f32.mrb[0].mxu0
      %v1022 = vadd.f32 0.0, %v1021
      %v1023 = vpop.f32.mrb[0].mxu0
      %v1024 = vpop.f32.mrb[0].mxu0
      %v1025 = vadd.f32 0.0, %v1024
      %v1026 = vpop.f32.mrb[0].mxu0
      %1027 = vmatprep.mubr.bf16.mxu0 0
      %1028 = vmatmul.mubr.bf16.gmra.mrb[0].mxu0 %v431
      %v1029 = vpop.f32.mrb[0].mxu0
      %v1030 = vadd.f32 0.0, %v1029
      %v1031 = vpop.f32.mrb[0].mxu0
      %v1032 = vpop.f32.mrb[0].mxu0
      %v1033 = vpop.f32.mrb[0].mxu0
      %1034 = vmatprep.mubr.bf16.mxu0 0
      %1035 = vmatmul.mubr.bf16.gmra.mrb[0].mxu0 %v432
      %v1036 = vpop.f32.mrb[0].mxu0
      %v1037 = vadd.f32 0.0, %v1036
      %v1038 = vpop.f32.mrb[0].mxu0
      %v1039 = vpop.f32.mrb[0].mxu0
      %v1040 = vadd.f32 0.0, %v1039
      %v1041 = vpop.f32.mrb[0].mxu0
      %1042 = vmatprep.mubr.bf16.mxu0 0
      %1043 = vmatmul.mubr.bf16.gmra.mrb[0].mxu0 %v433
      %v1044 = vpop.f32.mrb[0].mxu0
      %v1045 = vadd.f32 0.0, %v1044
      %v1046 = vpop.f32.mrb[0].mxu0
      %v1047 = vpop.f32.mrb[0].mxu0
      %v1048 = vpop.f32.mrb[0].mxu0
      %1049 = vmatprep.mubr.bf16.mxu0 0
      %1050 = vmatmul.mubr.bf16.gmra.mrb[0].mxu0 %v434
      %v1051 = vpop.f32.mrb[0].mxu0
      %v1052 = vadd.f32 0.0, %v1051
      %v1053 = vpop.f32.mrb[0].mxu0
      %v1054 = vpop.f32.mrb[0].mxu0
      %v1055 = vadd.f32 0.0, %v1054
      %v1056 = vpop.f32.mrb[0].mxu0
      %1057 = vmatprep.mubr.bf16.mxu0 0
      %1058 = vmatmul.mubr.bf16.gmra.mrb[0].mxu0 %v435
      %v1059 = vpop.f32.mrb[0].mxu0
      %v1060 = vadd.f32 0.0, %v1059
      %v1061 = vpop.f32.mrb[0].mxu0
      %v1062 = vpop.f32.mrb[0].mxu0
      %v1063 = vpop.f32.mrb[0].mxu0
      %1064 = vmatprep.mubr.bf16.mxu0 0
      %1065 = vmatmul.mubr.bf16.gmra.mrb[0].mxu0 %v436
      %v1066 = vpop.f32.mrb[0].mxu0
      %v1067 = vadd.f32 0.0, %v1066
      %v1068 = vpop.f32.mrb[0].mxu0
      %v1069 = vpop.f32.mrb[0].mxu0
      %v1070 = vadd.f32 0.0, %v1069
      %v1071 = vpop.f32.mrb[0].mxu0
      %1072 = vmatprep.mubr.bf16.mxu0 0
      %1073 = vmatmul.mubr.bf16.gmra.mrb[0].mxu0 %v437
      %v1074 = vpop.f32.mrb[0].mxu0
      %v1075 = vadd.f32 0.0, %v1074
      %v1076 = vpop.f32.mrb[0].mxu0
      %v1077 = vpop.f32.mrb[0].mxu0
      %v1078 = vpop.f32.mrb[0].mxu0
      %1079 = vmatprep.mubr.bf16.mxu0 0
      %1080 = vmatmul.mubr.bf16.gmra.mrb[0].mxu0 %v438
      %v1081 = vpop.f32.mrb[0].mxu0
      %v1082 = vadd.f32 0.0, %v1081
      %v1083 = vpop.f32.mrb[0].mxu0
      %v1084 = vpop.f32.mrb[0].mxu0
      %v1085 = vadd.f32 0.0, %v1084
      %v1086 = vpop.f32.mrb[0].mxu0
      %1087 = vmatprep.mubr.bf16.mxu0 0
      %1088 = vmatmul.mubr.bf16.gmra.mrb[0].mxu0 %v439
      %v1089 = vpop.f32.mrb[0].mxu0
      %v1090 = vadd.f32 0.0, %v1089
      %v1091 = vpop.f32.mrb[0].mxu0
      %v1092 = vpop.f32.mrb[0].mxu0
      %v1093 = vpop.f32.mrb[0].mxu0
      %1094 = vmatprep.mubr.bf16.mxu0 0
      %1095 = vmatmul.mubr.bf16.gmra.mrb[0].mxu0 %v440
      %v1096 = vpop.f32.mrb[0].mxu0
      %v1097 = vadd.f32 0.0, %v1096
      %v1098 = vpop.f32.mrb[0].mxu0
      %v1099 = vpop.f32.mrb[0].mxu0
      %v1100 = vadd.f32 0.0, %v1099
      %v1101 = vpop.f32.mrb[0].mxu0
      %1102 = vmatprep.mubr.bf16.mxu0 0
      %1103 = vmatmul.mubr.bf16.gmra.mrb[0].mxu0 %v441
      %v1104 = vpop.f32.mrb[0].mxu0
      %v1105 = vadd.f32 0.0, %v1104
      %v1106 = vpop.f32.mrb[0].mxu0
      %v1107 = vpop.f32.mrb[0].mxu0
      %v1108 = vpop.f32.mrb[0].mxu0
      %1109 = vmatprep.mubr.bf16.mxu0 0
      %1110 = vmatmul.mubr.bf16.gmra.mrb[0].mxu0 %v442
      %v1111 = vpop.f32.mrb[0].mxu0
      %v1112 = vadd.f32 0.0, %v1111
      %v1113 = vpop.f32.mrb[0].mxu0
      %v1114 = vpop.f32.mrb[0].mxu0
      %v1115 = vadd.f32 0.0, %v1114
      %v1116 = vpop.f32.mrb[0].mxu0
      %1117 = vmatprep.mubr.bf16.mxu0 0
      %1118 = vmatmul.mubr.bf16.gmra.mrb[0].mxu0 %v443
      %v1119 = vpop.f32.mrb[0].mxu0
      %v1120 = vadd.f32 0.0, %v1119
      %v1121 = vpop.f32.mrb[0].mxu0
      %v1122 = vpop.f32.mrb[0].mxu0
      %v1123 = vpop.f32.mrb[0].mxu0
      %1124 = vmatprep.mubr.bf16.mxu0 0
      %1125 = vmatmul.mubr.bf16.gmra.mrb[0].mxu0 %v444
      %v1126 = vpop.f32.mrb[0].mxu0
      %v1127 = vadd.f32 0.0, %v1126
      %v1128 = vpop.f32.mrb[0].mxu0
      %v1129 = vpop.f32.mrb[0].mxu0
      %v1130 = vadd.f32 0.0, %v1129
      %v1131 = vpop.f32.mrb[0].mxu0
      %1132 = vmatprep.mubr.bf16.mxu0 0
      %1133 = vmatmul.mubr.bf16.gmra.mrb[0].mxu0 %v445
      %v1134 = vpop.f32.mrb[0].mxu0
      %v1135 = vadd.f32 0.0, %v1134
      %v1136 = vpop.f32.mrb[0].mxu0
      %v1137 = vpop.f32.mrb[0].mxu0
      %v1138 = vpop.f32.mrb[0].mxu0
      %1139 = vmatprep.mubr.bf16.mxu0 0
      %1140 = vmatmul.mubr.bf16.gmra.mrb[0].mxu0 %v446
      %v1141 = vpop.f32.mrb[0].mxu0
      %v1142 = vadd.f32 0.0, %v1141
      %v1143 = vpop.f32.mrb[0].mxu0
      %v1144 = vpop.f32.mrb[0].mxu0
      %v1145 = vadd.f32 0.0, %v1144
      %v1146 = vpop.f32.mrb[0].mxu0
      %1147 = vmatprep.mubr.bf16.mxu0 0
      %1148 = vmatmul.mubr.bf16.gmra.mrb[0].mxu0 %v447
      %v1149 = vpop.f32.mrb[0].mxu0
      %v1150 = vadd.f32 0.0, %v1149
      %v1151 = vpop.f32.mrb[0].mxu0
      %v1152 = vpop.f32.mrb[0].mxu0
      %v1153 = vpop.f32.mrb[0].mxu0
      %1154 = vdwg.mxu0
      %vm1203 = vcmask 1046528
      %v1204 = vrot.slane %v917, 1
      %v1205 = vrot.slane %v920, 1
      %v1206 = vsel %vm1203, %v1204, %v1205
      %v1207 = vrot.slane %v925, 1
      %v1208 = vsel %vm1203, %v1205, %v1207
      %v1209 = vrot.slane %v932, 1
      %v1210 = vrot.slane %v935, 1
      %v1211 = vsel %vm1203, %v1209, %v1210
      %v1212 = vrot.slane %v940, 1
      %v1213 = vsel %vm1203, %v1210, %v1212
      %v1214 = vrot.slane %v947, 1
      %v1215 = vrot.slane %v950, 1
      %v1216 = vsel %vm1203, %v1214, %v1215
      %v1217 = vrot.slane %v955, 1
      %v1218 = vsel %vm1203, %v1215, %v1217
      %v1219 = vrot.slane %v962, 1
      %v1220 = vrot.slane %v965, 1
      %v1221 = vsel %vm1203, %v1219, %v1220
      %v1222 = vrot.slane %v970, 1
      %v1223 = vsel %vm1203, %v1220, %v1222
      %v1224 = vrot.slane %v977, 1
      %v1225 = vrot.slane %v980, 1
      %v1226 = vsel %vm1203, %v1224, %v1225
      %v1227 = vrot.slane %v985, 1
      %v1228 = vsel %vm1203, %v1225, %v1227
      %v1229 = vrot.slane %v992, 1
      %v1230 = vrot.slane %v995, 1
      %v1231 = vsel %vm1203, %v1229, %v1230
      %v1232 = vrot.slane %v1000, 1
      %v1233 = vsel %vm1203, %v1230, %v1232
      %v1234 = vrot.slane %v1007, 1
      %v1235 = vrot.slane %v1010, 1
      %v1236 = vsel %vm1203, %v1234, %v1235
      %v1237 = vrot.slane %v1015, 1
      %v1238 = vsel %vm1203, %v1235, %v1237
      %v1239 = vrot.slane %v1022, 1
      %v1240 = vrot.slane %v1025, 1
      %v1241 = vsel %vm1203, %v1239, %v1240
      %v1242 = vrot.slane %v1030, 1
      %v1243 = vsel %vm1203, %v1240, %v1242
      %v1244 = vrot.slane %v1037, 1
      %v1245 = vrot.slane %v1040, 1
      %v1246 = vsel %vm1203, %v1244, %v1245
      %v1247 = vrot.slane %v1045, 1
      %v1248 = vsel %vm1203, %v1245, %v1247
      %v1249 = vrot.slane %v1052, 1
      %v1250 = vrot.slane %v1055, 1
      %v1251 = vsel %vm1203, %v1249, %v1250
      %v1252 = vrot.slane %v1060, 1
      %v1253 = vsel %vm1203, %v1250, %v1252
      %v1254 = vrot.slane %v1067, 1
      %v1255 = vrot.slane %v1070, 1
      %v1256 = vsel %vm1203, %v1254, %v1255
      %v1257 = vrot.slane %v1075, 1
      %v1258 = vsel %vm1203, %v1255, %v1257
      %v1259 = vrot.slane %v1082, 1
      %v1260 = vrot.slane %v1085, 1
      %v1261 = vsel %vm1203, %v1259, %v1260
      %v1262 = vrot.slane %v1090, 1
      %v1263 = vsel %vm1203, %v1260, %v1262
      %v1264 = vrot.slane %v1097, 1
      %v1265 = vrot.slane %v1100, 1
      %v1266 = vsel %vm1203, %v1264, %v1265
      %v1267 = vrot.slane %v1105, 1
      %v1268 = vsel %vm1203, %v1265, %v1267
      %v1269 = vrot.slane %v1112, 1
      %v1270 = vrot.slane %v1115, 1
      %v1271 = vsel %vm1203, %v1269, %v1270
      %v1272 = vrot.slane %v1120, 1
      %v1273 = vsel %vm1203, %v1270, %v1272
      %v1274 = vrot.slane %v1127, 1
      %v1275 = vrot.slane %v1130, 1
      %v1276 = vsel %vm1203, %v1274, %v1275
      %v1277 = vrot.slane %v1135, 1
      %v1278 = vsel %vm1203, %v1275, %v1277
      %v1279 = vrot.slane %v1142, 1
      %v1280 = vrot.slane %v1145, 1
      %v1281 = vsel %vm1203, %v1279, %v1280
      %v1282 = vrot.slane %v1150, 1
      %v1283 = vsel %vm1203, %v1280, %v1282
      %v1316 = vadd.f32 %v785, %v1206
      %v1317 = vadd.f32 %v786, %v1208
      %v1318 = vadd.f32 %v787, %v1211
      %v1319 = vadd.f32 %v788, %v1213
      %v1320 = vadd.f32 %v789, %v1216
      %v1321 = vadd.f32 %v790, %v1218
      %v1322 = vadd.f32 %v791, %v1221
      %v1323 = vadd.f32 %v792, %v1223
      %v1324 = vadd.f32 %v793, %v1226
      %v1325 = vadd.f32 %v794, %v1228
      %v1326 = vadd.f32 %v795, %v1231
      %v1327 = vadd.f32 %v796, %v1233
      %v1328 = vadd.f32 %v797, %v1236
      %v1329 = vadd.f32 %v798, %v1238
      %v1330 = vadd.f32 %v799, %v1241
      %v1331 = vadd.f32 %v800, %v1243
      %v1332 = vadd.f32 %v801, %v1246
      %v1333 = vadd.f32 %v802, %v1248
      %v1334 = vadd.f32 %v803, %v1251
      %v1335 = vadd.f32 %v804, %v1253
      %v1336 = vadd.f32 %v805, %v1256
      %v1337 = vadd.f32 %v806, %v1258
      %v1338 = vadd.f32 %v807, %v1261
      %v1339 = vadd.f32 %v808, %v1263
      %v1340 = vadd.f32 %v809, %v1266
      %v1341 = vadd.f32 %v810, %v1268
      %v1342 = vadd.f32 %v811, %v1271
      %v1343 = vadd.f32 %v812, %v1273
      %v1344 = vadd.f32 %v813, %v1276
      %v1345 = vadd.f32 %v814, %v1278
      %v1346 = vadd.f32 %v815, %v1281
      %v1347 = vadd.f32 %v816, %v1283
      %s1348 = scalar_lea.vmem %s1, 128
      %v1349 = vld [vmem:[%s1348] sm:$0xf]
      %v1350 = vld [vmem:[%s1348 + $0x4] sm:$0xf]
      %v1351 = vld [vmem:[%s1348 + $0x8] sm:$0xf]
      %v1352 = vld [vmem:[%s1348 + $0xc] sm:$0xf]
      %v1353 = vld [vmem:[%s1348 + $0x10] sm:$0xf]
      %v1354 = vld [vmem:[%s1348 + $0x14] sm:$0xf]
      %v1355 = vld [vmem:[%s1348 + $0x18] sm:$0xf]
      %v1356 = vld [vmem:[%s1348 + $0x1c] sm:$0xf]
      %v1357 = vld [vmem:[%s1348 + $0x20] sm:$0xf]
      %v1358 = vld [vmem:[%s1348 + $0x24] sm:$0xf]
      %v1359 = vld [vmem:[%s1348 + $0x28] sm:$0xf]
      %v1360 = vld [vmem:[%s1348 + $0x2c] sm:$0xf]
      %v1361 = vld [vmem:[%s1348 + $0x30] sm:$0xf]
      %v1362 = vld [vmem:[%s1348 + $0x34] sm:$0xf]
      %v1363 = vld [vmem:[%s1348 + $0x38] sm:$0xf]
      %v1364 = vld [vmem:[%s1348 + $0x3c] sm:$0xf]
      %v1381 = vunpack.c.l.b16 %v1349
      %v1382 = vunpack.c.l.b16 %v1350
      %v1383 = vunpack.c.l.b16 %v1351
      %v1384 = vunpack.c.l.b16 %v1352
      %v1385 = vunpack.c.l.b16 %v1353
      %v1386 = vunpack.c.l.b16 %v1354
      %v1387 = vunpack.c.l.b16 %v1355
      %v1388 = vunpack.c.l.b16 %v1356
      %v1389 = vunpack.c.l.b16 %v1357
      %v1390 = vunpack.c.l.b16 %v1358
      %v1391 = vunpack.c.l.b16 %v1359
      %v1392 = vunpack.c.l.b16 %v1360
      %v1393 = vunpack.c.l.b16 %v1361
      %v1394 = vunpack.c.l.b16 %v1362
      %v1395 = vunpack.c.l.b16 %v1363
      %v1396 = vunpack.c.l.b16 %v1364
      %v1397 = vpack.c.b16 %v1382, %v1381
      %v1398 = vpack.c.b16 %v1384, %v1383
      %v1399 = vpack.c.b16 %v1386, %v1385
      %v1400 = vpack.c.b16 %v1388, %v1387
      %v1401 = vpack.c.b16 %v1390, %v1389
      %v1402 = vpack.c.b16 %v1392, %v1391
      %v1403 = vpack.c.b16 %v1394, %v1393
      %v1404 = vpack.c.b16 %v1396, %v1395
      %1413 = vmatprep.subr.bf16.mxu0 0
      %1414 = vmatpush1.bf16.msra.mxu0 %v1397
      %1415 = vmatprep.subr.bf16.mxu0 0
      %1416 = vmatpush1.bf16.msra.mxu0 %v1398
      %1417 = vmatprep.subr.bf16.mxu0 0
      %1418 = vmatpush1.bf16.msra.mxu0 %v1399
      %1419 = vmatprep.subr.bf16.mxu0 0
      %1420 = vmatpush1.bf16.msra.mxu0 %v1400
      %1421 = vmatprep.subr.bf16.mxu0 0
      %1422 = vmatpush1.bf16.msra.mxu0 %v1401
      %1423 = vmatprep.subr.bf16.mxu0 0
      %1424 = vmatpush1.bf16.msra.mxu0 %v1402
      %1425 = vmatprep.subr.bf16.mxu0 0
      %1426 = vmatpush1.bf16.msra.mxu0 %v1403
      %1427 = vmatprep.subr.bf16.mxu0 0
      %1428 = vmatpush1.bf16.msra.mxu0 %v1404
      %1429 = vmatprep.subr.bf16.mxu0 0
      %1430 = vmatpush1.bf16.msra.mxu0 0
      %1431 = vmatprep.subr.bf16.mxu0 0
      %1432 = vmatpush1.bf16.msra.mxu0 0
      %1433 = vmatprep.subr.bf16.mxu0 0
      %1434 = vmatpush1.bf16.msra.mxu0 0
      %1435 = vmatprep.subr.bf16.mxu0 0
      %1436 = vmatpush1.bf16.msra.mxu0 0
      %1437 = vmatprep.subr.bf16.mxu0 0
      %1438 = vmatpush1.bf16.msra.mxu0 0
      %1439 = vmatprep.subr.bf16.mxu0 0
      %1440 = vmatpush1.bf16.msra.mxu0 0
      %1441 = vmatprep.subr.bf16.mxu0 0
      %1442 = vmatpush1.bf16.msra.mxu0 0
      %1443 = vmatprep.subr.bf16.mxu0 0
      %1444 = vmatpush1.bf16.msra.mxu0 0
      %1445 = vmatprep.mubr.bf16.mxu0 0
      %1446 = vmatmul.mubr.bf16.gmra.mrb[0].mxu0 %v416
      %v1447 = vpop.f32.mrb[0].mxu0
      %v1448 = vadd.f32 0.0, %v1447
      %v1449 = vpop.f32.mrb[0].mxu0
      %v1450 = vpop.f32.mrb[0].mxu0
      %v1451 = vadd.f32 0.0, %v1450
      %v1452 = vpop.f32.mrb[0].mxu0
      %1453 = vmatprep.mubr.bf16.mxu0 0
      %1454 = vmatmul.mubr.bf16.gmra.mrb[0].mxu0 %v417
      %v1455 = vpop.f32.mrb[0].mxu0
      %v1456 = vadd.f32 0.0, %v1455
      %v1457 = vpop.f32.mrb[0].mxu0
      %v1458 = vpop.f32.mrb[0].mxu0
      %v1459 = vpop.f32.mrb[0].mxu0
      %1460 = vmatprep.mubr.bf16.mxu0 0
      %1461 = vmatmul.mubr.bf16.gmra.mrb[0].mxu0 %v418
      %v1462 = vpop.f32.mrb[0].mxu0
      %v1463 = vadd.f32 0.0, %v1462
      %v1464 = vpop.f32.mrb[0].mxu0
      %v1465 = vpop.f32.mrb[0].mxu0
      %v1466 = vadd.f32 0.0, %v1465
      %v1467 = vpop.f32.mrb[0].mxu0
      %1468 = vmatprep.mubr.bf16.mxu0 0
      %1469 = vmatmul.mubr.bf16.gmra.mrb[0].mxu0 %v419
      %v1470 = vpop.f32.mrb[0].mxu0
      %v1471 = vadd.f32 0.0, %v1470
      %v1472 = vpop.f32.mrb[0].mxu0
      %v1473 = vpop.f32.mrb[0].mxu0
      %v1474 = vpop.f32.mrb[0].mxu0
      %1475 = vmatprep.mubr.bf16.mxu0 0
      %1476 = vmatmul.mubr.bf16.gmra.mrb[0].mxu0 %v420
      %v1477 = vpop.f32.mrb[0].mxu0
      %v1478 = vadd.f32 0.0, %v1477
      %v1479 = vpop.f32.mrb[0].mxu0
      %v1480 = vpop.f32.mrb[0].mxu0
      %v1481 = vadd.f32 0.0, %v1480
      %v1482 = vpop.f32.mrb[0].mxu0
      %1483 = vmatprep.mubr.bf16.mxu0 0
      %1484 = vmatmul.mubr.bf16.gmra.mrb[0].mxu0 %v421
      %v1485 = vpop.f32.mrb[0].mxu0
      %v1486 = vadd.f32 0.0, %v1485
      %v1487 = vpop.f32.mrb[0].mxu0
      %v1488 = vpop.f32.mrb[0].mxu0
      %v1489 = vpop.f32.mrb[0].mxu0
      %1490 = vmatprep.mubr.bf16.mxu0 0
      %1491 = vmatmul.mubr.bf16.gmra.mrb[0].mxu0 %v422
      %v1492 = vpop.f32.mrb[0].mxu0
      %v1493 = vadd.f32 0.0, %v1492
      %v1494 = vpop.f32.mrb[0].mxu0
      %v1495 = vpop.f32.mrb[0].mxu0
      %v1496 = vadd.f32 0.0, %v1495
      %v1497 = vpop.f32.mrb[0].mxu0
      %1498 = vmatprep.mubr.bf16.mxu0 0
      %1499 = vmatmul.mubr.bf16.gmra.mrb[0].mxu0 %v423
      %v1500 = vpop.f32.mrb[0].mxu0
      %v1501 = vadd.f32 0.0, %v1500
      %v1502 = vpop.f32.mrb[0].mxu0
      %v1503 = vpop.f32.mrb[0].mxu0
      %v1504 = vpop.f32.mrb[0].mxu0
      %1505 = vmatprep.mubr.bf16.mxu0 0
      %1506 = vmatmul.mubr.bf16.gmra.mrb[0].mxu0 %v424
      %v1507 = vpop.f32.mrb[0].mxu0
      %v1508 = vadd.f32 0.0, %v1507
      %v1509 = vpop.f32.mrb[0].mxu0
      %v1510 = vpop.f32.mrb[0].mxu0
      %v1511 = vadd.f32 0.0, %v1510
      %v1512 = vpop.f32.mrb[0].mxu0
      %1513 = vmatprep.mubr.bf16.mxu0 0
      %1514 = vmatmul.mubr.bf16.gmra.mrb[0].mxu0 %v425
      %v1515 = vpop.f32.mrb[0].mxu0
      %v1516 = vadd.f32 0.0, %v1515
      %v1517 = vpop.f32.mrb[0].mxu0
      %v1518 = vpop.f32.mrb[0].mxu0
      %v1519 = vpop.f32.mrb[0].mxu0
      %1520 = vmatprep.mubr.bf16.mxu0 0
      %1521 = vmatmul.mubr.bf16.gmra.mrb[0].mxu0 %v426
      %v1522 = vpop.f32.mrb[0].mxu0
      %v1523 = vadd.f32 0.0, %v1522
      %v1524 = vpop.f32.mrb[0].mxu0
      %v1525 = vpop.f32.mrb[0].mxu0
      %v1526 = vadd.f32 0.0, %v1525
      %v1527 = vpop.f32.mrb[0].mxu0
      %1528 = vmatprep.mubr.bf16.mxu0 0
      %1529 = vmatmul.mubr.bf16.gmra.mrb[0].mxu0 %v427
      %v1530 = vpop.f32.mrb[0].mxu0
      %v1531 = vadd.f32 0.0, %v1530
      %v1532 = vpop.f32.mrb[0].mxu0
      %v1533 = vpop.f32.mrb[0].mxu0
      %v1534 = vpop.f32.mrb[0].mxu0
      %1535 = vmatprep.mubr.bf16.mxu0 0
      %1536 = vmatmul.mubr.bf16.gmra.mrb[0].mxu0 %v428
      %v1537 = vpop.f32.mrb[0].mxu0
      %v1538 = vadd.f32 0.0, %v1537
      %v1539 = vpop.f32.mrb[0].mxu0
      %v1540 = vpop.f32.mrb[0].mxu0
      %v1541 = vadd.f32 0.0, %v1540
      %v1542 = vpop.f32.mrb[0].mxu0
      %1543 = vmatprep.mubr.bf16.mxu0 0
      %1544 = vmatmul.mubr.bf16.gmra.mrb[0].mxu0 %v429
      %v1545 = vpop.f32.mrb[0].mxu0
      %v1546 = vadd.f32 0.0, %v1545
      %v1547 = vpop.f32.mrb[0].mxu0
      %v1548 = vpop.f32.mrb[0].mxu0
      %v1549 = vpop.f32.mrb[0].mxu0
      %1550 = vmatprep.mubr.bf16.mxu0 0
      %1551 = vmatmul.mubr.bf16.gmra.mrb[0].mxu0 %v430
      %v1552 = vpop.f32.mrb[0].mxu0
      %v1553 = vadd.f32 0.0, %v1552
      %v1554 = vpop.f32.mrb[0].mxu0
      %v1555 = vpop.f32.mrb[0].mxu0
      %v1556 = vadd.f32 0.0, %v1555
      %v1557 = vpop.f32.mrb[0].mxu0
      %1558 = vmatprep.mubr.bf16.mxu0 0
      %1559 = vmatmul.mubr.bf16.gmra.mrb[0].mxu0 %v431
      %v1560 = vpop.f32.mrb[0].mxu0
      %v1561 = vadd.f32 0.0, %v1560
      %v1562 = vpop.f32.mrb[0].mxu0
      %v1563 = vpop.f32.mrb[0].mxu0
      %v1564 = vpop.f32.mrb[0].mxu0
      %1565 = vmatprep.mubr.bf16.mxu0 0
      %1566 = vmatmul.mubr.bf16.gmra.mrb[0].mxu0 %v432
      %v1567 = vpop.f32.mrb[0].mxu0
      %v1568 = vadd.f32 0.0, %v1567
      %v1569 = vpop.f32.mrb[0].mxu0
      %v1570 = vpop.f32.mrb[0].mxu0
      %v1571 = vadd.f32 0.0, %v1570
      %v1572 = vpop.f32.mrb[0].mxu0
      %1573 = vmatprep.mubr.bf16.mxu0 0
      %1574 = vmatmul.mubr.bf16.gmra.mrb[0].mxu0 %v433
      %v1575 = vpop.f32.mrb[0].mxu0
      %v1576 = vadd.f32 0.0, %v1575
      %v1577 = vpop.f32.mrb[0].mxu0
      %v1578 = vpop.f32.mrb[0].mxu0
      %v1579 = vpop.f32.mrb[0].mxu0
      %1580 = vmatprep.mubr.bf16.mxu0 0
      %1581 = vmatmul.mubr.bf16.gmra.mrb[0].mxu0 %v434
      %v1582 = vpop.f32.mrb[0].mxu0
      %v1583 = vadd.f32 0.0, %v1582
      %v1584 = vpop.f32.mrb[0].mxu0
      %v1585 = vpop.f32.mrb[0].mxu0
      %v1586 = vadd.f32 0.0, %v1585
      %v1587 = vpop.f32.mrb[0].mxu0
      %1588 = vmatprep.mubr.bf16.mxu0 0
      %1589 = vmatmul.mubr.bf16.gmra.mrb[0].mxu0 %v435
      %v1590 = vpop.f32.mrb[0].mxu0
      %v1591 = vadd.f32 0.0, %v1590
      %v1592 = vpop.f32.mrb[0].mxu0
      %v1593 = vpop.f32.mrb[0].mxu0
      %v1594 = vpop.f32.mrb[0].mxu0
      %1595 = vmatprep.mubr.bf16.mxu0 0
      %1596 = vmatmul.mubr.bf16.gmra.mrb[0].mxu0 %v436
      %v1597 = vpop.f32.mrb[0].mxu0
      %v1598 = vadd.f32 0.0, %v1597
      %v1599 = vpop.f32.mrb[0].mxu0
      %v1600 = vpop.f32.mrb[0].mxu0
      %v1601 = vadd.f32 0.0, %v1600
      %v1602 = vpop.f32.mrb[0].mxu0
      %1603 = vmatprep.mubr.bf16.mxu0 0
      %1604 = vmatmul.mubr.bf16.gmra.mrb[0].mxu0 %v437
      %v1605 = vpop.f32.mrb[0].mxu0
      %v1606 = vadd.f32 0.0, %v1605
      %v1607 = vpop.f32.mrb[0].mxu0
      %v1608 = vpop.f32.mrb[0].mxu0
      %v1609 = vpop.f32.mrb[0].mxu0
      %1610 = vmatprep.mubr.bf16.mxu0 0
      %1611 = vmatmul.mubr.bf16.gmra.mrb[0].mxu0 %v438
      %v1612 = vpop.f32.mrb[0].mxu0
      %v1613 = vadd.f32 0.0, %v1612
      %v1614 = vpop.f32.mrb[0].mxu0
      %v1615 = vpop.f32.mrb[0].mxu0
      %v1616 = vadd.f32 0.0, %v1615
      %v1617 = vpop.f32.mrb[0].mxu0
      %1618 = vmatprep.mubr.bf16.mxu0 0
      %1619 = vmatmul.mubr.bf16.gmra.mrb[0].mxu0 %v439
      %v1620 = vpop.f32.mrb[0].mxu0
      %v1621 = vadd.f32 0.0, %v1620
      %v1622 = vpop.f32.mrb[0].mxu0
      %v1623 = vpop.f32.mrb[0].mxu0
      %v1624 = vpop.f32.mrb[0].mxu0
      %1625 = vmatprep.mubr.bf16.mxu0 0
      %1626 = vmatmul.mubr.bf16.gmra.mrb[0].mxu0 %v440
      %v1627 = vpop.f32.mrb[0].mxu0
      %v1628 = vadd.f32 0.0, %v1627
      %v1629 = vpop.f32.mrb[0].mxu0
      %v1630 = vpop.f32.mrb[0].mxu0
      %v1631 = vadd.f32 0.0, %v1630
      %v1632 = vpop.f32.mrb[0].mxu0
      %1633 = vmatprep.mubr.bf16.mxu0 0
      %1634 = vmatmul.mubr.bf16.gmra.mrb[0].mxu0 %v441
      %v1635 = vpop.f32.mrb[0].mxu0
      %v1636 = vadd.f32 0.0, %v1635
      %v1637 = vpop.f32.mrb[0].mxu0
      %v1638 = vpop.f32.mrb[0].mxu0
      %v1639 = vpop.f32.mrb[0].mxu0
      %1640 = vmatprep.mubr.bf16.mxu0 0
      %1641 = vmatmul.mubr.bf16.gmra.mrb[0].mxu0 %v442
      %v1642 = vpop.f32.mrb[0].mxu0
      %v1643 = vadd.f32 0.0, %v1642
      %v1644 = vpop.f32.mrb[0].mxu0
      %v1645 = vpop.f32.mrb[0].mxu0
      %v1646 = vadd.f32 0.0, %v1645
      %v1647 = vpop.f32.mrb[0].mxu0
      %1648 = vmatprep.mubr.bf16.mxu0 0
      %1649 = vmatmul.mubr.bf16.gmra.mrb[0].mxu0 %v443
      %v1650 = vpop.f32.mrb[0].mxu0
      %v1651 = vadd.f32 0.0, %v1650
      %v1652 = vpop.f32.mrb[0].mxu0
      %v1653 = vpop.f32.mrb[0].mxu0
      %v1654 = vpop.f32.mrb[0].mxu0
      %1655 = vmatprep.mubr.bf16.mxu0 0
      %1656 = vmatmul.mubr.bf16.gmra.mrb[0].mxu0 %v444
      %v1657 = vpop.f32.mrb[0].mxu0
      %v1658 = vadd.f32 0.0, %v1657
      %v1659 = vpop.f32.mrb[0].mxu0
      %v1660 = vpop.f32.mrb[0].mxu0
      %v1661 = vadd.f32 0.0, %v1660
      %v1662 = vpop.f32.mrb[0].mxu0
      %1663 = vmatprep.mubr.bf16.mxu0 0
      %1664 = vmatmul.mubr.bf16.gmra.mrb[0].mxu0 %v445
      %v1665 = vpop.f32.mrb[0].mxu0
      %v1666 = vadd.f32 0.0, %v1665
      %v1667 = vpop.f32.mrb[0].mxu0
      %v1668 = vpop.f32.mrb[0].mxu0
      %v1669 = vpop.f32.mrb[0].mxu0
      %1670 = vmatprep.mubr.bf16.mxu0 0
      %1671 = vmatmul.mubr.bf16.gmra.mrb[0].mxu0 %v446
      %v1672 = vpop.f32.mrb[0].mxu0
      %v1673 = vadd.f32 0.0, %v1672
      %v1674 = vpop.f32.mrb[0].mxu0
      %v1675 = vpop.f32.mrb[0].mxu0
      %v1676 = vadd.f32 0.0, %v1675
      %v1677 = vpop.f32.mrb[0].mxu0
      %1678 = vmatprep.mubr.bf16.mxu0 0
      %1679 = vmatmul.mubr.bf16.gmra.mrb[0].mxu0 %v447
      %v1680 = vpop.f32.mrb[0].mxu0
      %v1681 = vadd.f32 0.0, %v1680
      %v1682 = vpop.f32.mrb[0].mxu0
      %v1683 = vpop.f32.mrb[0].mxu0
      %v1684 = vpop.f32.mrb[0].mxu0
      %1685 = vdwg.mxu0
      %vm1734 = vcmask 1045504
      %v1735 = vrot.slane %v1448, 2
      %v1736 = vrot.slane %v1451, 2
      %v1737 = vsel %vm1734, %v1735, %v1736
      %v1738 = vrot.slane %v1456, 2
      %v1739 = vsel %vm1734, %v1736, %v1738
      %v1740 = vrot.slane %v1463, 2
      %v1741 = vrot.slane %v1466, 2
      %v1742 = vsel %vm1734, %v1740, %v1741
      %v1743 = vrot.slane %v1471, 2
      %v1744 = vsel %vm1734, %v1741, %v1743
      %v1745 = vrot.slane %v1478, 2
      %v1746 = vrot.slane %v1481, 2
      %v1747 = vsel %vm1734, %v1745, %v1746
      %v1748 = vrot.slane %v1486, 2
      %v1749 = vsel %vm1734, %v1746, %v1748
      %v1750 = vrot.slane %v1493, 2
      %v1751 = vrot.slane %v1496, 2
      %v1752 = vsel %vm1734, %v1750, %v1751
      %v1753 = vrot.slane %v1501, 2
      %v1754 = vsel %vm1734, %v1751, %v1753
      %v1755 = vrot.slane %v1508, 2
      %v1756 = vrot.slane %v1511, 2
      %v1757 = vsel %vm1734, %v1755, %v1756
      %v1758 = vrot.slane %v1516, 2
      %v1759 = vsel %vm1734, %v1756, %v1758
      %v1760 = vrot.slane %v1523, 2
      %v1761 = vrot.slane %v1526, 2
      %v1762 = vsel %vm1734, %v1760, %v1761
      %v1763 = vrot.slane %v1531, 2
      %v1764 = vsel %vm1734, %v1761, %v1763
      %v1765 = vrot.slane %v1538, 2
      %v1766 = vrot.slane %v1541, 2
      %v1767 = vsel %vm1734, %v1765, %v1766
      %v1768 = vrot.slane %v1546, 2
      %v1769 = vsel %vm1734, %v1766, %v1768
      %v1770 = vrot.slane %v1553, 2
      %v1771 = vrot.slane %v1556, 2
      %v1772 = vsel %vm1734, %v1770, %v1771
      %v1773 = vrot.slane %v1561, 2
      %v1774 = vsel %vm1734, %v1771, %v1773
      %v1775 = vrot.slane %v1568, 2
      %v1776 = vrot.slane %v1571, 2
      %v1777 = vsel %vm1734, %v1775, %v1776
      %v1778 = vrot.slane %v1576, 2
      %v1779 = vsel %vm1734, %v1776, %v1778
      %v1780 = vrot.slane %v1583, 2
      %v1781 = vrot.slane %v1586, 2
      %v1782 = vsel %vm1734, %v1780, %v1781
      %v1783 = vrot.slane %v1591, 2
      %v1784 = vsel %vm1734, %v1781, %v1783
      %v1785 = vrot.slane %v1598, 2
      %v1786 = vrot.slane %v1601, 2
      %v1787 = vsel %vm1734, %v1785, %v1786
      %v1788 = vrot.slane %v1606, 2
      %v1789 = vsel %vm1734, %v1786, %v1788
      %v1790 = vrot.slane %v1613, 2
      %v1791 = vrot.slane %v1616, 2
      %v1792 = vsel %vm1734, %v1790, %v1791
      %v1793 = vrot.slane %v1621, 2
      %v1794 = vsel %vm1734, %v1791, %v1793
      %v1795 = vrot.slane %v1628, 2
      %v1796 = vrot.slane %v1631, 2
      %v1797 = vsel %vm1734, %v1795, %v1796
      %v1798 = vrot.slane %v1636, 2
      %v1799 = vsel %vm1734, %v1796, %v1798
      %v1800 = vrot.slane %v1643, 2
      %v1801 = vrot.slane %v1646, 2
      %v1802 = vsel %vm1734, %v1800, %v1801
      %v1803 = vrot.slane %v1651, 2
      %v1804 = vsel %vm1734, %v1801, %v1803
      %v1805 = vrot.slane %v1658, 2
      %v1806 = vrot.slane %v1661, 2
      %v1807 = vsel %vm1734, %v1805, %v1806
      %v1808 = vrot.slane %v1666, 2
      %v1809 = vsel %vm1734, %v1806, %v1808
      %v1810 = vrot.slane %v1673, 2
      %v1811 = vrot.slane %v1676, 2
      %v1812 = vsel %vm1734, %v1810, %v1811
      %v1813 = vrot.slane %v1681, 2
      %v1814 = vsel %vm1734, %v1811, %v1813
      %v1847 = vadd.f32 %v1316, %v1737
      %v1848 = vadd.f32 %v1317, %v1739
      %v1849 = vadd.f32 %v1318, %v1742
      %v1850 = vadd.f32 %v1319, %v1744
      %v1851 = vadd.f32 %v1320, %v1747
      %v1852 = vadd.f32 %v1321, %v1749
      %v1853 = vadd.f32 %v1322, %v1752
      %v1854 = vadd.f32 %v1323, %v1754
      %v1855 = vadd.f32 %v1324, %v1757
      %v1856 = vadd.f32 %v1325, %v1759
      %v1857 = vadd.f32 %v1326, %v1762
      %v1858 = vadd.f32 %v1327, %v1764
      %v1859 = vadd.f32 %v1328, %v1767
      %v1860 = vadd.f32 %v1329, %v1769
      %v1861 = vadd.f32 %v1330, %v1772
      %v1862 = vadd.f32 %v1331, %v1774
      %v1863 = vadd.f32 %v1332, %v1777
      %v1864 = vadd.f32 %v1333, %v1779
      %v1865 = vadd.f32 %v1334, %v1782
      %v1866 = vadd.f32 %v1335, %v1784
      %v1867 = vadd.f32 %v1336, %v1787
      %v1868 = vadd.f32 %v1337, %v1789
      %v1869 = vadd.f32 %v1338, %v1792
      %v1870 = vadd.f32 %v1339, %v1794
      %v1871 = vadd.f32 %v1340, %v1797
      %v1872 = vadd.f32 %v1341, %v1799
      %v1873 = vadd.f32 %v1342, %v1802
      %v1874 = vadd.f32 %v1343, %v1804
      %v1875 = vadd.f32 %v1344, %v1807
      %v1876 = vadd.f32 %v1345, %v1809
      %v1877 = vadd.f32 %v1346, %v1812
      %v1878 = vadd.f32 %v1347, %v1814
      %s1879 = scalar_lea.vmem %s1, 192
      %v1880 = vld [vmem:[%s1879] sm:$0xf]
      %v1881 = vld [vmem:[%s1879 + $0x4] sm:$0xf]
      %v1882 = vld [vmem:[%s1879 + $0x8] sm:$0xf]
      %v1883 = vld [vmem:[%s1879 + $0xc] sm:$0xf]
      %v1884 = vld [vmem:[%s1879 + $0x10] sm:$0xf]
      %v1885 = vld [vmem:[%s1879 + $0x14] sm:$0xf]
      %v1886 = vld [vmem:[%s1879 + $0x18] sm:$0xf]
      %v1887 = vld [vmem:[%s1879 + $0x1c] sm:$0xf]
      %v1888 = vld [vmem:[%s1879 + $0x20] sm:$0xf]
      %v1889 = vld [vmem:[%s1879 + $0x24] sm:$0xf]
      %v1890 = vld [vmem:[%s1879 + $0x28] sm:$0xf]
      %v1891 = vld [vmem:[%s1879 + $0x2c] sm:$0xf]
      %v1892 = vld [vmem:[%s1879 + $0x30] sm:$0xf]
      %v1893 = vld [vmem:[%s1879 + $0x34] sm:$0xf]
      %v1894 = vld [vmem:[%s1879 + $0x38] sm:$0xf]
      %v1895 = vld [vmem:[%s1879 + $0x3c] sm:$0xf]
      %v1900 = vunpack.c.l.b16 %v264
      %v1901 = vunpack.c.l.b16 %v265
      %v1902 = vunpack.c.l.b16 %v266
      %v1903 = vunpack.c.l.b16 %v267
      %v1904 = vpack.c.b16 %v1901, %v1900
      %v1905 = vpack.c.b16 %v1903, %v1902
      %v1924 = vunpack.c.l.b16 %v1880
      %v1925 = vunpack.c.l.b16 %v1881
      %v1926 = vunpack.c.l.b16 %v1882
      %v1927 = vunpack.c.l.b16 %v1883
      %v1928 = vunpack.c.l.b16 %v1884
      %v1929 = vunpack.c.l.b16 %v1885
      %v1930 = vunpack.c.l.b16 %v1886
      %v1931 = vunpack.c.l.b16 %v1887
      %v1932 = vunpack.c.l.b16 %v1888
      %v1933 = vunpack.c.l.b16 %v1889
      %v1934 = vunpack.c.l.b16 %v1890
      %v1935 = vunpack.c.l.b16 %v1891
      %v1936 = vunpack.c.l.b16 %v1892
      %v1937 = vunpack.c.l.b16 %v1893
      %v1938 = vunpack.c.l.b16 %v1894
      %v1939 = vunpack.c.l.b16 %v1895
      %v1940 = vpack.c.b16 %v1925, %v1924
      %v1941 = vpack.c.b16 %v1927, %v1926
      %v1942 = vpack.c.b16 %v1929, %v1928
      %v1943 = vpack.c.b16 %v1931, %v1930
      %v1944 = vpack.c.b16 %v1933, %v1932
      %v1945 = vpack.c.b16 %v1935, %v1934
      %v1946 = vpack.c.b16 %v1937, %v1936
      %v1947 = vpack.c.b16 %v1939, %v1938
      %1956 = vmatprep.subr.bf16.mxu0 0
      %1957 = vmatpush1.bf16.msra.mxu0 %v1940
      %1958 = vmatprep.subr.bf16.mxu0 0
      %1959 = vmatpush1.bf16.msra.mxu0 %v1941
      %1960 = vmatprep.subr.bf16.mxu0 0
      %1961 = vmatpush1.bf16.msra.mxu0 %v1942
      %1962 = vmatprep.subr.bf16.mxu0 0
      %1963 = vmatpush1.bf16.msra.mxu0 %v1943
      %1964 = vmatprep.subr.bf16.mxu0 0
      %1965 = vmatpush1.bf16.msra.mxu0 %v1944
      %1966 = vmatprep.subr.bf16.mxu0 0
      %1967 = vmatpush1.bf16.msra.mxu0 %v1945
      %1968 = vmatprep.subr.bf16.mxu0 0
      %1969 = vmatpush1.bf16.msra.mxu0 %v1946
      %1970 = vmatprep.subr.bf16.mxu0 0
      %1971 = vmatpush1.bf16.msra.mxu0 %v1947
      %1972 = vmatprep.subr.bf16.mxu0 0
      %1973 = vmatpush1.bf16.msra.mxu0 0
      %1974 = vmatprep.subr.bf16.mxu0 0
      %1975 = vmatpush1.bf16.msra.mxu0 0
      %1976 = vmatprep.subr.bf16.mxu0 0
      %1977 = vmatpush1.bf16.msra.mxu0 0
      %1978 = vmatprep.subr.bf16.mxu0 0
      %1979 = vmatpush1.bf16.msra.mxu0 0
      %1980 = vmatprep.subr.bf16.mxu0 0
      %1981 = vmatpush1.bf16.msra.mxu0 0
      %1982 = vmatprep.subr.bf16.mxu0 0
      %1983 = vmatpush1.bf16.msra.mxu0 0
      %1984 = vmatprep.subr.bf16.mxu0 0
      %1985 = vmatpush1.bf16.msra.mxu0 0
      %1986 = vmatprep.subr.bf16.mxu0 0
      %1987 = vmatpush1.bf16.msra.mxu0 0
      %1988 = vmatprep.mubr.bf16.mxu0 0
      %1989 = vmatmul.mubr.bf16.gmra.mrb[0].mxu0 %v418
      %v1990 = vpop.f32.mrb[0].mxu0
      %v1991 = vadd.f32 0.0, %v1990
      %v1992 = vpop.f32.mrb[0].mxu0
      %v1993 = vpop.f32.mrb[0].mxu0
      %v1994 = vadd.f32 0.0, %v1993
      %v1995 = vpop.f32.mrb[0].mxu0
      %1996 = vmatprep.mubr.bf16.mxu0 0
      %1997 = vmatmul.mubr.bf16.gmra.mrb[0].mxu0 %v419
      %v1998 = vpop.f32.mrb[0].mxu0
      %v1999 = vpop.f32.mrb[0].mxu0
      %v2000 = vpop.f32.mrb[0].mxu0
      %v2001 = vpop.f32.mrb[0].mxu0
      %2002 = vmatprep.mubr.bf16.mxu0 0
      %2003 = vmatmul.mubr.bf16.gmra.mrb[0].mxu0 %v420
      %v2004 = vpop.f32.mrb[0].mxu0
      %v2005 = vadd.f32 0.0, %v2004
      %v2006 = vpop.f32.mrb[0].mxu0
      %v2007 = vpop.f32.mrb[0].mxu0
      %v2008 = vadd.f32 0.0, %v2007
      %v2009 = vpop.f32.mrb[0].mxu0
      %2010 = vmatprep.mubr.bf16.mxu0 0
      %2011 = vmatmul.mubr.bf16.gmra.mrb[0].mxu0 %v421
      %v2012 = vpop.f32.mrb[0].mxu0
      %v2013 = vpop.f32.mrb[0].mxu0
      %v2014 = vpop.f32.mrb[0].mxu0
      %v2015 = vpop.f32.mrb[0].mxu0
      %2016 = vmatprep.mubr.bf16.mxu0 0
      %2017 = vmatmul.mubr.bf16.gmra.mrb[0].mxu0 %v422
      %v2018 = vpop.f32.mrb[0].mxu0
      %v2019 = vadd.f32 0.0, %v2018
      %v2020 = vpop.f32.mrb[0].mxu0
      %v2021 = vpop.f32.mrb[0].mxu0
      %v2022 = vadd.f32 0.0, %v2021
      %v2023 = vpop.f32.mrb[0].mxu0
      %2024 = vmatprep.mubr.bf16.mxu0 0
      %2025 = vmatmul.mubr.bf16.gmra.mrb[0].mxu0 %v423
      %v2026 = vpop.f32.mrb[0].mxu0
      %v2027 = vpop.f32.mrb[0].mxu0
      %v2028 = vpop.f32.mrb[0].mxu0
      %v2029 = vpop.f32.mrb[0].mxu0
      %2030 = vmatprep.mubr.bf16.mxu0 0
      %2031 = vmatmul.mubr.bf16.gmra.mrb[0].mxu0 %v424
      %v2032 = vpop.f32.mrb[0].mxu0
      %v2033 = vadd.f32 0.0, %v2032
      %v2034 = vpop.f32.mrb[0].mxu0
      %v2035 = vpop.f32.mrb[0].mxu0
      %v2036 = vadd.f32 0.0, %v2035
      %v2037 = vpop.f32.mrb[0].mxu0
      %2038 = vmatprep.mubr.bf16.mxu0 0
      %2039 = vmatmul.mubr.bf16.gmra.mrb[0].mxu0 %v425
      %v2040 = vpop.f32.mrb[0].mxu0
      %v2041 = vpop.f32.mrb[0].mxu0
      %v2042 = vpop.f32.mrb[0].mxu0
      %v2043 = vpop.f32.mrb[0].mxu0
      %2044 = vmatprep.mubr.bf16.mxu0 0
      %2045 = vmatmul.mubr.bf16.gmra.mrb[0].mxu0 %v426
      %v2046 = vpop.f32.mrb[0].mxu0
      %v2047 = vadd.f32 0.0, %v2046
      %v2048 = vpop.f32.mrb[0].mxu0
      %v2049 = vpop.f32.mrb[0].mxu0
      %v2050 = vadd.f32 0.0, %v2049
      %v2051 = vpop.f32.mrb[0].mxu0
      %2052 = vmatprep.mubr.bf16.mxu0 0
      %2053 = vmatmul.mubr.bf16.gmra.mrb[0].mxu0 %v427
      %v2054 = vpop.f32.mrb[0].mxu0
      %v2055 = vpop.f32.mrb[0].mxu0
      %v2056 = vpop.f32.mrb[0].mxu0
      %v2057 = vpop.f32.mrb[0].mxu0
      %2058 = vmatprep.mubr.bf16.mxu0 0
      %2059 = vmatmul.mubr.bf16.gmra.mrb[0].mxu0 %v428
      %v2060 = vpop.f32.mrb[0].mxu0
      %v2061 = vadd.f32 0.0, %v2060
      %v2062 = vpop.f32.mrb[0].mxu0
      %v2063 = vpop.f32.mrb[0].mxu0
      %v2064 = vadd.f32 0.0, %v2063
      %v2065 = vpop.f32.mrb[0].mxu0
      %2066 = vmatprep.mubr.bf16.mxu0 0
      %2067 = vmatmul.mubr.bf16.gmra.mrb[0].mxu0 %v429
      %v2068 = vpop.f32.mrb[0].mxu0
      %v2069 = vpop.f32.mrb[0].mxu0
      %v2070 = vpop.f32.mrb[0].mxu0
      %v2071 = vpop.f32.mrb[0].mxu0
      %2072 = vmatprep.mubr.bf16.mxu0 0
      %2073 = vmatmul.mubr.bf16.gmra.mrb[0].mxu0 %v430
      %v2074 = vpop.f32.mrb[0].mxu0
      %v2075 = vadd.f32 0.0, %v2074
      %v2076 = vpop.f32.mrb[0].mxu0
      %v2077 = vpop.f32.mrb[0].mxu0
      %v2078 = vadd.f32 0.0, %v2077
      %v2079 = vpop.f32.mrb[0].mxu0
      %2080 = vmatprep.mubr.bf16.mxu0 0
      %2081 = vmatmul.mubr.bf16.gmra.mrb[0].mxu0 %v431
      %v2082 = vpop.f32.mrb[0].mxu0
      %v2083 = vpop.f32.mrb[0].mxu0
      %v2084 = vpop.f32.mrb[0].mxu0
      %v2085 = vpop.f32.mrb[0].mxu0
      %2086 = vmatprep.mubr.bf16.mxu0 0
      %2087 = vmatmul.mubr.bf16.gmra.mrb[0].mxu0 %v432
      %v2088 = vpop.f32.mrb[0].mxu0
      %v2089 = vadd.f32 0.0, %v2088
      %v2090 = vpop.f32.mrb[0].mxu0
      %v2091 = vpop.f32.mrb[0].mxu0
      %v2092 = vadd.f32 0.0, %v2091
      %v2093 = vpop.f32.mrb[0].mxu0
      %2094 = vmatprep.mubr.bf16.mxu0 0
      %2095 = vmatmul.mubr.bf16.gmra.mrb[0].mxu0 %v433
      %v2096 = vpop.f32.mrb[0].mxu0
      %v2097 = vpop.f32.mrb[0].mxu0
      %v2098 = vpop.f32.mrb[0].mxu0
      %v2099 = vpop.f32.mrb[0].mxu0
      %2100 = vmatprep.mubr.bf16.mxu0 0
      %2101 = vmatmul.mubr.bf16.gmra.mrb[0].mxu0 %v434
      %v2102 = vpop.f32.mrb[0].mxu0
      %v2103 = vadd.f32 0.0, %v2102
      %v2104 = vpop.f32.mrb[0].mxu0
      %v2105 = vpop.f32.mrb[0].mxu0
      %v2106 = vadd.f32 0.0, %v2105
      %v2107 = vpop.f32.mrb[0].mxu0
      %2108 = vmatprep.mubr.bf16.mxu0 0
      %2109 = vmatmul.mubr.bf16.gmra.mrb[0].mxu0 %v435
      %v2110 = vpop.f32.mrb[0].mxu0
      %v2111 = vpop.f32.mrb[0].mxu0
      %v2112 = vpop.f32.mrb[0].mxu0
      %v2113 = vpop.f32.mrb[0].mxu0
      %2114 = vmatprep.mubr.bf16.mxu0 0
      %2115 = vmatmul.mubr.bf16.gmra.mrb[0].mxu0 %v436
      %v2116 = vpop.f32.mrb[0].mxu0
      %v2117 = vadd.f32 0.0, %v2116
      %v2118 = vpop.f32.mrb[0].mxu0
      %v2119 = vpop.f32.mrb[0].mxu0
      %v2120 = vadd.f32 0.0, %v2119
      %v2121 = vpop.f32.mrb[0].mxu0
      %2122 = vmatprep.mubr.bf16.mxu0 0
      %2123 = vmatmul.mubr.bf16.gmra.mrb[0].mxu0 %v437
      %v2124 = vpop.f32.mrb[0].mxu0
      %v2125 = vpop.f32.mrb[0].mxu0
      %v2126 = vpop.f32.mrb[0].mxu0
      %v2127 = vpop.f32.mrb[0].mxu0
      %2128 = vmatprep.mubr.bf16.mxu0 0
      %2129 = vmatmul.mubr.bf16.gmra.mrb[0].mxu0 %v438
      %v2130 = vpop.f32.mrb[0].mxu0
      %v2131 = vadd.f32 0.0, %v2130
      %v2132 = vpop.f32.mrb[0].mxu0
      %v2133 = vpop.f32.mrb[0].mxu0
      %v2134 = vadd.f32 0.0, %v2133
      %v2135 = vpop.f32.mrb[0].mxu0
      %2136 = vmatprep.mubr.bf16.mxu0 0
      %2137 = vmatmul.mubr.bf16.gmra.mrb[0].mxu0 %v439
      %v2138 = vpop.f32.mrb[0].mxu0
      %v2139 = vpop.f32.mrb[0].mxu0
      %v2140 = vpop.f32.mrb[0].mxu0
      %v2141 = vpop.f32.mrb[0].mxu0
      %2142 = vmatprep.mubr.bf16.mxu0 0
      %2143 = vmatmul.mubr.bf16.gmra.mrb[0].mxu0 %v440
      %v2144 = vpop.f32.mrb[0].mxu0
      %v2145 = vadd.f32 0.0, %v2144
      %v2146 = vpop.f32.mrb[0].mxu0
      %v2147 = vpop.f32.mrb[0].mxu0
      %v2148 = vadd.f32 0.0, %v2147
      %v2149 = vpop.f32.mrb[0].mxu0
      %2150 = vmatprep.mubr.bf16.mxu0 0
      %2151 = vmatmul.mubr.bf16.gmra.mrb[0].mxu0 %v441
      %v2152 = vpop.f32.mrb[0].mxu0
      %v2153 = vpop.f32.mrb[0].mxu0
      %v2154 = vpop.f32.mrb[0].mxu0
      %v2155 = vpop.f32.mrb[0].mxu0
      %2156 = vmatprep.mubr.bf16.mxu0 0
      %2157 = vmatmul.mubr.bf16.gmra.mrb[0].mxu0 %v442
      %v2158 = vpop.f32.mrb[0].mxu0
      %v2159 = vadd.f32 0.0, %v2158
      %v2160 = vpop.f32.mrb[0].mxu0
      %v2161 = vpop.f32.mrb[0].mxu0
      %v2162 = vadd.f32 0.0, %v2161
      %v2163 = vpop.f32.mrb[0].mxu0
      %2164 = vmatprep.mubr.bf16.mxu0 0
      %2165 = vmatmul.mubr.bf16.gmra.mrb[0].mxu0 %v443
      %v2166 = vpop.f32.mrb[0].mxu0
      %v2167 = vpop.f32.mrb[0].mxu0
      %v2168 = vpop.f32.mrb[0].mxu0
      %v2169 = vpop.f32.mrb[0].mxu0
      %2170 = vmatprep.mubr.bf16.mxu0 0
      %2171 = vmatmul.mubr.bf16.gmra.mrb[0].mxu0 %v444
      %v2172 = vpop.f32.mrb[0].mxu0
      %v2173 = vadd.f32 0.0, %v2172
      %v2174 = vpop.f32.mrb[0].mxu0
      %v2175 = vpop.f32.mrb[0].mxu0
      %v2176 = vadd.f32 0.0, %v2175
      %v2177 = vpop.f32.mrb[0].mxu0
      %2178 = vmatprep.mubr.bf16.mxu0 0
      %2179 = vmatmul.mubr.bf16.gmra.mrb[0].mxu0 %v445
      %v2180 = vpop.f32.mrb[0].mxu0
      %v2181 = vpop.f32.mrb[0].mxu0
      %v2182 = vpop.f32.mrb[0].mxu0
      %v2183 = vpop.f32.mrb[0].mxu0
      %2184 = vmatprep.mubr.bf16.mxu0 0
      %2185 = vmatmul.mubr.bf16.gmra.mrb[0].mxu0 %v446
      %v2186 = vpop.f32.mrb[0].mxu0
      %v2187 = vadd.f32 0.0, %v2186
      %v2188 = vpop.f32.mrb[0].mxu0
      %v2189 = vpop.f32.mrb[0].mxu0
      %v2190 = vadd.f32 0.0, %v2189
      %v2191 = vpop.f32.mrb[0].mxu0
      %2192 = vmatprep.mubr.bf16.mxu0 0
      %2193 = vmatmul.mubr.bf16.gmra.mrb[0].mxu0 %v447
      %v2194 = vpop.f32.mrb[0].mxu0
      %v2195 = vpop.f32.mrb[0].mxu0
      %v2196 = vpop.f32.mrb[0].mxu0
      %v2197 = vpop.f32.mrb[0].mxu0
      %2198 = vmatprep.mubr.bf16.mxu0 0
      %2199 = vmatmul.mubr.bf16.gmra.mrb[0].mxu0 %v1904
      %v2200 = vpop.f32.mrb[0].mxu0
      %v2201 = vadd.f32 0.0, %v2200
      %v2202 = vpop.f32.mrb[0].mxu0
      %v2203 = vpop.f32.mrb[0].mxu0
      %v2204 = vadd.f32 0.0, %v2203
      %v2205 = vpop.f32.mrb[0].mxu0
      %2206 = vmatprep.mubr.bf16.mxu0 0
      %2207 = vmatmul.mubr.bf16.gmra.mrb[0].mxu0 %v1905
      %v2208 = vpop.f32.mrb[0].mxu0
      %v2209 = vpop.f32.mrb[0].mxu0
      %v2210 = vpop.f32.mrb[0].mxu0
      %v2211 = vpop.f32.mrb[0].mxu0
      %2212 = vdwg.mxu0
      %v2213 = vadd.f32 %v1847, %v1991
      %v2214 = vadd.f32 %v1848, %v1994
      %v2215 = vadd.f32 %v1849, %v2005
      %v2216 = vadd.f32 %v1850, %v2008
      %v2217 = vadd.f32 %v1851, %v2019
      %v2218 = vadd.f32 %v1852, %v2022
      %v2219 = vadd.f32 %v1853, %v2033
      %v2220 = vadd.f32 %v1854, %v2036
      %v2221 = vadd.f32 %v1855, %v2047
      %v2222 = vadd.f32 %v1856, %v2050
      %v2223 = vadd.f32 %v1857, %v2061
      %v2224 = vadd.f32 %v1858, %v2064
      %v2225 = vadd.f32 %v1859, %v2075
      %v2226 = vadd.f32 %v1860, %v2078
      %v2227 = vadd.f32 %v1861, %v2089
      %v2228 = vadd.f32 %v1862, %v2092
      %v2229 = vadd.f32 %v1863, %v2103
      %v2230 = vadd.f32 %v1864, %v2106
      %v2231 = vadd.f32 %v1865, %v2117
      %v2232 = vadd.f32 %v1866, %v2120
      %v2233 = vadd.f32 %v1867, %v2131
      %v2234 = vadd.f32 %v1868, %v2134
      %v2235 = vadd.f32 %v1869, %v2145
      %v2236 = vadd.f32 %v1870, %v2148
      %v2237 = vadd.f32 %v1871, %v2159
      %v2238 = vadd.f32 %v1872, %v2162
      %v2239 = vadd.f32 %v1873, %v2173
      %v2240 = vadd.f32 %v1874, %v2176
      %v2241 = vadd.f32 %v1875, %v2187
      %v2242 = vadd.f32 %v1876, %v2190
      %v2243 = vadd.f32 %v1877, %v2201
      %v2244 = vadd.f32 %v1878, %v2204
      %s2245 = scalar_lea.vmem %s1, 256
      %v2246 = vld [vmem:[%s2245] sm:$0xf]
      %v2247 = vld [vmem:[%s2245 + $0x4] sm:$0xf]
      %v2248 = vld [vmem:[%s2245 + $0x8] sm:$0xf]
      %v2249 = vld [vmem:[%s2245 + $0xc] sm:$0xf]
      %v2250 = vld [vmem:[%s2245 + $0x10] sm:$0xf]
      %v2251 = vld [vmem:[%s2245 + $0x14] sm:$0xf]
      %v2252 = vld [vmem:[%s2245 + $0x18] sm:$0xf]
      %v2253 = vld [vmem:[%s2245 + $0x1c] sm:$0xf]
      %v2254 = vld [vmem:[%s2245 + $0x20] sm:$0xf]
      %v2255 = vld [vmem:[%s2245 + $0x24] sm:$0xf]
      %v2256 = vld [vmem:[%s2245 + $0x28] sm:$0xf]
      %v2257 = vld [vmem:[%s2245 + $0x2c] sm:$0xf]
      %v2258 = vld [vmem:[%s2245 + $0x30] sm:$0xf]
      %v2259 = vld [vmem:[%s2245 + $0x34] sm:$0xf]
      %v2260 = vld [vmem:[%s2245 + $0x38] sm:$0xf]
      %v2261 = vld [vmem:[%s2245 + $0x3c] sm:$0xf]
      %v2278 = vunpack.c.l.b16 %v2246
      %v2279 = vunpack.c.l.b16 %v2247
      %v2280 = vunpack.c.l.b16 %v2248
      %v2281 = vunpack.c.l.b16 %v2249
      %v2282 = vunpack.c.l.b16 %v2250
      %v2283 = vunpack.c.l.b16 %v2251
      %v2284 = vunpack.c.l.b16 %v2252
      %v2285 = vunpack.c.l.b16 %v2253
      %v2286 = vunpack.c.l.b16 %v2254
      %v2287 = vunpack.c.l.b16 %v2255
      %v2288 = vunpack.c.l.b16 %v2256
      %v2289 = vunpack.c.l.b16 %v2257
      %v2290 = vunpack.c.l.b16 %v2258
      %v2291 = vunpack.c.l.b16 %v2259
      %v2292 = vunpack.c.l.b16 %v2260
      %v2293 = vunpack.c.l.b16 %v2261
      %v2294 = vpack.c.b16 %v2279, %v2278
      %v2295 = vpack.c.b16 %v2281, %v2280
      %v2296 = vpack.c.b16 %v2283, %v2282
      %v2297 = vpack.c.b16 %v2285, %v2284
      %v2298 = vpack.c.b16 %v2287, %v2286
      %v2299 = vpack.c.b16 %v2289, %v2288
      %v2300 = vpack.c.b16 %v2291, %v2290
      %v2301 = vpack.c.b16 %v2293, %v2292
      %2310 = vmatprep.subr.bf16.mxu0 0
      %2311 = vmatpush1.bf16.msra.mxu0 %v2294
      %2312 = vmatprep.subr.bf16.mxu0 0
      %2313 = vmatpush1.bf16.msra.mxu0 %v2295
      %2314 = vmatprep.subr.bf16.mxu0 0
      %2315 = vmatpush1.bf16.msra.mxu0 %v2296
      %2316 = vmatprep.subr.bf16.mxu0 0
      %2317 = vmatpush1.bf16.msra.mxu0 %v2297
      %2318 = vmatprep.subr.bf16.mxu0 0
      %2319 = vmatpush1.bf16.msra.mxu0 %v2298
      %2320 = vmatprep.subr.bf16.mxu0 0
      %2321 = vmatpush1.bf16.msra.mxu0 %v2299
      %2322 = vmatprep.subr.bf16.mxu0 0
      %2323 = vmatpush1.bf16.msra.mxu0 %v2300
      %2324 = vmatprep.subr.bf16.mxu0 0
      %2325 = vmatpush1.bf16.msra.mxu0 %v2301
      %2326 = vmatprep.subr.bf16.mxu0 0
      %2327 = vmatpush1.bf16.msra.mxu0 0
      %2328 = vmatprep.subr.bf16.mxu0 0
      %2329 = vmatpush1.bf16.msra.mxu0 0
      %2330 = vmatprep.subr.bf16.mxu0 0
      %2331 = vmatpush1.bf16.msra.mxu0 0
      %2332 = vmatprep.subr.bf16.mxu0 0
      %2333 = vmatpush1.bf16.msra.mxu0 0
      %2334 = vmatprep.subr.bf16.mxu0 0
      %2335 = vmatpush1.bf16.msra.mxu0 0
      %2336 = vmatprep.subr.bf16.mxu0 0
      %2337 = vmatpush1.bf16.msra.mxu0 0
      %2338 = vmatprep.subr.bf16.mxu0 0
      %2339 = vmatpush1.bf16.msra.mxu0 0
      %2340 = vmatprep.subr.bf16.mxu0 0
      %2341 = vmatpush1.bf16.msra.mxu0 0
      %2342 = vmatprep.mubr.bf16.mxu0 0
      %2343 = vmatmul.mubr.bf16.gmra.mrb[0].mxu0 %v418
      %v2344 = vpop.f32.mrb[0].mxu0
      %v2345 = vadd.f32 0.0, %v2344
      %v2346 = vpop.f32.mrb[0].mxu0
      %v2347 = vpop.f32.mrb[0].mxu0
      %v2348 = vadd.f32 0.0, %v2347
      %v2349 = vpop.f32.mrb[0].mxu0
      %2350 = vmatprep.mubr.bf16.mxu0 0
      %2351 = vmatmul.mubr.bf16.gmra.mrb[0].mxu0 %v419
      %v2352 = vpop.f32.mrb[0].mxu0
      %v2353 = vadd.f32 0.0, %v2352
      %v2354 = vpop.f32.mrb[0].mxu0
      %v2355 = vpop.f32.mrb[0].mxu0
      %v2356 = vpop.f32.mrb[0].mxu0
      %2357 = vmatprep.mubr.bf16.mxu0 0
      %2358 = vmatmul.mubr.bf16.gmra.mrb[0].mxu0 %v420
      %v2359 = vpop.f32.mrb[0].mxu0
      %v2360 = vadd.f32 0.0, %v2359
      %v2361 = vpop.f32.mrb[0].mxu0
      %v2362 = vpop.f32.mrb[0].mxu0
      %v2363 = vadd.f32 0.0, %v2362
      %v2364 = vpop.f32.mrb[0].mxu0
      %2365 = vmatprep.mubr.bf16.mxu0 0
      %2366 = vmatmul.mubr.bf16.gmra.mrb[0].mxu0 %v421
      %v2367 = vpop.f32.mrb[0].mxu0
      %v2368 = vadd.f32 0.0, %v2367
      %v2369 = vpop.f32.mrb[0].mxu0
      %v2370 = vpop.f32.mrb[0].mxu0
      %v2371 = vpop.f32.mrb[0].mxu0
      %2372 = vmatprep.mubr.bf16.mxu0 0
      %2373 = vmatmul.mubr.bf16.gmra.mrb[0].mxu0 %v422
      %v2374 = vpop.f32.mrb[0].mxu0
      %v2375 = vadd.f32 0.0, %v2374
      %v2376 = vpop.f32.mrb[0].mxu0
      %v2377 = vpop.f32.mrb[0].mxu0
      %v2378 = vadd.f32 0.0, %v2377
      %v2379 = vpop.f32.mrb[0].mxu0
      %2380 = vmatprep.mubr.bf16.mxu0 0
      %2381 = vmatmul.mubr.bf16.gmra.mrb[0].mxu0 %v423
      %v2382 = vpop.f32.mrb[0].mxu0
      %v2383 = vadd.f32 0.0, %v2382
      %v2384 = vpop.f32.mrb[0].mxu0
      %v2385 = vpop.f32.mrb[0].mxu0
      %v2386 = vpop.f32.mrb[0].mxu0
      %2387 = vmatprep.mubr.bf16.mxu0 0
      %2388 = vmatmul.mubr.bf16.gmra.mrb[0].mxu0 %v424
      %v2389 = vpop.f32.mrb[0].mxu0
      %v2390 = vadd.f32 0.0, %v2389
      %v2391 = vpop.f32.mrb[0].mxu0
      %v2392 = vpop.f32.mrb[0].mxu0
      %v2393 = vadd.f32 0.0, %v2392
      %v2394 = vpop.f32.mrb[0].mxu0
      %2395 = vmatprep.mubr.bf16.mxu0 0
      %2396 = vmatmul.mubr.bf16.gmra.mrb[0].mxu0 %v425
      %v2397 = vpop.f32.mrb[0].mxu0
      %v2398 = vadd.f32 0.0, %v2397
      %v2399 = vpop.f32.mrb[0].mxu0
      %v2400 = vpop.f32.mrb[0].mxu0
      %v2401 = vpop.f32.mrb[0].mxu0
      %2402 = vmatprep.mubr.bf16.mxu0 0
      %2403 = vmatmul.mubr.bf16.gmra.mrb[0].mxu0 %v426
      %v2404 = vpop.f32.mrb[0].mxu0
      %v2405 = vadd.f32 0.0, %v2404
      %v2406 = vpop.f32.mrb[0].mxu0
      %v2407 = vpop.f32.mrb[0].mxu0
      %v2408 = vadd.f32 0.0, %v2407
      %v2409 = vpop.f32.mrb[0].mxu0
      %2410 = vmatprep.mubr.bf16.mxu0 0
      %2411 = vmatmul.mubr.bf16.gmra.mrb[0].mxu0 %v427
      %v2412 = vpop.f32.mrb[0].mxu0
      %v2413 = vadd.f32 0.0, %v2412
      %v2414 = vpop.f32.mrb[0].mxu0
      %v2415 = vpop.f32.mrb[0].mxu0
      %v2416 = vpop.f32.mrb[0].mxu0
      %2417 = vmatprep.mubr.bf16.mxu0 0
      %2418 = vmatmul.mubr.bf16.gmra.mrb[0].mxu0 %v428
      %v2419 = vpop.f32.mrb[0].mxu0
      %v2420 = vadd.f32 0.0, %v2419
      %v2421 = vpop.f32.mrb[0].mxu0
      %v2422 = vpop.f32.mrb[0].mxu0
      %v2423 = vadd.f32 0.0, %v2422
      %v2424 = vpop.f32.mrb[0].mxu0
      %2425 = vmatprep.mubr.bf16.mxu0 0
      %2426 = vmatmul.mubr.bf16.gmra.mrb[0].mxu0 %v429
      %v2427 = vpop.f32.mrb[0].mxu0
      %v2428 = vadd.f32 0.0, %v2427
      %v2429 = vpop.f32.mrb[0].mxu0
      %v2430 = vpop.f32.mrb[0].mxu0
      %v2431 = vpop.f32.mrb[0].mxu0
      %2432 = vmatprep.mubr.bf16.mxu0 0
      %2433 = vmatmul.mubr.bf16.gmra.mrb[0].mxu0 %v430
      %v2434 = vpop.f32.mrb[0].mxu0
      %v2435 = vadd.f32 0.0, %v2434
      %v2436 = vpop.f32.mrb[0].mxu0
      %v2437 = vpop.f32.mrb[0].mxu0
      %v2438 = vadd.f32 0.0, %v2437
      %v2439 = vpop.f32.mrb[0].mxu0
      %2440 = vmatprep.mubr.bf16.mxu0 0
      %2441 = vmatmul.mubr.bf16.gmra.mrb[0].mxu0 %v431
      %v2442 = vpop.f32.mrb[0].mxu0
      %v2443 = vadd.f32 0.0, %v2442
      %v2444 = vpop.f32.mrb[0].mxu0
      %v2445 = vpop.f32.mrb[0].mxu0
      %v2446 = vpop.f32.mrb[0].mxu0
      %2447 = vmatprep.mubr.bf16.mxu0 0
      %2448 = vmatmul.mubr.bf16.gmra.mrb[0].mxu0 %v432
      %v2449 = vpop.f32.mrb[0].mxu0
      %v2450 = vadd.f32 0.0, %v2449
      %v2451 = vpop.f32.mrb[0].mxu0
      %v2452 = vpop.f32.mrb[0].mxu0
      %v2453 = vadd.f32 0.0, %v2452
      %v2454 = vpop.f32.mrb[0].mxu0
      %2455 = vmatprep.mubr.bf16.mxu0 0
      %2456 = vmatmul.mubr.bf16.gmra.mrb[0].mxu0 %v433
      %v2457 = vpop.f32.mrb[0].mxu0
      %v2458 = vadd.f32 0.0, %v2457
      %v2459 = vpop.f32.mrb[0].mxu0
      %v2460 = vpop.f32.mrb[0].mxu0
      %v2461 = vpop.f32.mrb[0].mxu0
      %2462 = vmatprep.mubr.bf16.mxu0 0
      %2463 = vmatmul.mubr.bf16.gmra.mrb[0].mxu0 %v434
      %v2464 = vpop.f32.mrb[0].mxu0
      %v2465 = vadd.f32 0.0, %v2464
      %v2466 = vpop.f32.mrb[0].mxu0
      %v2467 = vpop.f32.mrb[0].mxu0
      %v2468 = vadd.f32 0.0, %v2467
      %v2469 = vpop.f32.mrb[0].mxu0
      %2470 = vmatprep.mubr.bf16.mxu0 0
      %2471 = vmatmul.mubr.bf16.gmra.mrb[0].mxu0 %v435
      %v2472 = vpop.f32.mrb[0].mxu0
      %v2473 = vadd.f32 0.0, %v2472
      %v2474 = vpop.f32.mrb[0].mxu0
      %v2475 = vpop.f32.mrb[0].mxu0
      %v2476 = vpop.f32.mrb[0].mxu0
      %2477 = vmatprep.mubr.bf16.mxu0 0
      %2478 = vmatmul.mubr.bf16.gmra.mrb[0].mxu0 %v436
      %v2479 = vpop.f32.mrb[0].mxu0
      %v2480 = vadd.f32 0.0, %v2479
      %v2481 = vpop.f32.mrb[0].mxu0
      %v2482 = vpop.f32.mrb[0].mxu0
      %v2483 = vadd.f32 0.0, %v2482
      %v2484 = vpop.f32.mrb[0].mxu0
      %2485 = vmatprep.mubr.bf16.mxu0 0
      %2486 = vmatmul.mubr.bf16.gmra.mrb[0].mxu0 %v437
      %v2487 = vpop.f32.mrb[0].mxu0
      %v2488 = vadd.f32 0.0, %v2487
      %v2489 = vpop.f32.mrb[0].mxu0
      %v2490 = vpop.f32.mrb[0].mxu0
      %v2491 = vpop.f32.mrb[0].mxu0
      %2492 = vmatprep.mubr.bf16.mxu0 0
      %2493 = vmatmul.mubr.bf16.gmra.mrb[0].mxu0 %v438
      %v2494 = vpop.f32.mrb[0].mxu0
      %v2495 = vadd.f32 0.0, %v2494
      %v2496 = vpop.f32.mrb[0].mxu0
      %v2497 = vpop.f32.mrb[0].mxu0
      %v2498 = vadd.f32 0.0, %v2497
      %v2499 = vpop.f32.mrb[0].mxu0
      %2500 = vmatprep.mubr.bf16.mxu0 0
      %2501 = vmatmul.mubr.bf16.gmra.mrb[0].mxu0 %v439
      %v2502 = vpop.f32.mrb[0].mxu0
      %v2503 = vadd.f32 0.0, %v2502
      %v2504 = vpop.f32.mrb[0].mxu0
      %v2505 = vpop.f32.mrb[0].mxu0
      %v2506 = vpop.f32.mrb[0].mxu0
      %2507 = vmatprep.mubr.bf16.mxu0 0
      %2508 = vmatmul.mubr.bf16.gmra.mrb[0].mxu0 %v440
      %v2509 = vpop.f32.mrb[0].mxu0
      %v2510 = vadd.f32 0.0, %v2509
      %v2511 = vpop.f32.mrb[0].mxu0
      %v2512 = vpop.f32.mrb[0].mxu0
      %v2513 = vadd.f32 0.0, %v2512
      %v2514 = vpop.f32.mrb[0].mxu0
      %2515 = vmatprep.mubr.bf16.mxu0 0
      %2516 = vmatmul.mubr.bf16.gmra.mrb[0].mxu0 %v441
      %v2517 = vpop.f32.mrb[0].mxu0
      %v2518 = vadd.f32 0.0, %v2517
      %v2519 = vpop.f32.mrb[0].mxu0
      %v2520 = vpop.f32.mrb[0].mxu0
      %v2521 = vpop.f32.mrb[0].mxu0
      %2522 = vmatprep.mubr.bf16.mxu0 0
      %2523 = vmatmul.mubr.bf16.gmra.mrb[0].mxu0 %v442
      %v2524 = vpop.f32.mrb[0].mxu0
      %v2525 = vadd.f32 0.0, %v2524
      %v2526 = vpop.f32.mrb[0].mxu0
      %v2527 = vpop.f32.mrb[0].mxu0
      %v2528 = vadd.f32 0.0, %v2527
      %v2529 = vpop.f32.mrb[0].mxu0
      %2530 = vmatprep.mubr.bf16.mxu0 0
      %2531 = vmatmul.mubr.bf16.gmra.mrb[0].mxu0 %v443
      %v2532 = vpop.f32.mrb[0].mxu0
      %v2533 = vadd.f32 0.0, %v2532
      %v2534 = vpop.f32.mrb[0].mxu0
      %v2535 = vpop.f32.mrb[0].mxu0
      %v2536 = vpop.f32.mrb[0].mxu0
      %2537 = vmatprep.mubr.bf16.mxu0 0
      %2538 = vmatmul.mubr.bf16.gmra.mrb[0].mxu0 %v444
      %v2539 = vpop.f32.mrb[0].mxu0
      %v2540 = vadd.f32 0.0, %v2539
      %v2541 = vpop.f32.mrb[0].mxu0
      %v2542 = vpop.f32.mrb[0].mxu0
      %v2543 = vadd.f32 0.0, %v2542
      %v2544 = vpop.f32.mrb[0].mxu0
      %2545 = vmatprep.mubr.bf16.mxu0 0
      %2546 = vmatmul.mubr.bf16.gmra.mrb[0].mxu0 %v445
      %v2547 = vpop.f32.mrb[0].mxu0
      %v2548 = vadd.f32 0.0, %v2547
      %v2549 = vpop.f32.mrb[0].mxu0
      %v2550 = vpop.f32.mrb[0].mxu0
      %v2551 = vpop.f32.mrb[0].mxu0
      %2552 = vmatprep.mubr.bf16.mxu0 0
      %2553 = vmatmul.mubr.bf16.gmra.mrb[0].mxu0 %v446
      %v2554 = vpop.f32.mrb[0].mxu0
      %v2555 = vadd.f32 0.0, %v2554
      %v2556 = vpop.f32.mrb[0].mxu0
      %v2557 = vpop.f32.mrb[0].mxu0
      %v2558 = vadd.f32 0.0, %v2557
      %v2559 = vpop.f32.mrb[0].mxu0
      %2560 = vmatprep.mubr.bf16.mxu0 0
      %2561 = vmatmul.mubr.bf16.gmra.mrb[0].mxu0 %v447
      %v2562 = vpop.f32.mrb[0].mxu0
      %v2563 = vadd.f32 0.0, %v2562
      %v2564 = vpop.f32.mrb[0].mxu0
      %v2565 = vpop.f32.mrb[0].mxu0
      %v2566 = vpop.f32.mrb[0].mxu0
      %2567 = vmatprep.mubr.bf16.mxu0 0
      %2568 = vmatmul.mubr.bf16.gmra.mrb[0].mxu0 %v1904
      %v2569 = vpop.f32.mrb[0].mxu0
      %v2570 = vadd.f32 0.0, %v2569
      %v2571 = vpop.f32.mrb[0].mxu0
      %v2572 = vpop.f32.mrb[0].mxu0
      %v2573 = vadd.f32 0.0, %v2572
      %v2574 = vpop.f32.mrb[0].mxu0
      %2575 = vmatprep.mubr.bf16.mxu0 0
      %2576 = vmatmul.mubr.bf16.gmra.mrb[0].mxu0 %v1905
      %v2577 = vpop.f32.mrb[0].mxu0
      %v2578 = vadd.f32 0.0, %v2577
      %v2579 = vpop.f32.mrb[0].mxu0
      %v2580 = vpop.f32.mrb[0].mxu0
      %v2581 = vpop.f32.mrb[0].mxu0
      %2582 = vdwg.mxu0
      %v2631 = vrot.slane %v2345, 1
      %v2632 = vrot.slane %v2348, 1
      %v2633 = vsel %vm1203, %v2631, %v2632
      %v2634 = vrot.slane %v2353, 1
      %v2635 = vsel %vm1203, %v2632, %v2634
      %v2636 = vrot.slane %v2360, 1
      %v2637 = vrot.slane %v2363, 1
      %v2638 = vsel %vm1203, %v2636, %v2637
      %v2639 = vrot.slane %v2368, 1
      %v2640 = vsel %vm1203, %v2637, %v2639
      %v2641 = vrot.slane %v2375, 1
      %v2642 = vrot.slane %v2378, 1
      %v2643 = vsel %vm1203, %v2641, %v2642
      %v2644 = vrot.slane %v2383, 1
      %v2645 = vsel %vm1203, %v2642, %v2644
      %v2646 = vrot.slane %v2390, 1
      %v2647 = vrot.slane %v2393, 1
      %v2648 = vsel %vm1203, %v2646, %v2647
      %v2649 = vrot.slane %v2398, 1
      %v2650 = vsel %vm1203, %v2647, %v2649
      %v2651 = vrot.slane %v2405, 1
      %v2652 = vrot.slane %v2408, 1
      %v2653 = vsel %vm1203, %v2651, %v2652
      %v2654 = vrot.slane %v2413, 1
      %v2655 = vsel %vm1203, %v2652, %v2654
      %v2656 = vrot.slane %v2420, 1
      %v2657 = vrot.slane %v2423, 1
      %v2658 = vsel %vm1203, %v2656, %v2657
      %v2659 = vrot.slane %v2428, 1
      %v2660 = vsel %vm1203, %v2657, %v2659
      %v2661 = vrot.slane %v2435, 1
      %v2662 = vrot.slane %v2438, 1
      %v2663 = vsel %vm1203, %v2661, %v2662
      %v2664 = vrot.slane %v2443, 1
      %v2665 = vsel %vm1203, %v2662, %v2664
      %v2666 = vrot.slane %v2450, 1
      %v2667 = vrot.slane %v2453, 1
      %v2668 = vsel %vm1203, %v2666, %v2667
      %v2669 = vrot.slane %v2458, 1
      %v2670 = vsel %vm1203, %v2667, %v2669
      %v2671 = vrot.slane %v2465, 1
      %v2672 = vrot.slane %v2468, 1
      %v2673 = vsel %vm1203, %v2671, %v2672
      %v2674 = vrot.slane %v2473, 1
      %v2675 = vsel %vm1203, %v2672, %v2674
      %v2676 = vrot.slane %v2480, 1
      %v2677 = vrot.slane %v2483, 1
      %v2678 = vsel %vm1203, %v2676, %v2677
      %v2679 = vrot.slane %v2488, 1
      %v2680 = vsel %vm1203, %v2677, %v2679
      %v2681 = vrot.slane %v2495, 1
      %v2682 = vrot.slane %v2498, 1
      %v2683 = vsel %vm1203, %v2681, %v2682
      %v2684 = vrot.slane %v2503, 1
      %v2685 = vsel %vm1203, %v2682, %v2684
      %v2686 = vrot.slane %v2510, 1
      %v2687 = vrot.slane %v2513, 1
      %v2688 = vsel %vm1203, %v2686, %v2687
      %v2689 = vrot.slane %v2518, 1
      %v2690 = vsel %vm1203, %v2687, %v2689
      %v2691 = vrot.slane %v2525, 1
      %v2692 = vrot.slane %v2528, 1
      %v2693 = vsel %vm1203, %v2691, %v2692
      %v2694 = vrot.slane %v2533, 1
      %v2695 = vsel %vm1203, %v2692, %v2694
      %v2696 = vrot.slane %v2540, 1
      %v2697 = vrot.slane %v2543, 1
      %v2698 = vsel %vm1203, %v2696, %v2697
      %v2699 = vrot.slane %v2548, 1
      %v2700 = vsel %vm1203, %v2697, %v2699
      %v2701 = vrot.slane %v2555, 1
      %v2702 = vrot.slane %v2558, 1
      %v2703 = vsel %vm1203, %v2701, %v2702
      %v2704 = vrot.slane %v2563, 1
      %v2705 = vsel %vm1203, %v2702, %v2704
      %v2706 = vrot.slane %v2570, 1
      %v2707 = vrot.slane %v2573, 1
      %v2708 = vsel %vm1203, %v2706, %v2707
      %v2709 = vrot.slane %v2578, 1
      %v2710 = vsel %vm1203, %v2707, %v2709
      %v2743 = vadd.f32 %v2213, %v2633
      %v2744 = vadd.f32 %v2214, %v2635
      %v2745 = vadd.f32 %v2215, %v2638
      %v2746 = vadd.f32 %v2216, %v2640
      %v2747 = vadd.f32 %v2217, %v2643
      %v2748 = vadd.f32 %v2218, %v2645
      %v2749 = vadd.f32 %v2219, %v2648
      %v2750 = vadd.f32 %v2220, %v2650
      %v2751 = vadd.f32 %v2221, %v2653
      %v2752 = vadd.f32 %v2222, %v2655
      %v2753 = vadd.f32 %v2223, %v2658
      %v2754 = vadd.f32 %v2224, %v2660
      %v2755 = vadd.f32 %v2225, %v2663
      %v2756 = vadd.f32 %v2226, %v2665
      %v2757 = vadd.f32 %v2227, %v2668
      %v2758 = vadd.f32 %v2228, %v2670
      %v2759 = vadd.f32 %v2229, %v2673
      %v2760 = vadd.f32 %v2230, %v2675
      %v2761 = vadd.f32 %v2231, %v2678
      %v2762 = vadd.f32 %v2232, %v2680
      %v2763 = vadd.f32 %v2233, %v2683
      %v2764 = vadd.f32 %v2234, %v2685
      %v2765 = vadd.f32 %v2235, %v2688
      %v2766 = vadd.f32 %v2236, %v2690
      %v2767 = vadd.f32 %v2237, %v2693
      %v2768 = vadd.f32 %v2238, %v2695
      %v2769 = vadd.f32 %v2239, %v2698
      %v2770 = vadd.f32 %v2240, %v2700
      %v2771 = vadd.f32 %v2241, %v2703
      %v2772 = vadd.f32 %v2242, %v2705
      %v2773 = vadd.f32 %v2243, %v2708
      %v2774 = vadd.f32 %v2244, %v2710
      %s2775 = scalar_lea.vmem %s1, 320
      %v2776 = vld [vmem:[%s2775] sm:$0xf]
      %v2777 = vld [vmem:[%s2775 + $0x4] sm:$0xf]
      %v2778 = vld [vmem:[%s2775 + $0x8] sm:$0xf]
      %v2779 = vld [vmem:[%s2775 + $0xc] sm:$0xf]
      %v2780 = vld [vmem:[%s2775 + $0x10] sm:$0xf]
      %v2781 = vld [vmem:[%s2775 + $0x14] sm:$0xf]
      %v2782 = vld [vmem:[%s2775 + $0x18] sm:$0xf]
      %v2783 = vld [vmem:[%s2775 + $0x1c] sm:$0xf]
      %v2784 = vld [vmem:[%s2775 + $0x20] sm:$0xf]
      %v2785 = vld [vmem:[%s2775 + $0x24] sm:$0xf]
      %v2786 = vld [vmem:[%s2775 + $0x28] sm:$0xf]
      %v2787 = vld [vmem:[%s2775 + $0x2c] sm:$0xf]
      %v2788 = vld [vmem:[%s2775 + $0x30] sm:$0xf]
      %v2789 = vld [vmem:[%s2775 + $0x34] sm:$0xf]
      %v2790 = vld [vmem:[%s2775 + $0x38] sm:$0xf]
      %v2791 = vld [vmem:[%s2775 + $0x3c] sm:$0xf]
      %v2808 = vunpack.c.l.b16 %v2776
      %v2809 = vunpack.c.l.b16 %v2777
      %v2810 = vunpack.c.l.b16 %v2778
      %v2811 = vunpack.c.l.b16 %v2779
      %v2812 = vunpack.c.l.b16 %v2780
      %v2813 = vunpack.c.l.b16 %v2781
      %v2814 = vunpack.c.l.b16 %v2782
      %v2815 = vunpack.c.l.b16 %v2783
      %v2816 = vunpack.c.l.b16 %v2784
      %v2817 = vunpack.c.l.b16 %v2785
      %v2818 = vunpack.c.l.b16 %v2786
      %v2819 = vunpack.c.l.b16 %v2787
      %v2820 = vunpack.c.l.b16 %v2788
      %v2821 = vunpack.c.l.b16 %v2789
      %v2822 = vunpack.c.l.b16 %v2790
      %v2823 = vunpack.c.l.b16 %v2791
      %v2824 = vpack.c.b16 %v2809, %v2808
      %v2825 = vpack.c.b16 %v2811, %v2810
      %v2826 = vpack.c.b16 %v2813, %v2812
      %v2827 = vpack.c.b16 %v2815, %v2814
      %v2828 = vpack.c.b16 %v2817, %v2816
      %v2829 = vpack.c.b16 %v2819, %v2818
      %v2830 = vpack.c.b16 %v2821, %v2820
      %v2831 = vpack.c.b16 %v2823, %v2822
      %2840 = vmatprep.subr.bf16.mxu0 0
      %2841 = vmatpush1.bf16.msra.mxu0 %v2824
      %2842 = vmatprep.subr.bf16.mxu0 0
      %2843 = vmatpush1.bf16.msra.mxu0 %v2825
      %2844 = vmatprep.subr.bf16.mxu0 0
      %2845 = vmatpush1.bf16.msra.mxu0 %v2826
      %2846 = vmatprep.subr.bf16.mxu0 0
      %2847 = vmatpush1.bf16.msra.mxu0 %v2827
      %2848 = vmatprep.subr.bf16.mxu0 0
      %2849 = vmatpush1.bf16.msra.mxu0 %v2828
      %2850 = vmatprep.subr.bf16.mxu0 0
      %2851 = vmatpush1.bf16.msra.mxu0 %v2829
      %2852 = vmatprep.subr.bf16.mxu0 0
      %2853 = vmatpush1.bf16.msra.mxu0 %v2830
      %2854 = vmatprep.subr.bf16.mxu0 0
      %2855 = vmatpush1.bf16.msra.mxu0 %v2831
      %2856 = vmatprep.subr.bf16.mxu0 0
      %2857 = vmatpush1.bf16.msra.mxu0 0
      %2858 = vmatprep.subr.bf16.mxu0 0
      %2859 = vmatpush1.bf16.msra.mxu0 0
      %2860 = vmatprep.subr.bf16.mxu0 0
      %2861 = vmatpush1.bf16.msra.mxu0 0
      %2862 = vmatprep.subr.bf16.mxu0 0
      %2863 = vmatpush1.bf16.msra.mxu0 0
      %2864 = vmatprep.subr.bf16.mxu0 0
      %2865 = vmatpush1.bf16.msra.mxu0 0
      %2866 = vmatprep.subr.bf16.mxu0 0
      %2867 = vmatpush1.bf16.msra.mxu0 0
      %2868 = vmatprep.subr.bf16.mxu0 0
      %2869 = vmatpush1.bf16.msra.mxu0 0
      %2870 = vmatprep.subr.bf16.mxu0 0
      %2871 = vmatpush1.bf16.msra.mxu0 0
      %2872 = vmatprep.mubr.bf16.mxu0 0
      %2873 = vmatmul.mubr.bf16.gmra.mrb[0].mxu0 %v418
      %v2874 = vpop.f32.mrb[0].mxu0
      %v2875 = vadd.f32 0.0, %v2874
      %v2876 = vpop.f32.mrb[0].mxu0
      %v2877 = vpop.f32.mrb[0].mxu0
      %v2878 = vadd.f32 0.0, %v2877
      %v2879 = vpop.f32.mrb[0].mxu0
      %2880 = vmatprep.mubr.bf16.mxu0 0
      %2881 = vmatmul.mubr.bf16.gmra.mrb[0].mxu0 %v419
      %v2882 = vpop.f32.mrb[0].mxu0
      %v2883 = vadd.f32 0.0, %v2882
      %v2884 = vpop.f32.mrb[0].mxu0
      %v2885 = vpop.f32.mrb[0].mxu0
      %v2886 = vpop.f32.mrb[0].mxu0
      %2887 = vmatprep.mubr.bf16.mxu0 0
      %2888 = vmatmul.mubr.bf16.gmra.mrb[0].mxu0 %v420
      %v2889 = vpop.f32.mrb[0].mxu0
      %v2890 = vadd.f32 0.0, %v2889
      %v2891 = vpop.f32.mrb[0].mxu0
      %v2892 = vpop.f32.mrb[0].mxu0
      %v2893 = vadd.f32 0.0, %v2892
      %v2894 = vpop.f32.mrb[0].mxu0
      %2895 = vmatprep.mubr.bf16.mxu0 0
      %2896 = vmatmul.mubr.bf16.gmra.mrb[0].mxu0 %v421
      %v2897 = vpop.f32.mrb[0].mxu0
      %v2898 = vadd.f32 0.0, %v2897
      %v2899 = vpop.f32.mrb[0].mxu0
      %v2900 = vpop.f32.mrb[0].mxu0
      %v2901 = vpop.f32.mrb[0].mxu0
      %2902 = vmatprep.mubr.bf16.mxu0 0
      %2903 = vmatmul.mubr.bf16.gmra.mrb[0].mxu0 %v422
      %v2904 = vpop.f32.mrb[0].mxu0
      %v2905 = vadd.f32 0.0, %v2904
      %v2906 = vpop.f32.mrb[0].mxu0
      %v2907 = vpop.f32.mrb[0].mxu0
      %v2908 = vadd.f32 0.0, %v2907
      %v2909 = vpop.f32.mrb[0].mxu0
      %2910 = vmatprep.mubr.bf16.mxu0 0
      %2911 = vmatmul.mubr.bf16.gmra.mrb[0].mxu0 %v423
      %v2912 = vpop.f32.mrb[0].mxu0
      %v2913 = vadd.f32 0.0, %v2912
      %v2914 = vpop.f32.mrb[0].mxu0
      %v2915 = vpop.f32.mrb[0].mxu0
      %v2916 = vpop.f32.mrb[0].mxu0
      %2917 = vmatprep.mubr.bf16.mxu0 0
      %2918 = vmatmul.mubr.bf16.gmra.mrb[0].mxu0 %v424
      %v2919 = vpop.f32.mrb[0].mxu0
      %v2920 = vadd.f32 0.0, %v2919
      %v2921 = vpop.f32.mrb[0].mxu0
      %v2922 = vpop.f32.mrb[0].mxu0
      %v2923 = vadd.f32 0.0, %v2922
      %v2924 = vpop.f32.mrb[0].mxu0
      %2925 = vmatprep.mubr.bf16.mxu0 0
      %2926 = vmatmul.mubr.bf16.gmra.mrb[0].mxu0 %v425
      %v2927 = vpop.f32.mrb[0].mxu0
      %v2928 = vadd.f32 0.0, %v2927
      %v2929 = vpop.f32.mrb[0].mxu0
      %v2930 = vpop.f32.mrb[0].mxu0
      %v2931 = vpop.f32.mrb[0].mxu0
      %2932 = vmatprep.mubr.bf16.mxu0 0
      %2933 = vmatmul.mubr.bf16.gmra.mrb[0].mxu0 %v426
      %v2934 = vpop.f32.mrb[0].mxu0
      %v2935 = vadd.f32 0.0, %v2934
      %v2936 = vpop.f32.mrb[0].mxu0
      %v2937 = vpop.f32.mrb[0].mxu0
      %v2938 = vadd.f32 0.0, %v2937
      %v2939 = vpop.f32.mrb[0].mxu0
      %2940 = vmatprep.mubr.bf16.mxu0 0
      %2941 = vmatmul.mubr.bf16.gmra.mrb[0].mxu0 %v427
      %v2942 = vpop.f32.mrb[0].mxu0
      %v2943 = vadd.f32 0.0, %v2942
      %v2944 = vpop.f32.mrb[0].mxu0
      %v2945 = vpop.f32.mrb[0].mxu0
      %v2946 = vpop.f32.mrb[0].mxu0
      %2947 = vmatprep.mubr.bf16.mxu0 0
      %2948 = vmatmul.mubr.bf16.gmra.mrb[0].mxu0 %v428
      %v2949 = vpop.f32.mrb[0].mxu0
      %v2950 = vadd.f32 0.0, %v2949
      %v2951 = vpop.f32.mrb[0].mxu0
      %v2952 = vpop.f32.mrb[0].mxu0
      %v2953 = vadd.f32 0.0, %v2952
      %v2954 = vpop.f32.mrb[0].mxu0
      %2955 = vmatprep.mubr.bf16.mxu0 0
      %2956 = vmatmul.mubr.bf16.gmra.mrb[0].mxu0 %v429
      %v2957 = vpop.f32.mrb[0].mxu0
      %v2958 = vadd.f32 0.0, %v2957
      %v2959 = vpop.f32.mrb[0].mxu0
      %v2960 = vpop.f32.mrb[0].mxu0
      %v2961 = vpop.f32.mrb[0].mxu0
      %2962 = vmatprep.mubr.bf16.mxu0 0
      %2963 = vmatmul.mubr.bf16.gmra.mrb[0].mxu0 %v430
      %v2964 = vpop.f32.mrb[0].mxu0
      %v2965 = vadd.f32 0.0, %v2964
      %v2966 = vpop.f32.mrb[0].mxu0
      %v2967 = vpop.f32.mrb[0].mxu0
      %v2968 = vadd.f32 0.0, %v2967
      %v2969 = vpop.f32.mrb[0].mxu0
      %2970 = vmatprep.mubr.bf16.mxu0 0
      %2971 = vmatmul.mubr.bf16.gmra.mrb[0].mxu0 %v431
      %v2972 = vpop.f32.mrb[0].mxu0
      %v2973 = vadd.f32 0.0, %v2972
      %v2974 = vpop.f32.mrb[0].mxu0
      %v2975 = vpop.f32.mrb[0].mxu0
      %v2976 = vpop.f32.mrb[0].mxu0
      %2977 = vmatprep.mubr.bf16.mxu0 0
      %2978 = vmatmul.mubr.bf16.gmra.mrb[0].mxu0 %v432
      %v2979 = vpop.f32.mrb[0].mxu0
      %v2980 = vadd.f32 0.0, %v2979
      %v2981 = vpop.f32.mrb[0].mxu0
      %v2982 = vpop.f32.mrb[0].mxu0
      %v2983 = vadd.f32 0.0, %v2982
      %v2984 = vpop.f32.mrb[0].mxu0
      %2985 = vmatprep.mubr.bf16.mxu0 0
      %2986 = vmatmul.mubr.bf16.gmra.mrb[0].mxu0 %v433
      %v2987 = vpop.f32.mrb[0].mxu0
      %v2988 = vadd.f32 0.0, %v2987
      %v2989 = vpop.f32.mrb[0].mxu0
      %v2990 = vpop.f32.mrb[0].mxu0
      %v2991 = vpop.f32.mrb[0].mxu0
      %2992 = vmatprep.mubr.bf16.mxu0 0
      %2993 = vmatmul.mubr.bf16.gmra.mrb[0].mxu0 %v434
      %v2994 = vpop.f32.mrb[0].mxu0
      %v2995 = vadd.f32 0.0, %v2994
      %v2996 = vpop.f32.mrb[0].mxu0
      %v2997 = vpop.f32.mrb[0].mxu0
      %v2998 = vadd.f32 0.0, %v2997
      %v2999 = vpop.f32.mrb[0].mxu0
      %3000 = vmatprep.mubr.bf16.mxu0 0
      %3001 = vmatmul.mubr.bf16.gmra.mrb[0].mxu0 %v435
      %v3002 = vpop.f32.mrb[0].mxu0
      %v3003 = vadd.f32 0.0, %v3002
      %v3004 = vpop.f32.mrb[0].mxu0
      %v3005 = vpop.f32.mrb[0].mxu0
      %v3006 = vpop.f32.mrb[0].mxu0
      %3007 = vmatprep.mubr.bf16.mxu0 0
      %3008 = vmatmul.mubr.bf16.gmra.mrb[0].mxu0 %v436
      %v3009 = vpop.f32.mrb[0].mxu0
      %v3010 = vadd.f32 0.0, %v3009
      %v3011 = vpop.f32.mrb[0].mxu0
      %v3012 = vpop.f32.mrb[0].mxu0
      %v3013 = vadd.f32 0.0, %v3012
      %v3014 = vpop.f32.mrb[0].mxu0
      %3015 = vmatprep.mubr.bf16.mxu0 0
      %3016 = vmatmul.mubr.bf16.gmra.mrb[0].mxu0 %v437
      %v3017 = vpop.f32.mrb[0].mxu0
      %v3018 = vadd.f32 0.0, %v3017
      %v3019 = vpop.f32.mrb[0].mxu0
      %v3020 = vpop.f32.mrb[0].mxu0
      %v3021 = vpop.f32.mrb[0].mxu0
      %3022 = vmatprep.mubr.bf16.mxu0 0
      %3023 = vmatmul.mubr.bf16.gmra.mrb[0].mxu0 %v438
      %v3024 = vpop.f32.mrb[0].mxu0
      %v3025 = vadd.f32 0.0, %v3024
      %v3026 = vpop.f32.mrb[0].mxu0
      %v3027 = vpop.f32.mrb[0].mxu0
      %v3028 = vadd.f32 0.0, %v3027
      %v3029 = vpop.f32.mrb[0].mxu0
      %3030 = vmatprep.mubr.bf16.mxu0 0
      %3031 = vmatmul.mubr.bf16.gmra.mrb[0].mxu0 %v439
      %v3032 = vpop.f32.mrb[0].mxu0
      %v3033 = vadd.f32 0.0, %v3032
      %v3034 = vpop.f32.mrb[0].mxu0
      %v3035 = vpop.f32.mrb[0].mxu0
      %v3036 = vpop.f32.mrb[0].mxu0
      %3037 = vmatprep.mubr.bf16.mxu0 0
      %3038 = vmatmul.mubr.bf16.gmra.mrb[0].mxu0 %v440
      %v3039 = vpop.f32.mrb[0].mxu0
      %v3040 = vadd.f32 0.0, %v3039
      %v3041 = vpop.f32.mrb[0].mxu0
      %v3042 = vpop.f32.mrb[0].mxu0
      %v3043 = vadd.f32 0.0, %v3042
      %v3044 = vpop.f32.mrb[0].mxu0
      %3045 = vmatprep.mubr.bf16.mxu0 0
      %3046 = vmatmul.mubr.bf16.gmra.mrb[0].mxu0 %v441
      %v3047 = vpop.f32.mrb[0].mxu0
      %v3048 = vadd.f32 0.0, %v3047
      %v3049 = vpop.f32.mrb[0].mxu0
      %v3050 = vpop.f32.mrb[0].mxu0
      %v3051 = vpop.f32.mrb[0].mxu0
      %3052 = vmatprep.mubr.bf16.mxu0 0
      %3053 = vmatmul.mubr.bf16.gmra.mrb[0].mxu0 %v442
      %v3054 = vpop.f32.mrb[0].mxu0
      %v3055 = vadd.f32 0.0, %v3054
      %v3056 = vpop.f32.mrb[0].mxu0
      %v3057 = vpop.f32.mrb[0].mxu0
      %v3058 = vadd.f32 0.0, %v3057
      %v3059 = vpop.f32.mrb[0].mxu0
      %3060 = vmatprep.mubr.bf16.mxu0 0
      %3061 = vmatmul.mubr.bf16.gmra.mrb[0].mxu0 %v443
      %v3062 = vpop.f32.mrb[0].mxu0
      %v3063 = vadd.f32 0.0, %v3062
      %v3064 = vpop.f32.mrb[0].mxu0
      %v3065 = vpop.f32.mrb[0].mxu0
      %v3066 = vpop.f32.mrb[0].mxu0
      %3067 = vmatprep.mubr.bf16.mxu0 0
      %3068 = vmatmul.mubr.bf16.gmra.mrb[0].mxu0 %v444
      %v3069 = vpop.f32.mrb[0].mxu0
      %v3070 = vadd.f32 0.0, %v3069
      %v3071 = vpop.f32.mrb[0].mxu0
      %v3072 = vpop.f32.mrb[0].mxu0
      %v3073 = vadd.f32 0.0, %v3072
      %v3074 = vpop.f32.mrb[0].mxu0
      %3075 = vmatprep.mubr.bf16.mxu0 0
      %3076 = vmatmul.mubr.bf16.gmra.mrb[0].mxu0 %v445
      %v3077 = vpop.f32.mrb[0].mxu0
      %v3078 = vadd.f32 0.0, %v3077
      %v3079 = vpop.f32.mrb[0].mxu0
      %v3080 = vpop.f32.mrb[0].mxu0
      %v3081 = vpop.f32.mrb[0].mxu0
      %3082 = vmatprep.mubr.bf16.mxu0 0
      %3083 = vmatmul.mubr.bf16.gmra.mrb[0].mxu0 %v446
      %v3084 = vpop.f32.mrb[0].mxu0
      %v3085 = vadd.f32 0.0, %v3084
      %v3086 = vpop.f32.mrb[0].mxu0
      %v3087 = vpop.f32.mrb[0].mxu0
      %v3088 = vadd.f32 0.0, %v3087
      %v3089 = vpop.f32.mrb[0].mxu0
      %3090 = vmatprep.mubr.bf16.mxu0 0
      %3091 = vmatmul.mubr.bf16.gmra.mrb[0].mxu0 %v447
      %v3092 = vpop.f32.mrb[0].mxu0
      %v3093 = vadd.f32 0.0, %v3092
      %v3094 = vpop.f32.mrb[0].mxu0
      %v3095 = vpop.f32.mrb[0].mxu0
      %v3096 = vpop.f32.mrb[0].mxu0
      %3097 = vmatprep.mubr.bf16.mxu0 0
      %3098 = vmatmul.mubr.bf16.gmra.mrb[0].mxu0 %v1904
      %v3099 = vpop.f32.mrb[0].mxu0
      %v3100 = vadd.f32 0.0, %v3099
      %v3101 = vpop.f32.mrb[0].mxu0
      %v3102 = vpop.f32.mrb[0].mxu0
      %v3103 = vadd.f32 0.0, %v3102
      %v3104 = vpop.f32.mrb[0].mxu0
      %3105 = vmatprep.mubr.bf16.mxu0 0
      %3106 = vmatmul.mubr.bf16.gmra.mrb[0].mxu0 %v1905
      %v3107 = vpop.f32.mrb[0].mxu0
      %v3108 = vadd.f32 0.0, %v3107
      %v3109 = vpop.f32.mrb[0].mxu0
      %v3110 = vpop.f32.mrb[0].mxu0
      %v3111 = vpop.f32.mrb[0].mxu0
      %3112 = vdwg.mxu0
      %v3161 = vrot.slane %v2875, 2
      %v3162 = vrot.slane %v2878, 2
      %v3163 = vsel %vm1734, %v3161, %v3162
      %v3164 = vrot.slane %v2883, 2
      %v3165 = vsel %vm1734, %v3162, %v3164
      %v3166 = vrot.slane %v2890, 2
      %v3167 = vrot.slane %v2893, 2
      %v3168 = vsel %vm1734, %v3166, %v3167
      %v3169 = vrot.slane %v2898, 2
      %v3170 = vsel %vm1734, %v3167, %v3169
      %v3171 = vrot.slane %v2905, 2
      %v3172 = vrot.slane %v2908, 2
      %v3173 = vsel %vm1734, %v3171, %v3172
      %v3174 = vrot.slane %v2913, 2
      %v3175 = vsel %vm1734, %v3172, %v3174
      %v3176 = vrot.slane %v2920, 2
      %v3177 = vrot.slane %v2923, 2
      %v3178 = vsel %vm1734, %v3176, %v3177
      %v3179 = vrot.slane %v2928, 2
      %v3180 = vsel %vm1734, %v3177, %v3179
      %v3181 = vrot.slane %v2935, 2
      %v3182 = vrot.slane %v2938, 2
      %v3183 = vsel %vm1734, %v3181, %v3182
      %v3184 = vrot.slane %v2943, 2
      %v3185 = vsel %vm1734, %v3182, %v3184
      %v3186 = vrot.slane %v2950, 2
      %v3187 = vrot.slane %v2953, 2
      %v3188 = vsel %vm1734, %v3186, %v3187
      %v3189 = vrot.slane %v2958, 2
      %v3190 = vsel %vm1734, %v3187, %v3189
      %v3191 = vrot.slane %v2965, 2
      %v3192 = vrot.slane %v2968, 2
      %v3193 = vsel %vm1734, %v3191, %v3192
      %v3194 = vrot.slane %v2973, 2
      %v3195 = vsel %vm1734, %v3192, %v3194
      %v3196 = vrot.slane %v2980, 2
      %v3197 = vrot.slane %v2983, 2
      %v3198 = vsel %vm1734, %v3196, %v3197
      %v3199 = vrot.slane %v2988, 2
      %v3200 = vsel %vm1734, %v3197, %v3199
      %v3201 = vrot.slane %v2995, 2
      %v3202 = vrot.slane %v2998, 2
      %v3203 = vsel %vm1734, %v3201, %v3202
      %v3204 = vrot.slane %v3003, 2
      %v3205 = vsel %vm1734, %v3202, %v3204
      %v3206 = vrot.slane %v3010, 2
      %v3207 = vrot.slane %v3013, 2
      %v3208 = vsel %vm1734, %v3206, %v3207
      %v3209 = vrot.slane %v3018, 2
      %v3210 = vsel %vm1734, %v3207, %v3209
      %v3211 = vrot.slane %v3025, 2
      %v3212 = vrot.slane %v3028, 2
      %v3213 = vsel %vm1734, %v3211, %v3212
      %v3214 = vrot.slane %v3033, 2
      %v3215 = vsel %vm1734, %v3212, %v3214
      %v3216 = vrot.slane %v3040, 2
      %v3217 = vrot.slane %v3043, 2
      %v3218 = vsel %vm1734, %v3216, %v3217
      %v3219 = vrot.slane %v3048, 2
      %v3220 = vsel %vm1734, %v3217, %v3219
      %v3221 = vrot.slane %v3055, 2
      %v3222 = vrot.slane %v3058, 2
      %v3223 = vsel %vm1734, %v3221, %v3222
      %v3224 = vrot.slane %v3063, 2
      %v3225 = vsel %vm1734, %v3222, %v3224
      %v3226 = vrot.slane %v3070, 2
      %v3227 = vrot.slane %v3073, 2
      %v3228 = vsel %vm1734, %v3226, %v3227
      %v3229 = vrot.slane %v3078, 2
      %v3230 = vsel %vm1734, %v3227, %v3229
      %v3231 = vrot.slane %v3085, 2
      %v3232 = vrot.slane %v3088, 2
      %v3233 = vsel %vm1734, %v3231, %v3232
      %v3234 = vrot.slane %v3093, 2
      %v3235 = vsel %vm1734, %v3232, %v3234
      %v3236 = vrot.slane %v3100, 2
      %v3237 = vrot.slane %v3103, 2
      %v3238 = vsel %vm1734, %v3236, %v3237
      %v3239 = vrot.slane %v3108, 2
      %v3240 = vsel %vm1734, %v3237, %v3239
      %v3273 = vadd.f32 %v2743, %v3163
      %v3274 = vadd.f32 %v2744, %v3165
      %v3275 = vadd.f32 %v2745, %v3168
      %v3276 = vadd.f32 %v2746, %v3170
      %v3277 = vadd.f32 %v2747, %v3173
      %v3278 = vadd.f32 %v2748, %v3175
      %v3279 = vadd.f32 %v2749, %v3178
      %v3280 = vadd.f32 %v2750, %v3180
      %v3281 = vadd.f32 %v2751, %v3183
      %v3282 = vadd.f32 %v2752, %v3185
      %v3283 = vadd.f32 %v2753, %v3188
      %v3284 = vadd.f32 %v2754, %v3190
      %v3285 = vadd.f32 %v2755, %v3193
      %v3286 = vadd.f32 %v2756, %v3195
      %v3287 = vadd.f32 %v2757, %v3198
      %v3288 = vadd.f32 %v2758, %v3200
      %v3289 = vadd.f32 %v2759, %v3203
      %v3290 = vadd.f32 %v2760, %v3205
      %v3291 = vadd.f32 %v2761, %v3208
      %v3292 = vadd.f32 %v2762, %v3210
      %v3293 = vadd.f32 %v2763, %v3213
      %v3294 = vadd.f32 %v2764, %v3215
      %v3295 = vadd.f32 %v2765, %v3218
      %v3296 = vadd.f32 %v2766, %v3220
      %v3297 = vadd.f32 %v2767, %v3223
      %v3298 = vadd.f32 %v2768, %v3225
      %v3299 = vadd.f32 %v2769, %v3228
      %v3300 = vadd.f32 %v2770, %v3230
      %v3301 = vadd.f32 %v2771, %v3233
      %v3302 = vadd.f32 %v2772, %v3235
      %v3303 = vadd.f32 %v2773, %v3238
      %v3304 = vadd.f32 %v2774, %v3240
      %s3305 = scalar_lea.vmem %s1, 384
      %v3306 = vld [vmem:[%s3305] sm:$0xf]
      %v3307 = vld [vmem:[%s3305 + $0x4] sm:$0xf]
      %v3308 = vld [vmem:[%s3305 + $0x8] sm:$0xf]
      %v3309 = vld [vmem:[%s3305 + $0xc] sm:$0xf]
      %v3310 = vld [vmem:[%s3305 + $0x10] sm:$0xf]
      %v3311 = vld [vmem:[%s3305 + $0x14] sm:$0xf]
      %v3312 = vld [vmem:[%s3305 + $0x18] sm:$0xf]
      %v3313 = vld [vmem:[%s3305 + $0x1c] sm:$0xf]
      %v3314 = vld [vmem:[%s3305 + $0x20] sm:$0xf]
      %v3315 = vld [vmem:[%s3305 + $0x24] sm:$0xf]
      %v3316 = vld [vmem:[%s3305 + $0x28] sm:$0xf]
      %v3317 = vld [vmem:[%s3305 + $0x2c] sm:$0xf]
      %v3318 = vld [vmem:[%s3305 + $0x30] sm:$0xf]
      %v3319 = vld [vmem:[%s3305 + $0x34] sm:$0xf]
      %v3320 = vld [vmem:[%s3305 + $0x38] sm:$0xf]
      %v3321 = vld [vmem:[%s3305 + $0x3c] sm:$0xf]
      %v3326 = vunpack.c.l.b16 %v268
      %v3327 = vunpack.c.l.b16 %v269
      %v3328 = vunpack.c.l.b16 %v270
      %v3329 = vunpack.c.l.b16 %v271
      %v3330 = vpack.c.b16 %v3327, %v3326
      %v3331 = vpack.c.b16 %v3329, %v3328
      %v3350 = vunpack.c.l.b16 %v3306
      %v3351 = vunpack.c.l.b16 %v3307
      %v3352 = vunpack.c.l.b16 %v3308
      %v3353 = vunpack.c.l.b16 %v3309
      %v3354 = vunpack.c.l.b16 %v3310
      %v3355 = vunpack.c.l.b16 %v3311
      %v3356 = vunpack.c.l.b16 %v3312
      %v3357 = vunpack.c.l.b16 %v3313
      %v3358 = vunpack.c.l.b16 %v3314
      %v3359 = vunpack.c.l.b16 %v3315
      %v3360 = vunpack.c.l.b16 %v3316
      %v3361 = vunpack.c.l.b16 %v3317
      %v3362 = vunpack.c.l.b16 %v3318
      %v3363 = vunpack.c.l.b16 %v3319
      %v3364 = vunpack.c.l.b16 %v3320
      %v3365 = vunpack.c.l.b16 %v3321
      %v3366 = vpack.c.b16 %v3351, %v3350
      %v3367 = vpack.c.b16 %v3353, %v3352
      %v3368 = vpack.c.b16 %v3355, %v3354
      %v3369 = vpack.c.b16 %v3357, %v3356
      %v3370 = vpack.c.b16 %v3359, %v3358
      %v3371 = vpack.c.b16 %v3361, %v3360
      %v3372 = vpack.c.b16 %v3363, %v3362
      %v3373 = vpack.c.b16 %v3365, %v3364
      %3382 = vmatprep.subr.bf16.mxu0 0
      %3383 = vmatpush1.bf16.msra.mxu0 %v3366
      %3384 = vmatprep.subr.bf16.mxu0 0
      %3385 = vmatpush1.bf16.msra.mxu0 %v3367
      %3386 = vmatprep.subr.bf16.mxu0 0
      %3387 = vmatpush1.bf16.msra.mxu0 %v3368
      %3388 = vmatprep.subr.bf16.mxu0 0
      %3389 = vmatpush1.bf16.msra.mxu0 %v3369
      %3390 = vmatprep.subr.bf16.mxu0 0
      %3391 = vmatpush1.bf16.msra.mxu0 %v3370
      %3392 = vmatprep.subr.bf16.mxu0 0
      %3393 = vmatpush1.bf16.msra.mxu0 %v3371
      %3394 = vmatprep.subr.bf16.mxu0 0
      %3395 = vmatpush1.bf16.msra.mxu0 %v3372
      %3396 = vmatprep.subr.bf16.mxu0 0
      %3397 = vmatpush1.bf16.msra.mxu0 %v3373
      %3398 = vmatprep.subr.bf16.mxu0 0
      %3399 = vmatpush1.bf16.msra.mxu0 0
      %3400 = vmatprep.subr.bf16.mxu0 0
      %3401 = vmatpush1.bf16.msra.mxu0 0
      %3402 = vmatprep.subr.bf16.mxu0 0
      %3403 = vmatpush1.bf16.msra.mxu0 0
      %3404 = vmatprep.subr.bf16.mxu0 0
      %3405 = vmatpush1.bf16.msra.mxu0 0
      %3406 = vmatprep.subr.bf16.mxu0 0
      %3407 = vmatpush1.bf16.msra.mxu0 0
      %3408 = vmatprep.subr.bf16.mxu0 0
      %3409 = vmatpush1.bf16.msra.mxu0 0
      %3410 = vmatprep.subr.bf16.mxu0 0
      %3411 = vmatpush1.bf16.msra.mxu0 0
      %3412 = vmatprep.subr.bf16.mxu0 0
      %3413 = vmatpush1.bf16.msra.mxu0 0
      %3414 = vmatprep.mubr.bf16.mxu0 0
      %3415 = vmatmul.mubr.bf16.gmra.mrb[0].mxu0 %v420
      %v3416 = vpop.f32.mrb[0].mxu0
      %v3417 = vadd.f32 0.0, %v3416
      %v3418 = vpop.f32.mrb[0].mxu0
      %v3419 = vpop.f32.mrb[0].mxu0
      %v3420 = vadd.f32 0.0, %v3419
      %v3421 = vpop.f32.mrb[0].mxu0
      %3422 = vmatprep.mubr.bf16.mxu0 0
      %3423 = vmatmul.mubr.bf16.gmra.mrb[0].mxu0 %v421
      %v3424 = vpop.f32.mrb[0].mxu0
      %v3425 = vpop.f32.mrb[0].mxu0
      %v3426 = vpop.f32.mrb[0].mxu0
      %v3427 = vpop.f32.mrb[0].mxu0
      %3428 = vmatprep.mubr.bf16.mxu0 0
      %3429 = vmatmul.mubr.bf16.gmra.mrb[0].mxu0 %v422
      %v3430 = vpop.f32.mrb[0].mxu0
      %v3431 = vadd.f32 0.0, %v3430
      %v3432 = vpop.f32.mrb[0].mxu0
      %v3433 = vpop.f32.mrb[0].mxu0
      %v3434 = vadd.f32 0.0, %v3433
      %v3435 = vpop.f32.mrb[0].mxu0
      %3436 = vmatprep.mubr.bf16.mxu0 0
      %3437 = vmatmul.mubr.bf16.gmra.mrb[0].mxu0 %v423
      %v3438 = vpop.f32.mrb[0].mxu0
      %v3439 = vpop.f32.mrb[0].mxu0
      %v3440 = vpop.f32.mrb[0].mxu0
      %v3441 = vpop.f32.mrb[0].mxu0
      %3442 = vmatprep.mubr.bf16.mxu0 0
      %3443 = vmatmul.mubr.bf16.gmra.mrb[0].mxu0 %v424
      %v3444 = vpop.f32.mrb[0].mxu0
      %v3445 = vadd.f32 0.0, %v3444
      %v3446 = vpop.f32.mrb[0].mxu0
      %v3447 = vpop.f32.mrb[0].mxu0
      %v3448 = vadd.f32 0.0, %v3447
      %v3449 = vpop.f32.mrb[0].mxu0
      %3450 = vmatprep.mubr.bf16.mxu0 0
      %3451 = vmatmul.mubr.bf16.gmra.mrb[0].mxu0 %v425
      %v3452 = vpop.f32.mrb[0].mxu0
      %v3453 = vpop.f32.mrb[0].mxu0
      %v3454 = vpop.f32.mrb[0].mxu0
      %v3455 = vpop.f32.mrb[0].mxu0
      %3456 = vmatprep.mubr.bf16.mxu0 0
      %3457 = vmatmul.mubr.bf16.gmra.mrb[0].mxu0 %v426
      %v3458 = vpop.f32.mrb[0].mxu0
      %v3459 = vadd.f32 0.0, %v3458
      %v3460 = vpop.f32.mrb[0].mxu0
      %v3461 = vpop.f32.mrb[0].mxu0
      %v3462 = vadd.f32 0.0, %v3461
      %v3463 = vpop.f32.mrb[0].mxu0
      %3464 = vmatprep.mubr.bf16.mxu0 0
      %3465 = vmatmul.mubr.bf16.gmra.mrb[0].mxu0 %v427
      %v3466 = vpop.f32.mrb[0].mxu0
      %v3467 = vpop.f32.mrb[0].mxu0
      %v3468 = vpop.f32.mrb[0].mxu0
      %v3469 = vpop.f32.mrb[0].mxu0
      %3470 = vmatprep.mubr.bf16.mxu0 0
      %3471 = vmatmul.mubr.bf16.gmra.mrb[0].mxu0 %v428
      %v3472 = vpop.f32.mrb[0].mxu0
      %v3473 = vadd.f32 0.0, %v3472
      %v3474 = vpop.f32.mrb[0].mxu0
      %v3475 = vpop.f32.mrb[0].mxu0
      %v3476 = vadd.f32 0.0, %v3475
      %v3477 = vpop.f32.mrb[0].mxu0
      %3478 = vmatprep.mubr.bf16.mxu0 0
      %3479 = vmatmul.mubr.bf16.gmra.mrb[0].mxu0 %v429
      %v3480 = vpop.f32.mrb[0].mxu0
      %v3481 = vpop.f32.mrb[0].mxu0
      %v3482 = vpop.f32.mrb[0].mxu0
      %v3483 = vpop.f32.mrb[0].mxu0
      %3484 = vmatprep.mubr.bf16.mxu0 0
      %3485 = vmatmul.mubr.bf16.gmra.mrb[0].mxu0 %v430
      %v3486 = vpop.f32.mrb[0].mxu0
      %v3487 = vadd.f32 0.0, %v3486
      %v3488 = vpop.f32.mrb[0].mxu0
      %v3489 = vpop.f32.mrb[0].mxu0
      %v3490 = vadd.f32 0.0, %v3489
      %v3491 = vpop.f32.mrb[0].mxu0
      %3492 = vmatprep.mubr.bf16.mxu0 0
      %3493 = vmatmul.mubr.bf16.gmra.mrb[0].mxu0 %v431
      %v3494 = vpop.f32.mrb[0].mxu0
      %v3495 = vpop.f32.mrb[0].mxu0
      %v3496 = vpop.f32.mrb[0].mxu0
      %v3497 = vpop.f32.mrb[0].mxu0
      %3498 = vmatprep.mubr.bf16.mxu0 0
      %3499 = vmatmul.mubr.bf16.gmra.mrb[0].mxu0 %v432
      %v3500 = vpop.f32.mrb[0].mxu0
      %v3501 = vadd.f32 0.0, %v3500
      %v3502 = vpop.f32.mrb[0].mxu0
      %v3503 = vpop.f32.mrb[0].mxu0
      %v3504 = vadd.f32 0.0, %v3503
      %v3505 = vpop.f32.mrb[0].mxu0
      %3506 = vmatprep.mubr.bf16.mxu0 0
      %3507 = vmatmul.mubr.bf16.gmra.mrb[0].mxu0 %v433
      %v3508 = vpop.f32.mrb[0].mxu0
      %v3509 = vpop.f32.mrb[0].mxu0
      %v3510 = vpop.f32.mrb[0].mxu0
      %v3511 = vpop.f32.mrb[0].mxu0
      %3512 = vmatprep.mubr.bf16.mxu0 0
      %3513 = vmatmul.mubr.bf16.gmra.mrb[0].mxu0 %v434
      %v3514 = vpop.f32.mrb[0].mxu0
      %v3515 = vadd.f32 0.0, %v3514
      %v3516 = vpop.f32.mrb[0].mxu0
      %v3517 = vpop.f32.mrb[0].mxu0
      %v3518 = vadd.f32 0.0, %v3517
      %v3519 = vpop.f32.mrb[0].mxu0
      %3520 = vmatprep.mubr.bf16.mxu0 0
      %3521 = vmatmul.mubr.bf16.gmra.mrb[0].mxu0 %v435
      %v3522 = vpop.f32.mrb[0].mxu0
      %v3523 = vpop.f32.mrb[0].mxu0
      %v3524 = vpop.f32.mrb[0].mxu0
      %v3525 = vpop.f32.mrb[0].mxu0
      %3526 = vmatprep.mubr.bf16.mxu0 0
      %3527 = vmatmul.mubr.bf16.gmra.mrb[0].mxu0 %v436
      %v3528 = vpop.f32.mrb[0].mxu0
      %v3529 = vadd.f32 0.0, %v3528
      %v3530 = vpop.f32.mrb[0].mxu0
      %v3531 = vpop.f32.mrb[0].mxu0
      %v3532 = vadd.f32 0.0, %v3531
      %v3533 = vpop.f32.mrb[0].mxu0
      %3534 = vmatprep.mubr.bf16.mxu0 0
      %3535 = vmatmul.mubr.bf16.gmra.mrb[0].mxu0 %v437
      %v3536 = vpop.f32.mrb[0].mxu0
      %v3537 = vpop.f32.mrb[0].mxu0
      %v3538 = vpop.f32.mrb[0].mxu0
      %v3539 = vpop.f32.mrb[0].mxu0
      %3540 = vmatprep.mubr.bf16.mxu0 0
      %3541 = vmatmul.mubr.bf16.gmra.mrb[0].mxu0 %v438
      %v3542 = vpop.f32.mrb[0].mxu0
      %v3543 = vadd.f32 0.0, %v3542
      %v3544 = vpop.f32.mrb[0].mxu0
      %v3545 = vpop.f32.mrb[0].mxu0
      %v3546 = vadd.f32 0.0, %v3545
      %v3547 = vpop.f32.mrb[0].mxu0
      %3548 = vmatprep.mubr.bf16.mxu0 0
      %3549 = vmatmul.mubr.bf16.gmra.mrb[0].mxu0 %v439
      %v3550 = vpop.f32.mrb[0].mxu0
      %v3551 = vpop.f32.mrb[0].mxu0
      %v3552 = vpop.f32.mrb[0].mxu0
      %v3553 = vpop.f32.mrb[0].mxu0
      %3554 = vmatprep.mubr.bf16.mxu0 0
      %3555 = vmatmul.mubr.bf16.gmra.mrb[0].mxu0 %v440
      %v3556 = vpop.f32.mrb[0].mxu0
      %v3557 = vadd.f32 0.0, %v3556
      %v3558 = vpop.f32.mrb[0].mxu0
      %v3559 = vpop.f32.mrb[0].mxu0
      %v3560 = vadd.f32 0.0, %v3559
      %v3561 = vpop.f32.mrb[0].mxu0
      %3562 = vmatprep.mubr.bf16.mxu0 0
      %3563 = vmatmul.mubr.bf16.gmra.mrb[0].mxu0 %v441
      %v3564 = vpop.f32.mrb[0].mxu0
      %v3565 = vpop.f32.mrb[0].mxu0
      %v3566 = vpop.f32.mrb[0].mxu0
      %v3567 = vpop.f32.mrb[0].mxu0
      %3568 = vmatprep.mubr.bf16.mxu0 0
      %3569 = vmatmul.mubr.bf16.gmra.mrb[0].mxu0 %v442
      %v3570 = vpop.f32.mrb[0].mxu0
      %v3571 = vadd.f32 0.0, %v3570
      %v3572 = vpop.f32.mrb[0].mxu0
      %v3573 = vpop.f32.mrb[0].mxu0
      %v3574 = vadd.f32 0.0, %v3573
      %v3575 = vpop.f32.mrb[0].mxu0
      %3576 = vmatprep.mubr.bf16.mxu0 0
      %3577 = vmatmul.mubr.bf16.gmra.mrb[0].mxu0 %v443
      %v3578 = vpop.f32.mrb[0].mxu0
      %v3579 = vpop.f32.mrb[0].mxu0
      %v3580 = vpop.f32.mrb[0].mxu0
      %v3581 = vpop.f32.mrb[0].mxu0
      %3582 = vmatprep.mubr.bf16.mxu0 0
      %3583 = vmatmul.mubr.bf16.gmra.mrb[0].mxu0 %v444
      %v3584 = vpop.f32.mrb[0].mxu0
      %v3585 = vadd.f32 0.0, %v3584
      %v3586 = vpop.f32.mrb[0].mxu0
      %v3587 = vpop.f32.mrb[0].mxu0
      %v3588 = vadd.f32 0.0, %v3587
      %v3589 = vpop.f32.mrb[0].mxu0
      %3590 = vmatprep.mubr.bf16.mxu0 0
      %3591 = vmatmul.mubr.bf16.gmra.mrb[0].mxu0 %v445
      %v3592 = vpop.f32.mrb[0].mxu0
      %v3593 = vpop.f32.mrb[0].mxu0
      %v3594 = vpop.f32.mrb[0].mxu0
      %v3595 = vpop.f32.mrb[0].mxu0
      %3596 = vmatprep.mubr.bf16.mxu0 0
      %3597 = vmatmul.mubr.bf16.gmra.mrb[0].mxu0 %v446
      %v3598 = vpop.f32.mrb[0].mxu0
      %v3599 = vadd.f32 0.0, %v3598
      %v3600 = vpop.f32.mrb[0].mxu0
      %v3601 = vpop.f32.mrb[0].mxu0
      %v3602 = vadd.f32 0.0, %v3601
      %v3603 = vpop.f32.mrb[0].mxu0
      %3604 = vmatprep.mubr.bf16.mxu0 0
      %3605 = vmatmul.mubr.bf16.gmra.mrb[0].mxu0 %v447
      %v3606 = vpop.f32.mrb[0].mxu0
      %v3607 = vpop.f32.mrb[0].mxu0
      %v3608 = vpop.f32.mrb[0].mxu0
      %v3609 = vpop.f32.mrb[0].mxu0
      %3610 = vmatprep.mubr.bf16.mxu0 0
      %3611 = vmatmul.mubr.bf16.gmra.mrb[0].mxu0 %v1904
      %v3612 = vpop.f32.mrb[0].mxu0
      %v3613 = vadd.f32 0.0, %v3612
      %v3614 = vpop.f32.mrb[0].mxu0
      %v3615 = vpop.f32.mrb[0].mxu0
      %v3616 = vadd.f32 0.0, %v3615
      %v3617 = vpop.f32.mrb[0].mxu0
      %3618 = vmatprep.mubr.bf16.mxu0 0
      %3619 = vmatmul.mubr.bf16.gmra.mrb[0].mxu0 %v1905
      %v3620 = vpop.f32.mrb[0].mxu0
      %v3621 = vpop.f32.mrb[0].mxu0
      %v3622 = vpop.f32.mrb[0].mxu0
      %v3623 = vpop.f32.mrb[0].mxu0
      %3624 = vmatprep.mubr.bf16.mxu0 0
      %3625 = vmatmul.mubr.bf16.gmra.mrb[0].mxu0 %v3330
      %v3626 = vpop.f32.mrb[0].mxu0
      %v3627 = vadd.f32 0.0, %v3626
      %v3628 = vpop.f32.mrb[0].mxu0
      %v3629 = vpop.f32.mrb[0].mxu0
      %v3630 = vadd.f32 0.0, %v3629
      %v3631 = vpop.f32.mrb[0].mxu0
      %3632 = vmatprep.mubr.bf16.mxu0 0
      %3633 = vmatmul.mubr.bf16.gmra.mrb[0].mxu0 %v3331
      %v3634 = vpop.f32.mrb[0].mxu0
      %v3635 = vpop.f32.mrb[0].mxu0
      %v3636 = vpop.f32.mrb[0].mxu0
      %v3637 = vpop.f32.mrb[0].mxu0
      %3638 = vdwg.mxu0
      %v3639 = vadd.f32 %v3273, %v3417
      %v3640 = vadd.f32 %v3274, %v3420
      %v3641 = vadd.f32 %v3275, %v3431
      %v3642 = vadd.f32 %v3276, %v3434
      %v3643 = vadd.f32 %v3277, %v3445
      %v3644 = vadd.f32 %v3278, %v3448
      %v3645 = vadd.f32 %v3279, %v3459
      %v3646 = vadd.f32 %v3280, %v3462
      %v3647 = vadd.f32 %v3281, %v3473
      %v3648 = vadd.f32 %v3282, %v3476
      %v3649 = vadd.f32 %v3283, %v3487
      %v3650 = vadd.f32 %v3284, %v3490
      %v3651 = vadd.f32 %v3285, %v3501
      %v3652 = vadd.f32 %v3286, %v3504
      %v3653 = vadd.f32 %v3287, %v3515
      %v3654 = vadd.f32 %v3288, %v3518
      %v3655 = vadd.f32 %v3289, %v3529
      %v3656 = vadd.f32 %v3290, %v3532
      %v3657 = vadd.f32 %v3291, %v3543
      %v3658 = vadd.f32 %v3292, %v3546
      %v3659 = vadd.f32 %v3293, %v3557
      %v3660 = vadd.f32 %v3294, %v3560
      %v3661 = vadd.f32 %v3295, %v3571
      %v3662 = vadd.f32 %v3296, %v3574
      %v3663 = vadd.f32 %v3297, %v3585
      %v3664 = vadd.f32 %v3298, %v3588
      %v3665 = vadd.f32 %v3299, %v3599
      %v3666 = vadd.f32 %v3300, %v3602
      %v3667 = vadd.f32 %v3301, %v3613
      %v3668 = vadd.f32 %v3302, %v3616
      %v3669 = vadd.f32 %v3303, %v3627
      %v3670 = vadd.f32 %v3304, %v3630
      %s3671 = scalar_lea.vmem %s1, 448
      %v3672 = vld [vmem:[%s3671] sm:$0xf]
      %v3673 = vld [vmem:[%s3671 + $0x4] sm:$0xf]
      %v3674 = vld [vmem:[%s3671 + $0x8] sm:$0xf]
      %v3675 = vld [vmem:[%s3671 + $0xc] sm:$0xf]
      %v3676 = vld [vmem:[%s3671 + $0x10] sm:$0xf]
      %v3677 = vld [vmem:[%s3671 + $0x14] sm:$0xf]
      %v3678 = vld [vmem:[%s3671 + $0x18] sm:$0xf]
      %v3679 = vld [vmem:[%s3671 + $0x1c] sm:$0xf]
      %v3680 = vld [vmem:[%s3671 + $0x20] sm:$0xf]
      %v3681 = vld [vmem:[%s3671 + $0x24] sm:$0xf]
      %v3682 = vld [vmem:[%s3671 + $0x28] sm:$0xf]
      %v3683 = vld [vmem:[%s3671 + $0x2c] sm:$0xf]
      %v3684 = vld [vmem:[%s3671 + $0x30] sm:$0xf]
      %v3685 = vld [vmem:[%s3671 + $0x34] sm:$0xf]
      %v3686 = vld [vmem:[%s3671 + $0x38] sm:$0xf]
      %v3687 = vld [vmem:[%s3671 + $0x3c] sm:$0xf]
      %v3704 = vunpack.c.l.b16 %v3672
      %v3705 = vunpack.c.l.b16 %v3673
      %v3706 = vunpack.c.l.b16 %v3674
      %v3707 = vunpack.c.l.b16 %v3675
      %v3708 = vunpack.c.l.b16 %v3676
      %v3709 = vunpack.c.l.b16 %v3677
      %v3710 = vunpack.c.l.b16 %v3678
      %v3711 = vunpack.c.l.b16 %v3679
      %v3712 = vunpack.c.l.b16 %v3680
      %v3713 = vunpack.c.l.b16 %v3681
      %v3714 = vunpack.c.l.b16 %v3682
      %v3715 = vunpack.c.l.b16 %v3683
      %v3716 = vunpack.c.l.b16 %v3684
      %v3717 = vunpack.c.l.b16 %v3685
      %v3718 = vunpack.c.l.b16 %v3686
      %v3719 = vunpack.c.l.b16 %v3687
      %v3720 = vpack.c.b16 %v3705, %v3704
      %v3721 = vpack.c.b16 %v3707, %v3706
      %v3722 = vpack.c.b16 %v3709, %v3708
      %v3723 = vpack.c.b16 %v3711, %v3710
      %v3724 = vpack.c.b16 %v3713, %v3712
      %v3725 = vpack.c.b16 %v3715, %v3714
      %v3726 = vpack.c.b16 %v3717, %v3716
      %v3727 = vpack.c.b16 %v3719, %v3718
      %3736 = vmatprep.subr.bf16.mxu0 0
      %3737 = vmatpush1.bf16.msra.mxu0 %v3720
      %3738 = vmatprep.subr.bf16.mxu0 0
      %3739 = vmatpush1.bf16.msra.mxu0 %v3721
      %3740 = vmatprep.subr.bf16.mxu0 0
      %3741 = vmatpush1.bf16.msra.mxu0 %v3722
      %3742 = vmatprep.subr.bf16.mxu0 0
      %3743 = vmatpush1.bf16.msra.mxu0 %v3723
      %3744 = vmatprep.subr.bf16.mxu0 0
      %3745 = vmatpush1.bf16.msra.mxu0 %v3724
      %3746 = vmatprep.subr.bf16.mxu0 0
      %3747 = vmatpush1.bf16.msra.mxu0 %v3725
      %3748 = vmatprep.subr.bf16.mxu0 0
      %3749 = vmatpush1.bf16.msra.mxu0 %v3726
      %3750 = vmatprep.subr.bf16.mxu0 0
      %3751 = vmatpush1.bf16.msra.mxu0 %v3727
      %3752 = vmatprep.subr.bf16.mxu0 0
      %3753 = vmatpush1.bf16.msra.mxu0 0
      %3754 = vmatprep.subr.bf16.mxu0 0
      %3755 = vmatpush1.bf16.msra.mxu0 0
      %3756 = vmatprep.subr.bf16.mxu0 0
      %3757 = vmatpush1.bf16.msra.mxu0 0
      %3758 = vmatprep.subr.bf16.mxu0 0
      %3759 = vmatpush1.bf16.msra.mxu0 0
      %3760 = vmatprep.subr.bf16.mxu0 0
      %3761 = vmatpush1.bf16.msra.mxu0 0
      %3762 = vmatprep.subr.bf16.mxu0 0
      %3763 = vmatpush1.bf16.msra.mxu0 0
      %3764 = vmatprep.subr.bf16.mxu0 0
      %3765 = vmatpush1.bf16.msra.mxu0 0
      %3766 = vmatprep.subr.bf16.mxu0 0
      %3767 = vmatpush1.bf16.msra.mxu0 0
      %3768 = vmatprep.mubr.bf16.mxu0 0
      %3769 = vmatmul.mubr.bf16.gmra.mrb[0].mxu0 %v420
      %v3770 = vpop.f32.mrb[0].mxu0
      %v3771 = vadd.f32 0.0, %v3770
      %v3772 = vpop.f32.mrb[0].mxu0
      %v3773 = vpop.f32.mrb[0].mxu0
      %v3774 = vadd.f32 0.0, %v3773
      %v3775 = vpop.f32.mrb[0].mxu0
      %3776 = vmatprep.mubr.bf16.mxu0 0
      %3777 = vmatmul.mubr.bf16.gmra.mrb[0].mxu0 %v421
      %v3778 = vpop.f32.mrb[0].mxu0
      %v3779 = vadd.f32 0.0, %v3778
      %v3780 = vpop.f32.mrb[0].mxu0
      %v3781 = vpop.f32.mrb[0].mxu0
      %v3782 = vpop.f32.mrb[0].mxu0
      %3783 = vmatprep.mubr.bf16.mxu0 0
      %3784 = vmatmul.mubr.bf16.gmra.mrb[0].mxu0 %v422
      %v3785 = vpop.f32.mrb[0].mxu0
      %v3786 = vadd.f32 0.0, %v3785
      %v3787 = vpop.f32.mrb[0].mxu0
      %v3788 = vpop.f32.mrb[0].mxu0
      %v3789 = vadd.f32 0.0, %v3788
      %v3790 = vpop.f32.mrb[0].mxu0
      %3791 = vmatprep.mubr.bf16.mxu0 0
      %3792 = vmatmul.mubr.bf16.gmra.mrb[0].mxu0 %v423
      %v3793 = vpop.f32.mrb[0].mxu0
      %v3794 = vadd.f32 0.0, %v3793
      %v3795 = vpop.f32.mrb[0].mxu0
      %v3796 = vpop.f32.mrb[0].mxu0
      %v3797 = vpop.f32.mrb[0].mxu0
      %3798 = vmatprep.mubr.bf16.mxu0 0
      %3799 = vmatmul.mubr.bf16.gmra.mrb[0].mxu0 %v424
      %v3800 = vpop.f32.mrb[0].mxu0
      %v3801 = vadd.f32 0.0, %v3800
      %v3802 = vpop.f32.mrb[0].mxu0
      %v3803 = vpop.f32.mrb[0].mxu0
      %v3804 = vadd.f32 0.0, %v3803
      %v3805 = vpop.f32.mrb[0].mxu0
      %3806 = vmatprep.mubr.bf16.mxu0 0
      %3807 = vmatmul.mubr.bf16.gmra.mrb[0].mxu0 %v425
      %v3808 = vpop.f32.mrb[0].mxu0
      %v3809 = vadd.f32 0.0, %v3808
      %v3810 = vpop.f32.mrb[0].mxu0
      %v3811 = vpop.f32.mrb[0].mxu0
      %v3812 = vpop.f32.mrb[0].mxu0
      %3813 = vmatprep.mubr.bf16.mxu0 0
      %3814 = vmatmul.mubr.bf16.gmra.mrb[0].mxu0 %v426
      %v3815 = vpop.f32.mrb[0].mxu0
      %v3816 = vadd.f32 0.0, %v3815
      %v3817 = vpop.f32.mrb[0].mxu0
      %v3818 = vpop.f32.mrb[0].mxu0
      %v3819 = vadd.f32 0.0, %v3818
      %v3820 = vpop.f32.mrb[0].mxu0
      %3821 = vmatprep.mubr.bf16.mxu0 0
      %3822 = vmatmul.mubr.bf16.gmra.mrb[0].mxu0 %v427
      %v3823 = vpop.f32.mrb[0].mxu0
      %v3824 = vadd.f32 0.0, %v3823
      %v3825 = vpop.f32.mrb[0].mxu0
      %v3826 = vpop.f32.mrb[0].mxu0
      %v3827 = vpop.f32.mrb[0].mxu0
      %3828 = vmatprep.mubr.bf16.mxu0 0
      %3829 = vmatmul.mubr.bf16.gmra.mrb[0].mxu0 %v428
      %v3830 = vpop.f32.mrb[0].mxu0
      %v3831 = vadd.f32 0.0, %v3830
      %v3832 = vpop.f32.mrb[0].mxu0
      %v3833 = vpop.f32.mrb[0].mxu0
      %v3834 = vadd.f32 0.0, %v3833
      %v3835 = vpop.f32.mrb[0].mxu0
      %3836 = vmatprep.mubr.bf16.mxu0 0
      %3837 = vmatmul.mubr.bf16.gmra.mrb[0].mxu0 %v429
      %v3838 = vpop.f32.mrb[0].mxu0
      %v3839 = vadd.f32 0.0, %v3838
      %v3840 = vpop.f32.mrb[0].mxu0
      %v3841 = vpop.f32.mrb[0].mxu0
      %v3842 = vpop.f32.mrb[0].mxu0
      %3843 = vmatprep.mubr.bf16.mxu0 0
      %3844 = vmatmul.mubr.bf16.gmra.mrb[0].mxu0 %v430
      %v3845 = vpop.f32.mrb[0].mxu0
      %v3846 = vadd.f32 0.0, %v3845
      %v3847 = vpop.f32.mrb[0].mxu0
      %v3848 = vpop.f32.mrb[0].mxu0
      %v3849 = vadd.f32 0.0, %v3848
      %v3850 = vpop.f32.mrb[0].mxu0
      %3851 = vmatprep.mubr.bf16.mxu0 0
      %3852 = vmatmul.mubr.bf16.gmra.mrb[0].mxu0 %v431
      %v3853 = vpop.f32.mrb[0].mxu0
      %v3854 = vadd.f32 0.0, %v3853
      %v3855 = vpop.f32.mrb[0].mxu0
      %v3856 = vpop.f32.mrb[0].mxu0
      %v3857 = vpop.f32.mrb[0].mxu0
      %3858 = vmatprep.mubr.bf16.mxu0 0
      %3859 = vmatmul.mubr.bf16.gmra.mrb[0].mxu0 %v432
      %v3860 = vpop.f32.mrb[0].mxu0
      %v3861 = vadd.f32 0.0, %v3860
      %v3862 = vpop.f32.mrb[0].mxu0
      %v3863 = vpop.f32.mrb[0].mxu0
      %v3864 = vadd.f32 0.0, %v3863
      %v3865 = vpop.f32.mrb[0].mxu0
      %3866 = vmatprep.mubr.bf16.mxu0 0
      %3867 = vmatmul.mubr.bf16.gmra.mrb[0].mxu0 %v433
      %v3868 = vpop.f32.mrb[0].mxu0
      %v3869 = vadd.f32 0.0, %v3868
      %v3870 = vpop.f32.mrb[0].mxu0
      %v3871 = vpop.f32.mrb[0].mxu0
      %v3872 = vpop.f32.mrb[0].mxu0
      %3873 = vmatprep.mubr.bf16.mxu0 0
      %3874 = vmatmul.mubr.bf16.gmra.mrb[0].mxu0 %v434
      %v3875 = vpop.f32.mrb[0].mxu0
      %v3876 = vadd.f32 0.0, %v3875
      %v3877 = vpop.f32.mrb[0].mxu0
      %v3878 = vpop.f32.mrb[0].mxu0
      %v3879 = vadd.f32 0.0, %v3878
      %v3880 = vpop.f32.mrb[0].mxu0
      %3881 = vmatprep.mubr.bf16.mxu0 0
      %3882 = vmatmul.mubr.bf16.gmra.mrb[0].mxu0 %v435
      %v3883 = vpop.f32.mrb[0].mxu0
      %v3884 = vadd.f32 0.0, %v3883
      %v3885 = vpop.f32.mrb[0].mxu0
      %v3886 = vpop.f32.mrb[0].mxu0
      %v3887 = vpop.f32.mrb[0].mxu0
      %3888 = vmatprep.mubr.bf16.mxu0 0
      %3889 = vmatmul.mubr.bf16.gmra.mrb[0].mxu0 %v436
      %v3890 = vpop.f32.mrb[0].mxu0
      %v3891 = vadd.f32 0.0, %v3890
      %v3892 = vpop.f32.mrb[0].mxu0
      %v3893 = vpop.f32.mrb[0].mxu0
      %v3894 = vadd.f32 0.0, %v3893
      %v3895 = vpop.f32.mrb[0].mxu0
      %3896 = vmatprep.mubr.bf16.mxu0 0
      %3897 = vmatmul.mubr.bf16.gmra.mrb[0].mxu0 %v437
      %v3898 = vpop.f32.mrb[0].mxu0
      %v3899 = vadd.f32 0.0, %v3898
      %v3900 = vpop.f32.mrb[0].mxu0
      %v3901 = vpop.f32.mrb[0].mxu0
      %v3902 = vpop.f32.mrb[0].mxu0
      %3903 = vmatprep.mubr.bf16.mxu0 0
      %3904 = vmatmul.mubr.bf16.gmra.mrb[0].mxu0 %v438
      %v3905 = vpop.f32.mrb[0].mxu0
      %v3906 = vadd.f32 0.0, %v3905
      %v3907 = vpop.f32.mrb[0].mxu0
      %v3908 = vpop.f32.mrb[0].mxu0
      %v3909 = vadd.f32 0.0, %v3908
      %v3910 = vpop.f32.mrb[0].mxu0
      %3911 = vmatprep.mubr.bf16.mxu0 0
      %3912 = vmatmul.mubr.bf16.gmra.mrb[0].mxu0 %v439
      %v3913 = vpop.f32.mrb[0].mxu0
      %v3914 = vadd.f32 0.0, %v3913
      %v3915 = vpop.f32.mrb[0].mxu0
      %v3916 = vpop.f32.mrb[0].mxu0
      %v3917 = vpop.f32.mrb[0].mxu0
      %3918 = vmatprep.mubr.bf16.mxu0 0
      %3919 = vmatmul.mubr.bf16.gmra.mrb[0].mxu0 %v440
      %v3920 = vpop.f32.mrb[0].mxu0
      %v3921 = vadd.f32 0.0, %v3920
      %v3922 = vpop.f32.mrb[0].mxu0
      %v3923 = vpop.f32.mrb[0].mxu0
      %v3924 = vadd.f32 0.0, %v3923
      %v3925 = vpop.f32.mrb[0].mxu0
      %3926 = vmatprep.mubr.bf16.mxu0 0
      %3927 = vmatmul.mubr.bf16.gmra.mrb[0].mxu0 %v441
      %v3928 = vpop.f32.mrb[0].mxu0
      %v3929 = vadd.f32 0.0, %v3928
      %v3930 = vpop.f32.mrb[0].mxu0
      %v3931 = vpop.f32.mrb[0].mxu0
      %v3932 = vpop.f32.mrb[0].mxu0
      %3933 = vmatprep.mubr.bf16.mxu0 0
      %3934 = vmatmul.mubr.bf16.gmra.mrb[0].mxu0 %v442
      %v3935 = vpop.f32.mrb[0].mxu0
      %v3936 = vadd.f32 0.0, %v3935
      %v3937 = vpop.f32.mrb[0].mxu0
      %v3938 = vpop.f32.mrb[0].mxu0
      %v3939 = vadd.f32 0.0, %v3938
      %v3940 = vpop.f32.mrb[0].mxu0
      %3941 = vmatprep.mubr.bf16.mxu0 0
      %3942 = vmatmul.mubr.bf16.gmra.mrb[0].mxu0 %v443
      %v3943 = vpop.f32.mrb[0].mxu0
      %v3944 = vadd.f32 0.0, %v3943
      %v3945 = vpop.f32.mrb[0].mxu0
      %v3946 = vpop.f32.mrb[0].mxu0
      %v3947 = vpop.f32.mrb[0].mxu0
      %3948 = vmatprep.mubr.bf16.mxu0 0
      %3949 = vmatmul.mubr.bf16.gmra.mrb[0].mxu0 %v444
      %v3950 = vpop.f32.mrb[0].mxu0
      %v3951 = vadd.f32 0.0, %v3950
      %v3952 = vpop.f32.mrb[0].mxu0
      %v3953 = vpop.f32.mrb[0].mxu0
      %v3954 = vadd.f32 0.0, %v3953
      %v3955 = vpop.f32.mrb[0].mxu0
      %3956 = vmatprep.mubr.bf16.mxu0 0
      %3957 = vmatmul.mubr.bf16.gmra.mrb[0].mxu0 %v445
      %v3958 = vpop.f32.mrb[0].mxu0
      %v3959 = vadd.f32 0.0, %v3958
      %v3960 = vpop.f32.mrb[0].mxu0
      %v3961 = vpop.f32.mrb[0].mxu0
      %v3962 = vpop.f32.mrb[0].mxu0
      %3963 = vmatprep.mubr.bf16.mxu0 0
      %3964 = vmatmul.mubr.bf16.gmra.mrb[0].mxu0 %v446
      %v3965 = vpop.f32.mrb[0].mxu0
      %v3966 = vadd.f32 0.0, %v3965
      %v3967 = vpop.f32.mrb[0].mxu0
      %v3968 = vpop.f32.mrb[0].mxu0
      %v3969 = vadd.f32 0.0, %v3968
      %v3970 = vpop.f32.mrb[0].mxu0
      %3971 = vmatprep.mubr.bf16.mxu0 0
      %3972 = vmatmul.mubr.bf16.gmra.mrb[0].mxu0 %v447
      %v3973 = vpop.f32.mrb[0].mxu0
      %v3974 = vadd.f32 0.0, %v3973
      %v3975 = vpop.f32.mrb[0].mxu0
      %v3976 = vpop.f32.mrb[0].mxu0
      %v3977 = vpop.f32.mrb[0].mxu0
      %3978 = vmatprep.mubr.bf16.mxu0 0
      %3979 = vmatmul.mubr.bf16.gmra.mrb[0].mxu0 %v1904
      %v3980 = vpop.f32.mrb[0].mxu0
      %v3981 = vadd.f32 0.0, %v3980
      %v3982 = vpop.f32.mrb[0].mxu0
      %v3983 = vpop.f32.mrb[0].mxu0
      %v3984 = vadd.f32 0.0, %v3983
      %v3985 = vpop.f32.mrb[0].mxu0
      %3986 = vmatprep.mubr.bf16.mxu0 0
      %3987 = vmatmul.mubr.bf16.gmra.mrb[0].mxu0 %v1905
      %v3988 = vpop.f32.mrb[0].mxu0
      %v3989 = vadd.f32 0.0, %v3988
      %v3990 = vpop.f32.mrb[0].mxu0
      %v3991 = vpop.f32.mrb[0].mxu0
      %v3992 = vpop.f32.mrb[0].mxu0
      %3993 = vmatprep.mubr.bf16.mxu0 0
      %3994 = vmatmul.mubr.bf16.gmra.mrb[0].mxu0 %v3330
      %v3995 = vpop.f32.mrb[0].mxu0
      %v3996 = vadd.f32 0.0, %v3995
      %v3997 = vpop.f32.mrb[0].mxu0
      %v3998 = vpop.f32.mrb[0].mxu0
      %v3999 = vadd.f32 0.0, %v3998
      %v4000 = vpop.f32.mrb[0].mxu0
      %4001 = vmatprep.mubr.bf16.mxu0 0
      %4002 = vmatmul.mubr.bf16.gmra.mrb[0].mxu0 %v3331
      %v4003 = vpop.f32.mrb[0].mxu0
      %v4004 = vadd.f32 0.0, %v4003
      %v4005 = vpop.f32.mrb[0].mxu0
      %v4006 = vpop.f32.mrb[0].mxu0
      %v4007 = vpop.f32.mrb[0].mxu0
      %4008 = vdwg.mxu0
      %v4057 = vrot.slane %v3771, 1
      %v4058 = vrot.slane %v3774, 1
      %v4059 = vsel %vm1203, %v4057, %v4058
      %v4060 = vrot.slane %v3779, 1
      %v4061 = vsel %vm1203, %v4058, %v4060
      %v4062 = vrot.slane %v3786, 1
      %v4063 = vrot.slane %v3789, 1
      %v4064 = vsel %vm1203, %v4062, %v4063
      %v4065 = vrot.slane %v3794, 1
      %v4066 = vsel %vm1203, %v4063, %v4065
      %v4067 = vrot.slane %v3801, 1
      %v4068 = vrot.slane %v3804, 1
      %v4069 = vsel %vm1203, %v4067, %v4068
      %v4070 = vrot.slane %v3809, 1
      %v4071 = vsel %vm1203, %v4068, %v4070
      %v4072 = vrot.slane %v3816, 1
      %v4073 = vrot.slane %v3819, 1
      %v4074 = vsel %vm1203, %v4072, %v4073
      %v4075 = vrot.slane %v3824, 1
      %v4076 = vsel %vm1203, %v4073, %v4075
      %v4077 = vrot.slane %v3831, 1
      %v4078 = vrot.slane %v3834, 1
      %v4079 = vsel %vm1203, %v4077, %v4078
      %v4080 = vrot.slane %v3839, 1
      %v4081 = vsel %vm1203, %v4078, %v4080
      %v4082 = vrot.slane %v3846, 1
      %v4083 = vrot.slane %v3849, 1
      %v4084 = vsel %vm1203, %v4082, %v4083
      %v4085 = vrot.slane %v3854, 1
      %v4086 = vsel %vm1203, %v4083, %v4085
      %v4087 = vrot.slane %v3861, 1
      %v4088 = vrot.slane %v3864, 1
      %v4089 = vsel %vm1203, %v4087, %v4088
      %v4090 = vrot.slane %v3869, 1
      %v4091 = vsel %vm1203, %v4088, %v4090
      %v4092 = vrot.slane %v3876, 1
      %v4093 = vrot.slane %v3879, 1
      %v4094 = vsel %vm1203, %v4092, %v4093
      %v4095 = vrot.slane %v3884, 1
      %v4096 = vsel %vm1203, %v4093, %v4095
      %v4097 = vrot.slane %v3891, 1
      %v4098 = vrot.slane %v3894, 1
      %v4099 = vsel %vm1203, %v4097, %v4098
      %v4100 = vrot.slane %v3899, 1
      %v4101 = vsel %vm1203, %v4098, %v4100
      %v4102 = vrot.slane %v3906, 1
      %v4103 = vrot.slane %v3909, 1
      %v4104 = vsel %vm1203, %v4102, %v4103
      %v4105 = vrot.slane %v3914, 1
      %v4106 = vsel %vm1203, %v4103, %v4105
      %v4107 = vrot.slane %v3921, 1
      %v4108 = vrot.slane %v3924, 1
      %v4109 = vsel %vm1203, %v4107, %v4108
      %v4110 = vrot.slane %v3929, 1
      %v4111 = vsel %vm1203, %v4108, %v4110
      %v4112 = vrot.slane %v3936, 1
      %v4113 = vrot.slane %v3939, 1
      %v4114 = vsel %vm1203, %v4112, %v4113
      %v4115 = vrot.slane %v3944, 1
      %v4116 = vsel %vm1203, %v4113, %v4115
      %v4117 = vrot.slane %v3951, 1
      %v4118 = vrot.slane %v3954, 1
      %v4119 = vsel %vm1203, %v4117, %v4118
      %v4120 = vrot.slane %v3959, 1
      %v4121 = vsel %vm1203, %v4118, %v4120
      %v4122 = vrot.slane %v3966, 1
      %v4123 = vrot.slane %v3969, 1
      %v4124 = vsel %vm1203, %v4122, %v4123
      %v4125 = vrot.slane %v3974, 1
      %v4126 = vsel %vm1203, %v4123, %v4125
      %v4127 = vrot.slane %v3981, 1
      %v4128 = vrot.slane %v3984, 1
      %v4129 = vsel %vm1203, %v4127, %v4128
      %v4130 = vrot.slane %v3989, 1
      %v4131 = vsel %vm1203, %v4128, %v4130
      %v4132 = vrot.slane %v3996, 1
      %v4133 = vrot.slane %v3999, 1
      %v4134 = vsel %vm1203, %v4132, %v4133
      %v4135 = vrot.slane %v4004, 1
      %v4136 = vsel %vm1203, %v4133, %v4135
      %v4169 = vadd.f32 %v3639, %v4059
      %v4170 = vadd.f32 %v3640, %v4061
      %v4171 = vadd.f32 %v3641, %v4064
      %v4172 = vadd.f32 %v3642, %v4066
      %v4173 = vadd.f32 %v3643, %v4069
      %v4174 = vadd.f32 %v3644, %v4071
      %v4175 = vadd.f32 %v3645, %v4074
      %v4176 = vadd.f32 %v3646, %v4076
      %v4177 = vadd.f32 %v3647, %v4079
      %v4178 = vadd.f32 %v3648, %v4081
      %v4179 = vadd.f32 %v3649, %v4084
      %v4180 = vadd.f32 %v3650, %v4086
      %v4181 = vadd.f32 %v3651, %v4089
      %v4182 = vadd.f32 %v3652, %v4091
      %v4183 = vadd.f32 %v3653, %v4094
      %v4184 = vadd.f32 %v3654, %v4096
      %v4185 = vadd.f32 %v3655, %v4099
      %v4186 = vadd.f32 %v3656, %v4101
      %v4187 = vadd.f32 %v3657, %v4104
      %v4188 = vadd.f32 %v3658, %v4106
      %v4189 = vadd.f32 %v3659, %v4109
      %v4190 = vadd.f32 %v3660, %v4111
      %v4191 = vadd.f32 %v3661, %v4114
      %v4192 = vadd.f32 %v3662, %v4116
      %v4193 = vadd.f32 %v3663, %v4119
      %v4194 = vadd.f32 %v3664, %v4121
      %v4195 = vadd.f32 %v3665, %v4124
      %v4196 = vadd.f32 %v3666, %v4126
      %v4197 = vadd.f32 %v3667, %v4129
      %v4198 = vadd.f32 %v3668, %v4131
      %v4199 = vadd.f32 %v3669, %v4134
      %v4200 = vadd.f32 %v3670, %v4136
      %s4201 = scalar_lea.vmem %s1, 512
      %v4202 = vld [vmem:[%s4201] sm:$0xf]
      %v4203 = vld [vmem:[%s4201 + $0x4] sm:$0xf]
      %v4204 = vld [vmem:[%s4201 + $0x8] sm:$0xf]
      %v4205 = vld [vmem:[%s4201 + $0xc] sm:$0xf]
      %v4206 = vld [vmem:[%s4201 + $0x10] sm:$0xf]
      %v4207 = vld [vmem:[%s4201 + $0x14] sm:$0xf]
      %v4208 = vld [vmem:[%s4201 + $0x18] sm:$0xf]
      %v4209 = vld [vmem:[%s4201 + $0x1c] sm:$0xf]
      %v4210 = vld [vmem:[%s4201 + $0x20] sm:$0xf]
      %v4211 = vld [vmem:[%s4201 + $0x24] sm:$0xf]
      %v4212 = vld [vmem:[%s4201 + $0x28] sm:$0xf]
      %v4213 = vld [vmem:[%s4201 + $0x2c] sm:$0xf]
      %v4214 = vld [vmem:[%s4201 + $0x30] sm:$0xf]
      %v4215 = vld [vmem:[%s4201 + $0x34] sm:$0xf]
      %v4216 = vld [vmem:[%s4201 + $0x38] sm:$0xf]
      %v4217 = vld [vmem:[%s4201 + $0x3c] sm:$0xf]
      %v4234 = vunpack.c.l.b16 %v4202
      %v4235 = vunpack.c.l.b16 %v4203
      %v4236 = vunpack.c.l.b16 %v4204
      %v4237 = vunpack.c.l.b16 %v4205
      %v4238 = vunpack.c.l.b16 %v4206
      %v4239 = vunpack.c.l.b16 %v4207
      %v4240 = vunpack.c.l.b16 %v4208
      %v4241 = vunpack.c.l.b16 %v4209
      %v4242 = vunpack.c.l.b16 %v4210
      %v4243 = vunpack.c.l.b16 %v4211
      %v4244 = vunpack.c.l.b16 %v4212
      %v4245 = vunpack.c.l.b16 %v4213
      %v4246 = vunpack.c.l.b16 %v4214
      %v4247 = vunpack.c.l.b16 %v4215
      %v4248 = vunpack.c.l.b16 %v4216
      %v4249 = vunpack.c.l.b16 %v4217
      %v4250 = vpack.c.b16 %v4235, %v4234
      %v4251 = vpack.c.b16 %v4237, %v4236
      %v4252 = vpack.c.b16 %v4239, %v4238
      %v4253 = vpack.c.b16 %v4241, %v4240
      %v4254 = vpack.c.b16 %v4243, %v4242
      %v4255 = vpack.c.b16 %v4245, %v4244
      %v4256 = vpack.c.b16 %v4247, %v4246
      %v4257 = vpack.c.b16 %v4249, %v4248
      %4266 = vmatprep.subr.bf16.mxu0 0
      %4267 = vmatpush1.bf16.msra.mxu0 %v4250
      %4268 = vmatprep.subr.bf16.mxu0 0
      %4269 = vmatpush1.bf16.msra.mxu0 %v4251
      %4270 = vmatprep.subr.bf16.mxu0 0
      %4271 = vmatpush1.bf16.msra.mxu0 %v4252
      %4272 = vmatprep.subr.bf16.mxu0 0
      %4273 = vmatpush1.bf16.msra.mxu0 %v4253
      %4274 = vmatprep.subr.bf16.mxu0 0
      %4275 = vmatpush1.bf16.msra.mxu0 %v4254
      %4276 = vmatprep.subr.bf16.mxu0 0
      %4277 = vmatpush1.bf16.msra.mxu0 %v4255
      %4278 = vmatprep.subr.bf16.mxu0 0
      %4279 = vmatpush1.bf16.msra.mxu0 %v4256
      %4280 = vmatprep.subr.bf16.mxu0 0
      %4281 = vmatpush1.bf16.msra.mxu0 %v4257
      %4282 = vmatprep.subr.bf16.mxu0 0
      %4283 = vmatpush1.bf16.msra.mxu0 0
      %4284 = vmatprep.subr.bf16.mxu0 0
      %4285 = vmatpush1.bf16.msra.mxu0 0
      %4286 = vmatprep.subr.bf16.mxu0 0
      %4287 = vmatpush1.bf16.msra.mxu0 0
      %4288 = vmatprep.subr.bf16.mxu0 0
      %4289 = vmatpush1.bf16.msra.mxu0 0
      %4290 = vmatprep.subr.bf16.mxu0 0
      %4291 = vmatpush1.bf16.msra.mxu0 0
      %4292 = vmatprep.subr.bf16.mxu0 0
      %4293 = vmatpush1.bf16.msra.mxu0 0
      %4294 = vmatprep.subr.bf16.mxu0 0
      %4295 = vmatpush1.bf16.msra.mxu0 0
      %4296 = vmatprep.subr.bf16.mxu0 0
      %4297 = vmatpush1.bf16.msra.mxu0 0
      %4298 = vmatprep.mubr.bf16.mxu0 0
      %4299 = vmatmul.mubr.bf16.gmra.mrb[0].mxu0 %v420
      %v4300 = vpop.f32.mrb[0].mxu0
      %v4301 = vadd.f32 0.0, %v4300
      %v4302 = vpop.f32.mrb[0].mxu0
      %v4303 = vpop.f32.mrb[0].mxu0
      %v4304 = vadd.f32 0.0, %v4303
      %v4305 = vpop.f32.mrb[0].mxu0
      %4306 = vmatprep.mubr.bf16.mxu0 0
      %4307 = vmatmul.mubr.bf16.gmra.mrb[0].mxu0 %v421
      %v4308 = vpop.f32.mrb[0].mxu0
      %v4309 = vadd.f32 0.0, %v4308
      %v4310 = vpop.f32.mrb[0].mxu0
      %v4311 = vpop.f32.mrb[0].mxu0
      %v4312 = vpop.f32.mrb[0].mxu0
      %4313 = vmatprep.mubr.bf16.mxu0 0
      %4314 = vmatmul.mubr.bf16.gmra.mrb[0].mxu0 %v422
      %v4315 = vpop.f32.mrb[0].mxu0
      %v4316 = vadd.f32 0.0, %v4315
      %v4317 = vpop.f32.mrb[0].mxu0
      %v4318 = vpop.f32.mrb[0].mxu0
      %v4319 = vadd.f32 0.0, %v4318
      %v4320 = vpop.f32.mrb[0].mxu0
      %4321 = vmatprep.mubr.bf16.mxu0 0
      %4322 = vmatmul.mubr.bf16.gmra.mrb[0].mxu0 %v423
      %v4323 = vpop.f32.mrb[0].mxu0
      %v4324 = vadd.f32 0.0, %v4323
      %v4325 = vpop.f32.mrb[0].mxu0
      %v4326 = vpop.f32.mrb[0].mxu0
      %v4327 = vpop.f32.mrb[0].mxu0
      %4328 = vmatprep.mubr.bf16.mxu0 0
      %4329 = vmatmul.mubr.bf16.gmra.mrb[0].mxu0 %v424
      %v4330 = vpop.f32.mrb[0].mxu0
      %v4331 = vadd.f32 0.0, %v4330
      %v4332 = vpop.f32.mrb[0].mxu0
      %v4333 = vpop.f32.mrb[0].mxu0
      %v4334 = vadd.f32 0.0, %v4333
      %v4335 = vpop.f32.mrb[0].mxu0
      %4336 = vmatprep.mubr.bf16.mxu0 0
      %4337 = vmatmul.mubr.bf16.gmra.mrb[0].mxu0 %v425
      %v4338 = vpop.f32.mrb[0].mxu0
      %v4339 = vadd.f32 0.0, %v4338
      %v4340 = vpop.f32.mrb[0].mxu0
      %v4341 = vpop.f32.mrb[0].mxu0
      %v4342 = vpop.f32.mrb[0].mxu0
      %4343 = vmatprep.mubr.bf16.mxu0 0
      %4344 = vmatmul.mubr.bf16.gmra.mrb[0].mxu0 %v426
      %v4345 = vpop.f32.mrb[0].mxu0
      %v4346 = vadd.f32 0.0, %v4345
      %v4347 = vpop.f32.mrb[0].mxu0
      %v4348 = vpop.f32.mrb[0].mxu0
      %v4349 = vadd.f32 0.0, %v4348
      %v4350 = vpop.f32.mrb[0].mxu0
      %4351 = vmatprep.mubr.bf16.mxu0 0
      %4352 = vmatmul.mubr.bf16.gmra.mrb[0].mxu0 %v427
      %v4353 = vpop.f32.mrb[0].mxu0
      %v4354 = vadd.f32 0.0, %v4353
      %v4355 = vpop.f32.mrb[0].mxu0
      %v4356 = vpop.f32.mrb[0].mxu0
      %v4357 = vpop.f32.mrb[0].mxu0
      %4358 = vmatprep.mubr.bf16.mxu0 0
      %4359 = vmatmul.mubr.bf16.gmra.mrb[0].mxu0 %v428
      %v4360 = vpop.f32.mrb[0].mxu0
      %v4361 = vadd.f32 0.0, %v4360
      %v4362 = vpop.f32.mrb[0].mxu0
      %v4363 = vpop.f32.mrb[0].mxu0
      %v4364 = vadd.f32 0.0, %v4363
      %v4365 = vpop.f32.mrb[0].mxu0
      %4366 = vmatprep.mubr.bf16.mxu0 0
      %4367 = vmatmul.mubr.bf16.gmra.mrb[0].mxu0 %v429
      %v4368 = vpop.f32.mrb[0].mxu0
      %v4369 = vadd.f32 0.0, %v4368
      %v4370 = vpop.f32.mrb[0].mxu0
      %v4371 = vpop.f32.mrb[0].mxu0
      %v4372 = vpop.f32.mrb[0].mxu0
      %4373 = vmatprep.mubr.bf16.mxu0 0
      %4374 = vmatmul.mubr.bf16.gmra.mrb[0].mxu0 %v430
      %v4375 = vpop.f32.mrb[0].mxu0
      %v4376 = vadd.f32 0.0, %v4375
      %v4377 = vpop.f32.mrb[0].mxu0
      %v4378 = vpop.f32.mrb[0].mxu0
      %v4379 = vadd.f32 0.0, %v4378
      %v4380 = vpop.f32.mrb[0].mxu0
      %4381 = vmatprep.mubr.bf16.mxu0 0
      %4382 = vmatmul.mubr.bf16.gmra.mrb[0].mxu0 %v431
      %v4383 = vpop.f32.mrb[0].mxu0
      %v4384 = vadd.f32 0.0, %v4383
      %v4385 = vpop.f32.mrb[0].mxu0
      %v4386 = vpop.f32.mrb[0].mxu0
      %v4387 = vpop.f32.mrb[0].mxu0
      %4388 = vmatprep.mubr.bf16.mxu0 0
      %4389 = vmatmul.mubr.bf16.gmra.mrb[0].mxu0 %v432
      %v4390 = vpop.f32.mrb[0].mxu0
      %v4391 = vadd.f32 0.0, %v4390
      %v4392 = vpop.f32.mrb[0].mxu0
      %v4393 = vpop.f32.mrb[0].mxu0
      %v4394 = vadd.f32 0.0, %v4393
      %v4395 = vpop.f32.mrb[0].mxu0
      %4396 = vmatprep.mubr.bf16.mxu0 0
      %4397 = vmatmul.mubr.bf16.gmra.mrb[0].mxu0 %v433
      %v4398 = vpop.f32.mrb[0].mxu0
      %v4399 = vadd.f32 0.0, %v4398
      %v4400 = vpop.f32.mrb[0].mxu0
      %v4401 = vpop.f32.mrb[0].mxu0
      %v4402 = vpop.f32.mrb[0].mxu0
      %4403 = vmatprep.mubr.bf16.mxu0 0
      %4404 = vmatmul.mubr.bf16.gmra.mrb[0].mxu0 %v434
      %v4405 = vpop.f32.mrb[0].mxu0
      %v4406 = vadd.f32 0.0, %v4405
      %v4407 = vpop.f32.mrb[0].mxu0
      %v4408 = vpop.f32.mrb[0].mxu0
      %v4409 = vadd.f32 0.0, %v4408
      %v4410 = vpop.f32.mrb[0].mxu0
      %4411 = vmatprep.mubr.bf16.mxu0 0
      %4412 = vmatmul.mubr.bf16.gmra.mrb[0].mxu0 %v435
      %v4413 = vpop.f32.mrb[0].mxu0
      %v4414 = vadd.f32 0.0, %v4413
      %v4415 = vpop.f32.mrb[0].mxu0
      %v4416 = vpop.f32.mrb[0].mxu0
      %v4417 = vpop.f32.mrb[0].mxu0
      %4418 = vmatprep.mubr.bf16.mxu0 0
      %4419 = vmatmul.mubr.bf16.gmra.mrb[0].mxu0 %v436
      %v4420 = vpop.f32.mrb[0].mxu0
      %v4421 = vadd.f32 0.0, %v4420
      %v4422 = vpop.f32.mrb[0].mxu0
      %v4423 = vpop.f32.mrb[0].mxu0
      %v4424 = vadd.f32 0.0, %v4423
      %v4425 = vpop.f32.mrb[0].mxu0
      %4426 = vmatprep.mubr.bf16.mxu0 0
      %4427 = vmatmul.mubr.bf16.gmra.mrb[0].mxu0 %v437
      %v4428 = vpop.f32.mrb[0].mxu0
      %v4429 = vadd.f32 0.0, %v4428
      %v4430 = vpop.f32.mrb[0].mxu0
      %v4431 = vpop.f32.mrb[0].mxu0
      %v4432 = vpop.f32.mrb[0].mxu0
      %4433 = vmatprep.mubr.bf16.mxu0 0
      %4434 = vmatmul.mubr.bf16.gmra.mrb[0].mxu0 %v438
      %v4435 = vpop.f32.mrb[0].mxu0
      %v4436 = vadd.f32 0.0, %v4435
      %v4437 = vpop.f32.mrb[0].mxu0
      %v4438 = vpop.f32.mrb[0].mxu0
      %v4439 = vadd.f32 0.0, %v4438
      %v4440 = vpop.f32.mrb[0].mxu0
      %4441 = vmatprep.mubr.bf16.mxu0 0
      %4442 = vmatmul.mubr.bf16.gmra.mrb[0].mxu0 %v439
      %v4443 = vpop.f32.mrb[0].mxu0
      %v4444 = vadd.f32 0.0, %v4443
      %v4445 = vpop.f32.mrb[0].mxu0
      %v4446 = vpop.f32.mrb[0].mxu0
      %v4447 = vpop.f32.mrb[0].mxu0
      %4448 = vmatprep.mubr.bf16.mxu0 0
      %4449 = vmatmul.mubr.bf16.gmra.mrb[0].mxu0 %v440
      %v4450 = vpop.f32.mrb[0].mxu0
      %v4451 = vadd.f32 0.0, %v4450
      %v4452 = vpop.f32.mrb[0].mxu0
      %v4453 = vpop.f32.mrb[0].mxu0
      %v4454 = vadd.f32 0.0, %v4453
      %v4455 = vpop.f32.mrb[0].mxu0
      %4456 = vmatprep.mubr.bf16.mxu0 0
      %4457 = vmatmul.mubr.bf16.gmra.mrb[0].mxu0 %v441
      %v4458 = vpop.f32.mrb[0].mxu0
      %v4459 = vadd.f32 0.0, %v4458
      %v4460 = vpop.f32.mrb[0].mxu0
      %v4461 = vpop.f32.mrb[0].mxu0
      %v4462 = vpop.f32.mrb[0].mxu0
      %4463 = vmatprep.mubr.bf16.mxu0 0
      %4464 = vmatmul.mubr.bf16.gmra.mrb[0].mxu0 %v442
      %v4465 = vpop.f32.mrb[0].mxu0
      %v4466 = vadd.f32 0.0, %v4465
      %v4467 = vpop.f32.mrb[0].mxu0
      %v4468 = vpop.f32.mrb[0].mxu0
      %v4469 = vadd.f32 0.0, %v4468
      %v4470 = vpop.f32.mrb[0].mxu0
      %4471 = vmatprep.mubr.bf16.mxu0 0
      %4472 = vmatmul.mubr.bf16.gmra.mrb[0].mxu0 %v443
      %v4473 = vpop.f32.mrb[0].mxu0
      %v4474 = vadd.f32 0.0, %v4473
      %v4475 = vpop.f32.mrb[0].mxu0
      %v4476 = vpop.f32.mrb[0].mxu0
      %v4477 = vpop.f32.mrb[0].mxu0
      %4478 = vmatprep.mubr.bf16.mxu0 0
      %4479 = vmatmul.mubr.bf16.gmra.mrb[0].mxu0 %v444
      %v4480 = vpop.f32.mrb[0].mxu0
      %v4481 = vadd.f32 0.0, %v4480
      %v4482 = vpop.f32.mrb[0].mxu0
      %v4483 = vpop.f32.mrb[0].mxu0
      %v4484 = vadd.f32 0.0, %v4483
      %v4485 = vpop.f32.mrb[0].mxu0
      %4486 = vmatprep.mubr.bf16.mxu0 0
      %4487 = vmatmul.mubr.bf16.gmra.mrb[0].mxu0 %v445
      %v4488 = vpop.f32.mrb[0].mxu0
      %v4489 = vadd.f32 0.0, %v4488
      %v4490 = vpop.f32.mrb[0].mxu0
      %v4491 = vpop.f32.mrb[0].mxu0
      %v4492 = vpop.f32.mrb[0].mxu0
      %4493 = vmatprep.mubr.bf16.mxu0 0
      %4494 = vmatmul.mubr.bf16.gmra.mrb[0].mxu0 %v446
      %v4495 = vpop.f32.mrb[0].mxu0
      %v4496 = vadd.f32 0.0, %v4495
      %v4497 = vpop.f32.mrb[0].mxu0
      %v4498 = vpop.f32.mrb[0].mxu0
      %v4499 = vadd.f32 0.0, %v4498
      %v4500 = vpop.f32.mrb[0].mxu0
      %4501 = vmatprep.mubr.bf16.mxu0 0
      %4502 = vmatmul.mubr.bf16.gmra.mrb[0].mxu0 %v447
      %v4503 = vpop.f32.mrb[0].mxu0
      %v4504 = vadd.f32 0.0, %v4503
      %v4505 = vpop.f32.mrb[0].mxu0
      %v4506 = vpop.f32.mrb[0].mxu0
      %v4507 = vpop.f32.mrb[0].mxu0
      %4508 = vmatprep.mubr.bf16.mxu0 0
      %4509 = vmatmul.mubr.bf16.gmra.mrb[0].mxu0 %v1904
      %v4510 = vpop.f32.mrb[0].mxu0
      %v4511 = vadd.f32 0.0, %v4510
      %v4512 = vpop.f32.mrb[0].mxu0
      %v4513 = vpop.f32.mrb[0].mxu0
      %v4514 = vadd.f32 0.0, %v4513
      %v4515 = vpop.f32.mrb[0].mxu0
      %4516 = vmatprep.mubr.bf16.mxu0 0
      %4517 = vmatmul.mubr.bf16.gmra.mrb[0].mxu0 %v1905
      %v4518 = vpop.f32.mrb[0].mxu0
      %v4519 = vadd.f32 0.0, %v4518
      %v4520 = vpop.f32.mrb[0].mxu0
      %v4521 = vpop.f32.mrb[0].mxu0
      %v4522 = vpop.f32.mrb[0].mxu0
      %4523 = vmatprep.mubr.bf16.mxu0 0
      %4524 = vmatmul.mubr.bf16.gmra.mrb[0].mxu0 %v3330
      %v4525 = vpop.f32.mrb[0].mxu0
      %v4526 = vadd.f32 0.0, %v4525
      %v4527 = vpop.f32.mrb[0].mxu0
      %v4528 = vpop.f32.mrb[0].mxu0
      %v4529 = vadd.f32 0.0, %v4528
      %v4530 = vpop.f32.mrb[0].mxu0
      %4531 = vmatprep.mubr.bf16.mxu0 0
      %4532 = vmatmul.mubr.bf16.gmra.mrb[0].mxu0 %v3331
      %v4533 = vpop.f32.mrb[0].mxu0
      %v4534 = vadd.f32 0.0, %v4533
      %v4535 = vpop.f32.mrb[0].mxu0
      %v4536 = vpop.f32.mrb[0].mxu0
      %v4537 = vpop.f32.mrb[0].mxu0
      %4538 = vdwg.mxu0
      %v4587 = vrot.slane %v4301, 2
      %v4588 = vrot.slane %v4304, 2
      %v4589 = vsel %vm1734, %v4587, %v4588
      %v4590 = vrot.slane %v4309, 2
      %v4591 = vsel %vm1734, %v4588, %v4590
      %v4592 = vrot.slane %v4316, 2
      %v4593 = vrot.slane %v4319, 2
      %v4594 = vsel %vm1734, %v4592, %v4593
      %v4595 = vrot.slane %v4324, 2
      %v4596 = vsel %vm1734, %v4593, %v4595
      %v4597 = vrot.slane %v4331, 2
      %v4598 = vrot.slane %v4334, 2
      %v4599 = vsel %vm1734, %v4597, %v4598
      %v4600 = vrot.slane %v4339, 2
      %v4601 = vsel %vm1734, %v4598, %v4600
      %v4602 = vrot.slane %v4346, 2
      %v4603 = vrot.slane %v4349, 2
      %v4604 = vsel %vm1734, %v4602, %v4603
      %v4605 = vrot.slane %v4354, 2
      %v4606 = vsel %vm1734, %v4603, %v4605
      %v4607 = vrot.slane %v4361, 2
      %v4608 = vrot.slane %v4364, 2
      %v4609 = vsel %vm1734, %v4607, %v4608
      %v4610 = vrot.slane %v4369, 2
      %v4611 = vsel %vm1734, %v4608, %v4610
      %v4612 = vrot.slane %v4376, 2
      %v4613 = vrot.slane %v4379, 2
      %v4614 = vsel %vm1734, %v4612, %v4613
      %v4615 = vrot.slane %v4384, 2
      %v4616 = vsel %vm1734, %v4613, %v4615
      %v4617 = vrot.slane %v4391, 2
      %v4618 = vrot.slane %v4394, 2
      %v4619 = vsel %vm1734, %v4617, %v4618
      %v4620 = vrot.slane %v4399, 2
      %v4621 = vsel %vm1734, %v4618, %v4620
      %v4622 = vrot.slane %v4406, 2
      %v4623 = vrot.slane %v4409, 2
      %v4624 = vsel %vm1734, %v4622, %v4623
      %v4625 = vrot.slane %v4414, 2
      %v4626 = vsel %vm1734, %v4623, %v4625
      %v4627 = vrot.slane %v4421, 2
      %v4628 = vrot.slane %v4424, 2
      %v4629 = vsel %vm1734, %v4627, %v4628
      %v4630 = vrot.slane %v4429, 2
      %v4631 = vsel %vm1734, %v4628, %v4630
      %v4632 = vrot.slane %v4436, 2
      %v4633 = vrot.slane %v4439, 2
      %v4634 = vsel %vm1734, %v4632, %v4633
      %v4635 = vrot.slane %v4444, 2
      %v4636 = vsel %vm1734, %v4633, %v4635
      %v4637 = vrot.slane %v4451, 2
      %v4638 = vrot.slane %v4454, 2
      %v4639 = vsel %vm1734, %v4637, %v4638
      %v4640 = vrot.slane %v4459, 2
      %v4641 = vsel %vm1734, %v4638, %v4640
      %v4642 = vrot.slane %v4466, 2
      %v4643 = vrot.slane %v4469, 2
      %v4644 = vsel %vm1734, %v4642, %v4643
      %v4645 = vrot.slane %v4474, 2
      %v4646 = vsel %vm1734, %v4643, %v4645
      %v4647 = vrot.slane %v4481, 2
      %v4648 = vrot.slane %v4484, 2
      %v4649 = vsel %vm1734, %v4647, %v4648
      %v4650 = vrot.slane %v4489, 2
      %v4651 = vsel %vm1734, %v4648, %v4650
      %v4652 = vrot.slane %v4496, 2
      %v4653 = vrot.slane %v4499, 2
      %v4654 = vsel %vm1734, %v4652, %v4653
      %v4655 = vrot.slane %v4504, 2
      %v4656 = vsel %vm1734, %v4653, %v4655
      %v4657 = vrot.slane %v4511, 2
      %v4658 = vrot.slane %v4514, 2
      %v4659 = vsel %vm1734, %v4657, %v4658
      %v4660 = vrot.slane %v4519, 2
      %v4661 = vsel %vm1734, %v4658, %v4660
      %v4662 = vrot.slane %v4526, 2
      %v4663 = vrot.slane %v4529, 2
      %v4664 = vsel %vm1734, %v4662, %v4663
      %v4665 = vrot.slane %v4534, 2
      %v4666 = vsel %vm1734, %v4663, %v4665
      %v4699 = vadd.f32 %v4169, %v4589
      %v4700 = vadd.f32 %v4170, %v4591
      %v4701 = vadd.f32 %v4171, %v4594
      %v4702 = vadd.f32 %v4172, %v4596
      %v4703 = vadd.f32 %v4173, %v4599
      %v4704 = vadd.f32 %v4174, %v4601
      %v4705 = vadd.f32 %v4175, %v4604
      %v4706 = vadd.f32 %v4176, %v4606
      %v4707 = vadd.f32 %v4177, %v4609
      %v4708 = vadd.f32 %v4178, %v4611
      %v4709 = vadd.f32 %v4179, %v4614
      %v4710 = vadd.f32 %v4180, %v4616
      %v4711 = vadd.f32 %v4181, %v4619
      %v4712 = vadd.f32 %v4182, %v4621
      %v4713 = vadd.f32 %v4183, %v4624
      %v4714 = vadd.f32 %v4184, %v4626
      %v4715 = vadd.f32 %v4185, %v4629
      %v4716 = vadd.f32 %v4186, %v4631
      %v4717 = vadd.f32 %v4187, %v4634
      %v4718 = vadd.f32 %v4188, %v4636
      %v4719 = vadd.f32 %v4189, %v4639
      %v4720 = vadd.f32 %v4190, %v4641
      %v4721 = vadd.f32 %v4191, %v4644
      %v4722 = vadd.f32 %v4192, %v4646
      %v4723 = vadd.f32 %v4193, %v4649
      %v4724 = vadd.f32 %v4194, %v4651
      %v4725 = vadd.f32 %v4195, %v4654
      %v4726 = vadd.f32 %v4196, %v4656
      %v4727 = vadd.f32 %v4197, %v4659
      %v4728 = vadd.f32 %v4198, %v4661
      %v4729 = vadd.f32 %v4199, %v4664
      %v4730 = vadd.f32 %v4200, %v4666
      %4731 = vst [vmem:[%s192] sm:$0xff] %v4699
      %4732 = vst [vmem:[%s192 + $0x8] sm:$0xff] %v4700
      %4733 = vst [vmem:[%s192 + $0x10] sm:$0xff] %v4701
      %4734 = vst [vmem:[%s192 + $0x18] sm:$0xff] %v4702
      %4735 = vst [vmem:[%s192 + $0x20] sm:$0xff] %v4703
      %4736 = vst [vmem:[%s192 + $0x28] sm:$0xff] %v4704
      %4737 = vst [vmem:[%s192 + $0x30] sm:$0xff] %v4705
      %4738 = vst [vmem:[%s192 + $0x38] sm:$0xff] %v4706
      %4739 = vst [vmem:[%s192 + $0x40] sm:$0xff] %v4707
      %4740 = vst [vmem:[%s192 + $0x48] sm:$0xff] %v4708
      %4741 = vst [vmem:[%s192 + $0x50] sm:$0xff] %v4709
      %4742 = vst [vmem:[%s192 + $0x58] sm:$0xff] %v4710
      %4743 = vst [vmem:[%s192 + $0x60] sm:$0xff] %v4711
      %4744 = vst [vmem:[%s192 + $0x68] sm:$0xff] %v4712
      %4745 = vst [vmem:[%s192 + $0x70] sm:$0xff] %v4713
      %4746 = vst [vmem:[%s192 + $0x78] sm:$0xff] %v4714
      %4747 = vst [vmem:[%s192 + $0x80] sm:$0xff] %v4715
      %4748 = vst [vmem:[%s192 + $0x88] sm:$0xff] %v4716
      %4749 = vst [vmem:[%s192 + $0x90] sm:$0xff] %v4717
      %4750 = vst [vmem:[%s192 + $0x98] sm:$0xff] %v4718
      %4751 = vst [vmem:[%s192 + $0xa0] sm:$0xff] %v4719
      %4752 = vst [vmem:[%s192 + $0xa8] sm:$0xff] %v4720
      %4753 = vst [vmem:[%s192 + $0xb0] sm:$0xff] %v4721
      %4754 = vst [vmem:[%s192 + $0xb8] sm:$0xff] %v4722
      %4755 = vst [vmem:[%s192 + $0xc0] sm:$0xff] %v4723
      %4756 = vst [vmem:[%s192 + $0xc8] sm:$0xff] %v4724
      %4757 = vst [vmem:[%s192 + $0xd0] sm:$0xff] %v4725
      %4758 = vst [vmem:[%s192 + $0xd8] sm:$0xff] %v4726
      %4759 = vst [vmem:[%s192 + $0xe0] sm:$0xff] %v4727
      %4760 = vst [vmem:[%s192 + $0xe8] sm:$0xff] %v4728
      %4761 = vst [vmem:[%s192 + $0xf0] sm:$0xff] %v4729
      %4762 = vst [vmem:[%s192 + $0xf8] sm:$0xff] %v4730
      %v4763 = vld [vmem:[%s3] sm:$0x1]
      %v4764 = vadd.f32 %v4699, %v4701
      %v4765 = vadd.f32 %v4764, %v4703
      %v4766 = vadd.f32 %v4765, %v4705
      %v4767 = vadd.f32 %v4766, %v4707
      %v4768 = vadd.f32 %v4767, %v4709
      %v4769 = vadd.f32 %v4768, %v4711
      %v4770 = vadd.f32 %v4769, %v4713
      %v4771 = vadd.f32 %v4770, %v4715
      %v4772 = vadd.f32 %v4771, %v4717
      %v4773 = vadd.f32 %v4772, %v4719
      %v4774 = vadd.f32 %v4773, %v4721
      %v4775 = vadd.f32 %v4774, %v4723
      %v4776 = vadd.f32 %v4775, %v4725
      %v4777 = vadd.f32 %v4776, %v4727
      %v4778 = vadd.f32 %v4777, %v4729
      %v4779 = vadd.f32 %v4700, %v4702
      %v4780 = vadd.f32 %v4779, %v4704
      %v4781 = vadd.f32 %v4780, %v4706
      %v4782 = vadd.f32 %v4781, %v4708
      %v4783 = vadd.f32 %v4782, %v4710
      %v4784 = vadd.f32 %v4783, %v4712
      %v4785 = vadd.f32 %v4784, %v4714
      %v4786 = vadd.f32 %v4785, %v4716
      %v4787 = vadd.f32 %v4786, %v4718
      %v4788 = vadd.f32 %v4787, %v4720
      %v4789 = vadd.f32 %v4788, %v4722
      %v4790 = vadd.f32 %v4789, %v4724
      %v4791 = vadd.f32 %v4790, %v4726
      %v4792 = vadd.f32 %v4791, %v4728
      %v4793 = vadd.f32 %v4792, %v4730
      %v4794 = vadd.f32 %v4778, %v4793
      %v4795 = vrot.slane %v4794, 4
      %v4796 = vadd.f32 %v4794, %v4795
      %v4797 = vrot.slane %v4796, 2
      %v4798 = vadd.f32 %v4796, %v4797
      %v4799 = vrot.slane %v4798, 1
      %v4800 = vadd.f32 %v4798, %v4799
      %v4801 = vadd.f32 %v4763, %v4800
      %4802 = vst [vmem:[%s3] sm:$0x1] %v4801
      %v4803 = vld [vmem:[%s4] sm:$0x1]
      %v4804 = vmul.f32 %v4699, %v4699
      %v4805 = vmul.f32 %v4700, %v4700
      %v4806 = vmul.f32 %v4701, %v4701
      %v4807 = vmul.f32 %v4702, %v4702
      %v4808 = vmul.f32 %v4703, %v4703
      %v4809 = vmul.f32 %v4704, %v4704
      %v4810 = vmul.f32 %v4705, %v4705
      %v4811 = vmul.f32 %v4706, %v4706
      %v4812 = vmul.f32 %v4707, %v4707
      %v4813 = vmul.f32 %v4708, %v4708
      %v4814 = vmul.f32 %v4709, %v4709
      %v4815 = vmul.f32 %v4710, %v4710
      %v4816 = vmul.f32 %v4711, %v4711
      %v4817 = vmul.f32 %v4712, %v4712
      %v4818 = vmul.f32 %v4713, %v4713
      %v4819 = vmul.f32 %v4714, %v4714
      %v4820 = vmul.f32 %v4715, %v4715
      %v4821 = vmul.f32 %v4716, %v4716
      %v4822 = vmul.f32 %v4717, %v4717
      %v4823 = vmul.f32 %v4718, %v4718
      %v4824 = vmul.f32 %v4719, %v4719
      %v4825 = vmul.f32 %v4720, %v4720
      %v4826 = vmul.f32 %v4721, %v4721
      %v4827 = vmul.f32 %v4722, %v4722
      %v4828 = vmul.f32 %v4723, %v4723
      %v4829 = vmul.f32 %v4724, %v4724
      %v4830 = vmul.f32 %v4725, %v4725
      %v4831 = vmul.f32 %v4726, %v4726
      %v4832 = vmul.f32 %v4727, %v4727
      %v4833 = vmul.f32 %v4728, %v4728
      %v4834 = vmul.f32 %v4729, %v4729
      %v4835 = vmul.f32 %v4730, %v4730
      %v4836 = vadd.f32 %v4804, %v4806
      %v4837 = vadd.f32 %v4836, %v4808
      %v4838 = vadd.f32 %v4837, %v4810
      %v4839 = vadd.f32 %v4838, %v4812
      %v4840 = vadd.f32 %v4839, %v4814
      %v4841 = vadd.f32 %v4840, %v4816
      %v4842 = vadd.f32 %v4841, %v4818
      %v4843 = vadd.f32 %v4842, %v4820
      %v4844 = vadd.f32 %v4843, %v4822
      %v4845 = vadd.f32 %v4844, %v4824
      %v4846 = vadd.f32 %v4845, %v4826
      %v4847 = vadd.f32 %v4846, %v4828
      %v4848 = vadd.f32 %v4847, %v4830
      %v4849 = vadd.f32 %v4848, %v4832
      %v4850 = vadd.f32 %v4849, %v4834
      %v4851 = vadd.f32 %v4805, %v4807
      %v4852 = vadd.f32 %v4851, %v4809
      %v4853 = vadd.f32 %v4852, %v4811
      %v4854 = vadd.f32 %v4853, %v4813
      %v4855 = vadd.f32 %v4854, %v4815
      %v4856 = vadd.f32 %v4855, %v4817
      %v4857 = vadd.f32 %v4856, %v4819
      %v4858 = vadd.f32 %v4857, %v4821
      %v4859 = vadd.f32 %v4858, %v4823
      %v4860 = vadd.f32 %v4859, %v4825
      %v4861 = vadd.f32 %v4860, %v4827
      %v4862 = vadd.f32 %v4861, %v4829
      %v4863 = vadd.f32 %v4862, %v4831
      %v4864 = vadd.f32 %v4863, %v4833
      %v4865 = vadd.f32 %v4864, %v4835
      %v4866 = vadd.f32 %v4850, %v4865
      %v4867 = vrot.slane %v4866, 4
      %v4868 = vadd.f32 %v4866, %v4867
      %v4869 = vrot.slane %v4868, 2
      %v4870 = vadd.f32 %v4868, %v4869
      %v4871 = vrot.slane %v4870, 1
      %v4872 = vadd.f32 %v4870, %v4871
      %v4873 = vadd.f32 %v4803, %v4872
      %4874 = vst [vmem:[%s4] sm:$0x1] %v4873
      %p4875 = scmp.lt.s32.totalorder %s16, 1
      %s4876 = scalar_select %p4875, %s16, 1
      %s4877 = smul.addr %s4876, 32
      %s4878 = smul.addr %s4877, 8
      %s4879 = scalar_lea.vmem %s2, %s4878
      // Predicated region
      $region33: #{cbr_forward.2} parent=27 // pred_check
        %p4880 = pneg %p81
      $region34: #{cbr_forward.2} parent=27 // pred_check_branch
        %4882 = sbr.rel (%p4880) target = $region36
      $region35: #{cbr_forward.2} parent=27 // pred_region
        _
      $region36: #{cbr_forward.2} parent=27 // pred_fallthru
        _
      // Predicated region
      $region37: #{cbr_forward.2} parent=27 // pred_check
        %p4883 = pneg %p102
      $region38: #{cbr_forward.2} parent=27 // pred_check_branch
        %4885 = sbr.rel (%p4883) target = $region40
      $region39: #{cbr_forward.2} parent=27 // pred_region
        _
      $region40: #{cbr_forward.2} parent=27 // pred_fallthru
        _
      // Predicated region
      $region41: #{cbr_forward.2} parent=27 // pred_check
        %p4886 = pneg %p123
      $region42: #{cbr_forward.2} parent=27 // pred_check_branch
        %4888 = sbr.rel (%p4886) target = $region44
      $region43: #{cbr_forward.2} parent=27 // pred_region
        _
      $region44: #{cbr_forward.2} parent=27 // pred_fallthru
        _
      // Predicated region
      $region45: #{cbr_forward.2} parent=27 // pred_check
        %p4889 = pneg %p102
      $region46: #{cbr_forward.2} parent=27 // pred_check_branch
        %4891 = sbr.rel (%p4889) target = $region48
      $region47: #{cbr_forward.2} parent=27 // pred_region
        _
      $region48: #{cbr_forward.2} parent=27 // pred_fallthru
        _
      // Predicated region
      $region49: #{cbr_forward.2} parent=27 // pred_check
        %p4892 = pneg %p123
      $region50: #{cbr_forward.2} parent=27 // pred_check_branch
        %4894 = sbr.rel (%p4892) target = $region52
      $region51: #{cbr_forward.2} parent=27 // pred_region
        _
      $region52: #{cbr_forward.2} parent=27 // pred_fallthru
        _
    $region28: #{cbr_forward.2} parent=5 // pred_fallthru
      _
    %p4895 = scmp.le.s32.totalorder 2, %s11
    // Predicated region
    $region53: #{cbr_forward.2} parent=5 // pred_check
      %p4896 = pneg %p4895
    $region54: #{cbr_forward.2} parent=5 // pred_check_branch
      %4898 = sbr.rel (%p4896) target = $region56
    $region55: #{cbr_forward.2} parent=5 // pred_region
      %s4899 = ssub.s32 %s11, 2
      // Predicated region
      $region57: #{cbr_forward.2} parent=55 // pred_check
        %p4900 = pneg %p87
      $region58: #{cbr_forward.2} parent=55 // pred_check_branch
        %4902 = sbr.rel (%p4900) target = $region60
      $region59: #{cbr_forward.2} parent=55 // pred_region
        %p4903 = scmp.lt.s32.totalorder %s17, 1
        %s4904 = scalar_select %p4903, %s17, 1
        %s4905 = smul.addr %s4904, 32
        %s4906 = smul.addr %s4905, 8
        %s4907 = scalar_lea.vmem %s2, %s4906
      $region60: #{cbr_forward.2} parent=55 // pred_fallthru
        _
    $region56: #{cbr_forward.2} parent=5 // pred_fallthru
      _
  $region6: #{cbr_forward.2} parent=0 // loop_footer
    %s15 = sadd.s32 1, %s11
  $region7: #{cbr_forward.2} parent=0 // loop_footer_branch
    %10 = sbr.rel target = $region3
  $region8: #{cbr_forward.2} parent=0 // loop_exit
    _

</llo_original>
